<compile_context>
chip_gen: v5e
topology: v5e:2x2
jax: 0.10.0
libtpu: 0.0.40
codegen_flags: <defaults>
</compile_context>

<pallas_src>
import math

import jax
import jax.numpy as jnp
import numpy as np
from jax import lax
from jax.experimental import pallas as pl
from jax.experimental.pallas import tpu as pltpu

PARAM_ORDER = [
    "emb_w", "emb_b",
    "wq", "bq", "wk", "bk", "wv", "bv", "wo", "bo",
    "ln1g", "ln1b", "w1", "b1", "w2", "b2", "ln2g", "ln2b",
    "ng", "nb", "pw", "pb",
]

# Weights that feed the MXU -> cast to bf16 in the wrapper.
MATMUL_WEIGHTS = {"emb_w", "wq", "wk", "wv", "wo", "w1", "w2", "pw"}
# Params stacked with a leading e_layers axis -> streamed per layer.
PER_LAYER = {"wq", "bq", "wk", "bk", "wv", "bv", "wo", "bo",
             "ln1g", "ln1b", "w1", "b1", "w2", "b2", "ln2g", "ln2b"}


def init_params(key, seq_len, pred_len, d_model, n_heads, d_ff, e_layers):
    keys = jax.random.split(key, 16)

    def nrm(k, shape):
        return (0.02 * jax.random.normal(k, shape)).astype(jnp.float32)

    p = {}
    # DataEmbedding_inverted: Linear(seq_len -> d_model), stored input-major.
    p["emb_w"] = nrm(keys[0], (seq_len, d_model))
    p["emb_b"] = nrm(keys[1], (1, d_model))
    # Per-encoder-layer weights, stacked along a leading e_layers axis.
    p["wq"] = nrm(keys[2], (e_layers, d_model, d_model))
    p["bq"] = nrm(keys[3], (e_layers, 1, d_model))
    p["wk"] = nrm(keys[4], (e_layers, d_model, d_model))
    p["bk"] = nrm(keys[5], (e_layers, 1, d_model))
    p["wv"] = nrm(keys[6], (e_layers, d_model, d_model))
    p["bv"] = nrm(keys[7], (e_layers, 1, d_model))
    p["wo"] = nrm(keys[8], (e_layers, d_model, d_model))
    p["bo"] = nrm(keys[9], (e_layers, 1, d_model))
    p["ln1g"] = jnp.ones((e_layers, 1, d_model), jnp.float32)
    p["ln1b"] = jnp.zeros((e_layers, 1, d_model), jnp.float32)
    p["w1"] = nrm(keys[10], (e_layers, d_model, d_ff))    # conv1 (k=1)
    p["b1"] = nrm(keys[11], (e_layers, 1, d_ff))
    p["w2"] = nrm(keys[12], (e_layers, d_ff, d_model))    # conv2 (k=1)
    p["b2"] = nrm(keys[13], (e_layers, 1, d_model))
    p["ln2g"] = jnp.ones((e_layers, 1, d_model), jnp.float32)
    p["ln2b"] = jnp.zeros((e_layers, 1, d_model), jnp.float32)
    # Encoder final LayerNorm.
    p["ng"] = jnp.ones((1, d_model), jnp.float32)
    p["nb"] = jnp.zeros((1, d_model), jnp.float32)
    # projection: Linear(d_model -> pred_len); bias stored as a row so the
    # kernel can add it to the lane-dense (tokens, pred_len) projection.
    p["pw"] = nrm(keys[14], (d_model, pred_len))
    p["pb"] = nrm(keys[15], (1, pred_len))
    return p


def make_kernel(*, n_heads, d_model, block_b, n_var, seq_len, pred_len):
    dk = d_model // n_heads
    scale = 1.0 / math.sqrt(dk)
    f32 = jnp.float32
    bf16 = jnp.bfloat16
    Bt, N = block_b, n_var
    T = Bt * N                      # token-slab rows shared through weights

    def layernorm(x, g, b):
        mu = jnp.mean(x, axis=-1, keepdims=True)
        xc = x - mu
        var = jnp.mean(xc * xc, axis=-1, keepdims=True)
        return xc * lax.rsqrt(var + 1e-5) * g + b

    def mm(a, w):
        # bf16 x bf16 MXU matmul with f32 accumulation (w is already bf16).
        return jnp.dot(a.astype(bf16), w, preferred_element_type=f32)

    def kernel(x_ref, emb_w, emb_b,
               wq, bq, wk, bk, wv, bv, wo, bo,
               ln1g, ln1b, w1, b1, w2, b2, ln2g, ln2b,
               ng, nb, pw, pb,
               out_ref,
               e_ref, attn_ref, mean_ref, std_ref):
        layer = pl.program_id(1)
        n_layers = pl.num_programs(1)

        # ---- layer 0: non-stationary normalization + inverted embedding ----
        @pl.when(layer == 0)
        def _embed():
            x = x_ref[...]                                    # (Bt, N, L) f32
            mean = jnp.mean(x, axis=-1, keepdims=True)        # lane reduction
            xc = x - mean
            var = jnp.mean(xc * xc, axis=-1, keepdims=True)   # unbiased=False
            std = jnp.sqrt(var + 1e-5)
            mean_ref[...] = mean
            std_ref[...] = std
            xn = (xc / std).reshape(T, seq_len)               # tokens as rows
            e_ref[...] = mm(xn, emb_w[...]) + emb_b[...]      # (T, d_model)

        # ---- one encoder layer (weights for this layer streamed in) --------
        e = e_ref[...]                                        # (T, D) f32
        eb = e.astype(bf16)
        # fold 1/sqrt(dk) into q right after the projection
        q = (jnp.dot(eb, wq[0], preferred_element_type=f32) + bq[0]) * scale
        k = jnp.dot(eb, wk[0], preferred_element_type=f32) + bk[0]
        v = jnp.dot(eb, wv[0], preferred_element_type=f32) + bv[0]
        q3 = q.reshape(Bt, N, d_model).astype(bf16)
        k3 = k.reshape(Bt, N, d_model).astype(bf16)
        v3 = v.reshape(Bt, N, d_model).astype(bf16)

        for h in range(n_heads):                              # static unroll
            sl = slice(h * dk, (h + 1) * dk)
            s = jnp.einsum("bnd,bmd->bnm", q3[:, :, sl], k3[:, :, sl],
                           preferred_element_type=f32)        # (Bt, N, N)
            s = s - jnp.max(s, axis=-1, keepdims=True)
            pexp = jnp.exp(s)
            inv = pl.reciprocal(jnp.sum(pexp, axis=-1, keepdims=True),
                                approx=True)
            att = (pexp * inv).astype(bf16)
            # write head output into the VMEM slab (no concatenate)
            attn_ref[:, :, sl] = jnp.einsum("bnm,bmd->bnd", att, v3[:, :, sl],
                                            preferred_element_type=f32)

        attn = attn_ref[...].reshape(T, d_model)
        attn = mm(attn, wo[0]) + bo[0]

        x1 = layernorm(e + attn, ln1g[0], ln1b[0])
        y = jnp.maximum(mm(x1, w1[0]) + b1[0], 0.0)           # relu (conv k=1)
        y = mm(y, w2[0]) + b2[0]
        e_ref[...] = layernorm(x1 + y, ln2g[0], ln2b[0])

        # ---- last layer: final LN + projection + de-normalization ----------
        @pl.when(layer == n_layers - 1)
        def _finalize():
            ef = layernorm(e_ref[...], ng[...], nb[...])
            dec = mm(ef, pw[...]) + pb[...]                   # (T, pred_len)
            dec = dec.reshape(Bt, N, pred_len)                # lane-dense out
            out_ref[...] = dec * std_ref[...] + mean_ref[...]

    return kernel


def itransformer_forward(x_enc, params, *, pred_len, n_heads, e_layers,
                         block_b=2):
    B, L, N = x_enc.shape
    assert B % block_b == 0, "block_b must divide the batch size"
    d_model = params["emb_w"].shape[1]
    bf16 = jnp.bfloat16

    flat = [params[k].astype(bf16) if k in MATMUL_WEIGHTS else params[k]
            for k in PARAM_ORDER]

    # Present tokens as rows with L on the lane axis (inverted embedding is a
    # plain (tokens, L) @ (L, D) matmul); the transpose is a cheap XLA op.
    x_t = jnp.transpose(x_enc, (0, 2, 1))                     # (B, N, L)

    in_specs = [pl.BlockSpec((block_b, N, L), lambda b, l: (b, 0, 0))]
    for name, a in zip(PARAM_ORDER, flat):
        if name in PER_LAYER:
            blk = (1,) + a.shape[1:]
            in_specs.append(pl.BlockSpec(blk, lambda b, l: (l, 0, 0)))
        else:
            nd = a.ndim
            in_specs.append(
                pl.BlockSpec(a.shape, lambda b, l, _nd=nd: (0,) * _nd))

    out_spec = pl.BlockSpec((block_b, N, pred_len), lambda b, l: (b, 0, 0))

    kern = make_kernel(n_heads=n_heads, d_model=d_model, block_b=block_b,
                       n_var=N, seq_len=L, pred_len=pred_len)

    out_nt = pl.pallas_call(
        kern,
        out_shape=jax.ShapeDtypeStruct((B, N, pred_len), jnp.float32),
        grid_spec=pltpu.PrefetchScalarGridSpec(
            num_scalar_prefetch=0,
            grid=(B // block_b, e_layers),        # layer axis innermost
            in_specs=in_specs,
            out_specs=out_spec,
            scratch_shapes=[
                pltpu.VMEM((block_b * N, d_model), jnp.float32),  # token slab
                pltpu.VMEM((block_b, N, d_model), jnp.float32),   # attn slab
                pltpu.VMEM((block_b, N, 1), jnp.float32),         # mean
                pltpu.VMEM((block_b, N, 1), jnp.float32),         # std
            ]),
        compiler_params=pltpu.CompilerParams(
            dimension_semantics=("parallel", "arbitrary"),
            # per-layer streaming keeps residency ~2x one layer of bf16
            # weights + activations; 32 MiB is safe on v5e/v6e/v7x.
            vmem_limit_bytes=32 * 1024 * 1024),
    )(x_t, *flat)

    # kernel output is lane-dense (B, N, pred_len); transpose in XLA.
    return jnp.transpose(out_nt, (0, 2, 1))                   # (B, pred_len, N)


def reference_forward(x_enc, p, *, pred_len, n_heads, e_layers):
    """Pure-JAX reference mirroring the PyTorch forward (eval mode), using the
    same bf16-weight / f32-accumulation matmul precision as the kernel."""
    f32, bf16 = jnp.float32, jnp.bfloat16

    def mm(a, w):
        return jnp.einsum("...ij,jk->...ik", a.astype(bf16), w.astype(bf16),
                          preferred_element_type=f32)

    def layernorm(x, g, b):
        mu = jnp.mean(x, -1, keepdims=True)
        xc = x - mu
        var = jnp.mean(xc * xc, -1, keepdims=True)
        return xc * lax.rsqrt(var + 1e-5) * g + b

    B, L, N = x_enc.shape
    d_model = p["emb_w"].shape[1]
    dk = d_model // n_heads
    mean = jnp.mean(x_enc, 1, keepdims=True)
    xc = x_enc - mean
    std = jnp.sqrt(jnp.mean(xc * xc, 1, keepdims=True) + 1e-5)
    xn = xc / std
    tok = jnp.transpose(xn, (0, 2, 1))                         # (B, N, L)
    e = mm(tok, p["emb_w"]) + p["emb_b"]
    for l in range(e_layers):
        q = (mm(e, p["wq"][l]) + p["bq"][l]) / math.sqrt(dk)
        k = mm(e, p["wk"][l]) + p["bk"][l]
        v = mm(e, p["wv"][l]) + p["bv"][l]
        q = q.reshape(B, N, n_heads, dk)
        k = k.reshape(B, N, n_heads, dk)
        v = v.reshape(B, N, n_heads, dk)
        s = jnp.einsum("blhe,bshe->bhls", q.astype(bf16), k.astype(bf16),
                       preferred_element_type=f32)
        a = jax.nn.softmax(s, -1)
        o = jnp.einsum("bhls,bshd->blhd", a.astype(bf16), v.astype(bf16),
                       preferred_element_type=f32).reshape(B, N, d_model)
        o = mm(o, p["wo"][l]) + p["bo"][l]
        x1 = layernorm(e + o, p["ln1g"][l], p["ln1b"][l])
        y = jnp.maximum(mm(x1, p["w1"][l]) + p["b1"][l], 0.0)
        y = mm(y, p["w2"][l]) + p["b2"][l]
        e = layernorm(x1 + y, p["ln2g"][l], p["ln2b"][l])
    e = layernorm(e, p["ng"], p["nb"])
    dec = mm(e, p["pw"]) + p["pb"]                             # (B, N, P)
    dec = jnp.transpose(dec, (0, 2, 1))                        # (B, P, N)
    return dec * std + mean


if __name__ == "__main__":
    B, L, N = 4, 16, 8                 # batch, seq_len, num variates
    pred_len = 8
    d_model, n_heads, d_ff, e_layers = 32, 4, 64, 2

    key = jax.random.PRNGKey(0)
    kx, kp = jax.random.split(key)
    x_enc = jax.random.normal(kx, (B, L, N), dtype=jnp.float32)
    params = init_params(kp, L, pred_len, d_model, n_heads, d_ff, e_layers)

    out = itransformer_forward(x_enc, params,
                               pred_len=pred_len, n_heads=n_heads,
                               e_layers=e_layers, block_b=2)
    out = jax.block_until_ready(out)

    ref = reference_forward(x_enc, params,
                            pred_len=pred_len, n_heads=n_heads,
                            e_layers=e_layers)
    np.testing.assert_allclose(np.asarray(out), np.asarray(ref),
                               rtol=5e-3, atol=5e-3)
    print("KERNEL_OK")
</pallas_src>

<mosaic_0001>
module attributes {stable_mosaic.version = 11 : i64} {
  func.func @kernel(%arg0: i32, %arg1: i32, %arg2: memref<2x8x16xf32, #tpu.memory_space<vmem>>, %arg3: memref<16x32xbf16, #tpu.memory_space<vmem>>, %arg4: memref<1x32xf32, #tpu.memory_space<vmem>>, %arg5: memref<1x32x32xbf16, #tpu.memory_space<vmem>>, %arg6: memref<1x1x32xf32, #tpu.memory_space<vmem>>, %arg7: memref<1x32x32xbf16, #tpu.memory_space<vmem>>, %arg8: memref<1x1x32xf32, #tpu.memory_space<vmem>>, %arg9: memref<1x32x32xbf16, #tpu.memory_space<vmem>>, %arg10: memref<1x1x32xf32, #tpu.memory_space<vmem>>, %arg11: memref<1x32x32xbf16, #tpu.memory_space<vmem>>, %arg12: memref<1x1x32xf32, #tpu.memory_space<vmem>>, %arg13: memref<1x1x32xf32, #tpu.memory_space<vmem>>, %arg14: memref<1x1x32xf32, #tpu.memory_space<vmem>>, %arg15: memref<1x32x64xbf16, #tpu.memory_space<vmem>>, %arg16: memref<1x1x64xf32, #tpu.memory_space<vmem>>, %arg17: memref<1x64x32xbf16, #tpu.memory_space<vmem>>, %arg18: memref<1x1x32xf32, #tpu.memory_space<vmem>>, %arg19: memref<1x1x32xf32, #tpu.memory_space<vmem>>, %arg20: memref<1x1x32xf32, #tpu.memory_space<vmem>>, %arg21: memref<1x32xf32, #tpu.memory_space<vmem>>, %arg22: memref<1x32xf32, #tpu.memory_space<vmem>>, %arg23: memref<32x8xbf16, #tpu.memory_space<vmem>>, %arg24: memref<1x8xf32, #tpu.memory_space<vmem>>, %arg25: memref<2x8x8xf32, #tpu.memory_space<vmem>>, %arg26: memref<16x32xf32, #tpu.memory_space<vmem>>, %arg27: memref<2x8x32xf32, #tpu.memory_space<vmem>>, %arg28: memref<2x8x1xf32, #tpu.memory_space<vmem>>, %arg29: memref<2x8x1xf32, #tpu.memory_space<vmem>>) attributes {dimension_semantics = [#tpu.dimension_semantics<parallel>, #tpu.dimension_semantics<arbitrary>], iteration_bounds = array<i64: 2, 2>, scalar_prefetch = 0 : i64, scratch_operands = 4 : i64, tpu.core_type = #tpu.core_type<tc>, window_params = [{transform_indices = @transform_0, window_bounds = array<i64: 2, 8, 16>}, {pipeline_mode = #tpu.pipeline_mode<synchronous>, transform_indices = @transform_1, window_bounds = array<i64: 16, 32>}, {pipeline_mode = #tpu.pipeline_mode<synchronous>, transform_indices = @transform_2, window_bounds = array<i64: 1, 32>}, {transform_indices = @transform_3, window_bounds = array<i64: 1, 32, 32>}, {transform_indices = @transform_4, window_bounds = array<i64: 1, 1, 32>}, {transform_indices = @transform_5, window_bounds = array<i64: 1, 32, 32>}, {transform_indices = @transform_6, window_bounds = array<i64: 1, 1, 32>}, {transform_indices = @transform_7, window_bounds = array<i64: 1, 32, 32>}, {transform_indices = @transform_8, window_bounds = array<i64: 1, 1, 32>}, {transform_indices = @transform_9, window_bounds = array<i64: 1, 32, 32>}, {transform_indices = @transform_10, window_bounds = array<i64: 1, 1, 32>}, {transform_indices = @transform_11, window_bounds = array<i64: 1, 1, 32>}, {transform_indices = @transform_12, window_bounds = array<i64: 1, 1, 32>}, {transform_indices = @transform_13, window_bounds = array<i64: 1, 32, 64>}, {transform_indices = @transform_14, window_bounds = array<i64: 1, 1, 64>}, {transform_indices = @transform_15, window_bounds = array<i64: 1, 64, 32>}, {transform_indices = @transform_16, window_bounds = array<i64: 1, 1, 32>}, {transform_indices = @transform_17, window_bounds = array<i64: 1, 1, 32>}, {transform_indices = @transform_18, window_bounds = array<i64: 1, 1, 32>}, {pipeline_mode = #tpu.pipeline_mode<synchronous>, transform_indices = @transform_19, window_bounds = array<i64: 1, 32>}, {pipeline_mode = #tpu.pipeline_mode<synchronous>, transform_indices = @transform_20, window_bounds = array<i64: 1, 32>}, {pipeline_mode = #tpu.pipeline_mode<synchronous>, transform_indices = @transform_21, window_bounds = array<i64: 32, 8>}, {pipeline_mode = #tpu.pipeline_mode<synchronous>, transform_indices = @transform_22, window_bounds = array<i64: 1, 8>}, {transform_indices = @transform_23, window_bounds = array<i64: 2, 8, 8>}]} {
    %c0_i32 = arith.constant 0 : i32
    %0 = arith.cmpi eq, %arg1, %c0_i32 : i32
    %1 = arith.extui %0 : i1 to i32
    %c0_i32_0 = arith.constant 0 : i32
    %2 = arith.cmpi ne, %1, %c0_i32_0 : i32
    scf.if %2 {
      %c0_98 = arith.constant 0 : index
      %c0_99 = arith.constant 0 : index
      %c0_100 = arith.constant 0 : index
      %184 = vector.load %arg2[%c0_98, %c0_99, %c0_100] : memref<2x8x16xf32, #tpu.memory_space<vmem>>, vector<2x8x16xf32>
      %cst_101 = arith.constant dense<0.000000e+00> : vector<2x8xf32>
      %185 = vector.multi_reduction <add>, %184, %cst_101 [2] : vector<2x8x16xf32> to vector<2x8xf32>
      %186 = vector.shape_cast %185 : vector<2x8xf32> to vector<2x8x1xf32>
      %cst_102 = arith.constant 1.600000e+01 : f32
      %187 = vector.broadcast %cst_102 : f32 to vector<2x8x1xf32>
      %188 = arith.divf %186, %187 : vector<2x8x1xf32>
      %189 = vector.broadcast %188 : vector<2x8x1xf32> to vector<2x8x16xf32>
      %190 = arith.subf %184, %189 : vector<2x8x16xf32>
      %191 = arith.mulf %190, %190 : vector<2x8x16xf32>
      %cst_103 = arith.constant dense<0.000000e+00> : vector<2x8xf32>
      %192 = vector.multi_reduction <add>, %191, %cst_103 [2] : vector<2x8x16xf32> to vector<2x8xf32>
      %193 = vector.shape_cast %192 : vector<2x8xf32> to vector<2x8x1xf32>
      %cst_104 = arith.constant 1.600000e+01 : f32
      %194 = vector.broadcast %cst_104 : f32 to vector<2x8x1xf32>
      %195 = arith.divf %193, %194 : vector<2x8x1xf32>
      %cst_105 = arith.constant 9.99999974E-6 : f32
      %196 = vector.broadcast %cst_105 : f32 to vector<2x8x1xf32>
      %197 = arith.addf %195, %196 : vector<2x8x1xf32>
      %198 = math.sqrt %197 : vector<2x8x1xf32>
      %c0_106 = arith.constant 0 : index
      %c0_107 = arith.constant 0 : index
      %c0_108 = arith.constant 0 : index
      %199 = vector.load %arg28[%c0_106, %c0_107, %c0_108] : memref<2x8x1xf32, #tpu.memory_space<vmem>>, vector<2x8x1xf32>
      tpu.vector_store %arg28[%c0_106, %c0_107, %c0_108], %188 {strides = array<i32>} : memref<2x8x1xf32, #tpu.memory_space<vmem>>, vector<2x8x1xf32>,
      %c0_109 = arith.constant 0 : index
      %c0_110 = arith.constant 0 : index
      %c0_111 = arith.constant 0 : index
      %200 = vector.load %arg29[%c0_109, %c0_110, %c0_111] : memref<2x8x1xf32, #tpu.memory_space<vmem>>, vector<2x8x1xf32>
      tpu.vector_store %arg29[%c0_109, %c0_110, %c0_111], %198 {strides = array<i32>} : memref<2x8x1xf32, #tpu.memory_space<vmem>>, vector<2x8x1xf32>,
      %201 = vector.broadcast %198 : vector<2x8x1xf32> to vector<2x8x16xf32>
      %202 = arith.divf %190, %201 : vector<2x8x16xf32>
      %203 = vector.shape_cast %202 : vector<2x8x16xf32> to vector<16x16xf32>
      %c0_112 = arith.constant 0 : index
      %c0_113 = arith.constant 0 : index
      %204 = vector.load %arg3[%c0_112, %c0_113] : memref<16x32xbf16, #tpu.memory_space<vmem>>, vector<16x32xbf16>
      %205 = arith.truncf %203 : vector<16x16xf32> to vector<16x16xbf16>
      %cst_114 = arith.constant dense<0.000000e+00> : vector<16x32xf32>
      %206 = tpu.matmul %205, %204, %cst_114 {dimension_numbers = #tpu.dot_dimension_numbers<[1], [0], [0], [1], [0, 0, 1, 1], [], []>} : vector<16x16xbf16>, vector<16x32xbf16>, vector<16x32xf32> -> vector<16x32xf32>
      %c0_115 = arith.constant 0 : index
      %c0_116 = arith.constant 0 : index
      %207 = vector.load %arg4[%c0_115, %c0_116] : memref<1x32xf32, #tpu.memory_space<vmem>>, vector<1x32xf32>
      %208 = vector.broadcast %207 : vector<1x32xf32> to vector<16x32xf32>
      %209 = arith.addf %206, %208 : vector<16x32xf32>
      %c0_117 = arith.constant 0 : index
      %c0_118 = arith.constant 0 : index
      %210 = vector.load %arg26[%c0_117, %c0_118] : memref<16x32xf32, #tpu.memory_space<vmem>>, vector<16x32xf32>
      tpu.vector_store %arg26[%c0_117, %c0_118], %209 {strides = array<i32>} : memref<16x32xf32, #tpu.memory_space<vmem>>, vector<16x32xf32>,
    } else {
    }
    %c0 = arith.constant 0 : index
    %c0_1 = arith.constant 0 : index
    %3 = vector.load %arg26[%c0, %c0_1] : memref<16x32xf32, #tpu.memory_space<vmem>>, vector<16x32xf32>
    %4 = arith.truncf %3 : vector<16x32xf32> to vector<16x32xbf16>
    %c0_2 = arith.constant 0 : index
    %c0_3 = arith.constant 0 : index
    %c0_4 = arith.constant 0 : index
    %5 = vector.load %arg5[%c0_2, %c0_3, %c0_4] : memref<1x32x32xbf16, #tpu.memory_space<vmem>>, vector<1x32x32xbf16>
    %6 = vector.shape_cast %5 : vector<1x32x32xbf16> to vector<32x32xbf16>
    %cst = arith.constant dense<0.000000e+00> : vector<16x32xf32>
    %7 = tpu.matmul %4, %6, %cst {dimension_numbers = #tpu.dot_dimension_numbers<[1], [0], [0], [1], [0, 0, 1, 1], [], []>} : vector<16x32xbf16>, vector<32x32xbf16>, vector<16x32xf32> -> vector<16x32xf32>
    %c0_5 = arith.constant 0 : index
    %c0_6 = arith.constant 0 : index
    %c0_7 = arith.constant 0 : index
    %8 = vector.load %arg6[%c0_5, %c0_6, %c0_7] : memref<1x1x32xf32, #tpu.memory_space<vmem>>, vector<1x1x32xf32>
    %9 = vector.shape_cast %8 : vector<1x1x32xf32> to vector<1x32xf32>
    %10 = vector.broadcast %9 : vector<1x32xf32> to vector<16x32xf32>
    %11 = arith.addf %7, %10 : vector<16x32xf32>
    %cst_8 = arith.constant 0.353553385 : f32
    %12 = vector.broadcast %cst_8 : f32 to vector<16x32xf32>
    %13 = arith.mulf %11, %12 : vector<16x32xf32>
    %c0_9 = arith.constant 0 : index
    %c0_10 = arith.constant 0 : index
    %c0_11 = arith.constant 0 : index
    %14 = vector.load %arg7[%c0_9, %c0_10, %c0_11] : memref<1x32x32xbf16, #tpu.memory_space<vmem>>, vector<1x32x32xbf16>
    %15 = vector.shape_cast %14 : vector<1x32x32xbf16> to vector<32x32xbf16>
    %cst_12 = arith.constant dense<0.000000e+00> : vector<16x32xf32>
    %16 = tpu.matmul %4, %15, %cst_12 {dimension_numbers = #tpu.dot_dimension_numbers<[1], [0], [0], [1], [0, 0, 1, 1], [], []>} : vector<16x32xbf16>, vector<32x32xbf16>, vector<16x32xf32> -> vector<16x32xf32>
    %c0_13 = arith.constant 0 : index
    %c0_14 = arith.constant 0 : index
    %c0_15 = arith.constant 0 : index
    %17 = vector.load %arg8[%c0_13, %c0_14, %c0_15] : memref<1x1x32xf32, #tpu.memory_space<vmem>>, vector<1x1x32xf32>
    %18 = vector.shape_cast %17 : vector<1x1x32xf32> to vector<1x32xf32>
    %19 = vector.broadcast %18 : vector<1x32xf32> to vector<16x32xf32>
    %20 = arith.addf %16, %19 : vector<16x32xf32>
    %c0_16 = arith.constant 0 : index
    %c0_17 = arith.constant 0 : index
    %c0_18 = arith.constant 0 : index
    %21 = vector.load %arg9[%c0_16, %c0_17, %c0_18] : memref<1x32x32xbf16, #tpu.memory_space<vmem>>, vector<1x32x32xbf16>
    %22 = vector.shape_cast %21 : vector<1x32x32xbf16> to vector<32x32xbf16>
    %cst_19 = arith.constant dense<0.000000e+00> : vector<16x32xf32>
    %23 = tpu.matmul %4, %22, %cst_19 {dimension_numbers = #tpu.dot_dimension_numbers<[1], [0], [0], [1], [0, 0, 1, 1], [], []>} : vector<16x32xbf16>, vector<32x32xbf16>, vector<16x32xf32> -> vector<16x32xf32>
    %c0_20 = arith.constant 0 : index
    %c0_21 = arith.constant 0 : index
    %c0_22 = arith.constant 0 : index
    %24 = vector.load %arg10[%c0_20, %c0_21, %c0_22] : memref<1x1x32xf32, #tpu.memory_space<vmem>>, vector<1x1x32xf32>
    %25 = vector.shape_cast %24 : vector<1x1x32xf32> to vector<1x32xf32>
    %26 = vector.broadcast %25 : vector<1x32xf32> to vector<16x32xf32>
    %27 = arith.addf %23, %26 : vector<16x32xf32>
    %28 = vector.shape_cast %13 : vector<16x32xf32> to vector<2x8x32xf32>
    %29 = arith.truncf %28 : vector<2x8x32xf32> to vector<2x8x32xbf16>
    %30 = vector.shape_cast %20 : vector<16x32xf32> to vector<2x8x32xf32>
    %31 = arith.truncf %30 : vector<2x8x32xf32> to vector<2x8x32xbf16>
    %32 = vector.shape_cast %27 : vector<16x32xf32> to vector<2x8x32xf32>
    %33 = arith.truncf %32 : vector<2x8x32xf32> to vector<2x8x32xbf16>
    %34 = vector.extract_strided_slice %29 {offsets = [0, 0, 0], sizes = [2, 8, 8], strides = [1, 1, 1]} : vector<2x8x32xbf16> to vector<2x8x8xbf16>
    %35 = vector.extract_strided_slice %31 {offsets = [0, 0, 0], sizes = [2, 8, 8], strides = [1, 1, 1]} : vector<2x8x32xbf16> to vector<2x8x8xbf16>
    "tpu.trace_start"() <{level = 10 : i32, message = "bnd,bmd->bnm"}> : () -> ()
    %cst_23 = arith.constant dense<0.000000e+00> : vector<2x8x8xf32>
    %36 = tpu.matmul %34, %35, %cst_23 {dimension_numbers = #tpu.dot_dimension_numbers<[2], [2], [1], [1], [0, 0, 0, 1, 1, 1], [0], [0]>} : vector<2x8x8xbf16>, vector<2x8x8xbf16>, vector<2x8x8xf32> -> vector<2x8x8xf32>
    "tpu.trace_stop"() : () -> ()
    %cst_24 = arith.constant dense<0xFF800000> : vector<2x8xf32>
    %37 = vector.multi_reduction <maximumf>, %36, %cst_24 [2] : vector<2x8x8xf32> to vector<2x8xf32>
    %38 = vector.shape_cast %37 : vector<2x8xf32> to vector<2x8x1xf32>
    %39 = vector.broadcast %38 : vector<2x8x1xf32> to vector<2x8x8xf32>
    %40 = arith.subf %36, %39 : vector<2x8x8xf32>
    %41 = math.exp %40 : vector<2x8x8xf32>
    %cst_25 = arith.constant dense<0.000000e+00> : vector<2x8xf32>
    %42 = vector.multi_reduction <add>, %41, %cst_25 [2] : vector<2x8x8xf32> to vector<2x8xf32>
    %43 = vector.shape_cast %42 : vector<2x8xf32> to vector<2x8x1xf32>
    %44 = tpu.reciprocal %43 {approx = true} : vector<2x8x1xf32> -> vector<2x8x1xf32>
    %45 = vector.broadcast %44 : vector<2x8x1xf32> to vector<2x8x8xf32>
    %46 = arith.mulf %41, %45 : vector<2x8x8xf32>
    %47 = arith.truncf %46 : vector<2x8x8xf32> to vector<2x8x8xbf16>
    %48 = vector.extract_strided_slice %33 {offsets = [0, 0, 0], sizes = [2, 8, 8], strides = [1, 1, 1]} : vector<2x8x32xbf16> to vector<2x8x8xbf16>
    "tpu.trace_start"() <{level = 10 : i32, message = "bnm,bmd->bnd"}> : () -> ()
    %cst_26 = arith.constant dense<0.000000e+00> : vector<2x8x8xf32>
    %49 = tpu.matmul %47, %48, %cst_26 {dimension_numbers = #tpu.dot_dimension_numbers<[2], [1], [1], [2], [0, 0, 0, 1, 1, 2], [0], [0]>} : vector<2x8x8xbf16>, vector<2x8x8xbf16>, vector<2x8x8xf32> -> vector<2x8x8xf32>
    "tpu.trace_stop"() : () -> ()
    %c0_27 = arith.constant 0 : index
    %c0_28 = arith.constant 0 : index
    %c0_29 = arith.constant 0 : index
    %50 = vector.load %arg27[%c0_27, %c0_28, %c0_29] : memref<2x8x32xf32, #tpu.memory_space<vmem>>, vector<2x8x8xf32>
    tpu.vector_store %arg27[%c0_27, %c0_28, %c0_29], %49 {strides = array<i32>} : memref<2x8x32xf32, #tpu.memory_space<vmem>>, vector<2x8x8xf32>,
    %51 = vector.extract_strided_slice %29 {offsets = [0, 0, 8], sizes = [2, 8, 8], strides = [1, 1, 1]} : vector<2x8x32xbf16> to vector<2x8x8xbf16>
    %52 = vector.extract_strided_slice %31 {offsets = [0, 0, 8], sizes = [2, 8, 8], strides = [1, 1, 1]} : vector<2x8x32xbf16> to vector<2x8x8xbf16>
    "tpu.trace_start"() <{level = 10 : i32, message = "bnd,bmd->bnm"}> : () -> ()
    %cst_30 = arith.constant dense<0.000000e+00> : vector<2x8x8xf32>
    %53 = tpu.matmul %51, %52, %cst_30 {dimension_numbers = #tpu.dot_dimension_numbers<[2], [2], [1], [1], [0, 0, 0, 1, 1, 1], [0], [0]>} : vector<2x8x8xbf16>, vector<2x8x8xbf16>, vector<2x8x8xf32> -> vector<2x8x8xf32>
    "tpu.trace_stop"() : () -> ()
    %cst_31 = arith.constant dense<0xFF800000> : vector<2x8xf32>
    %54 = vector.multi_reduction <maximumf>, %53, %cst_31 [2] : vector<2x8x8xf32> to vector<2x8xf32>
    %55 = vector.shape_cast %54 : vector<2x8xf32> to vector<2x8x1xf32>
    %56 = vector.broadcast %55 : vector<2x8x1xf32> to vector<2x8x8xf32>
    %57 = arith.subf %53, %56 : vector<2x8x8xf32>
    %58 = math.exp %57 : vector<2x8x8xf32>
    %cst_32 = arith.constant dense<0.000000e+00> : vector<2x8xf32>
    %59 = vector.multi_reduction <add>, %58, %cst_32 [2] : vector<2x8x8xf32> to vector<2x8xf32>
    %60 = vector.shape_cast %59 : vector<2x8xf32> to vector<2x8x1xf32>
    %61 = tpu.reciprocal %60 {approx = true} : vector<2x8x1xf32> -> vector<2x8x1xf32>
    %62 = vector.broadcast %61 : vector<2x8x1xf32> to vector<2x8x8xf32>
    %63 = arith.mulf %58, %62 : vector<2x8x8xf32>
    %64 = arith.truncf %63 : vector<2x8x8xf32> to vector<2x8x8xbf16>
    %65 = vector.extract_strided_slice %33 {offsets = [0, 0, 8], sizes = [2, 8, 8], strides = [1, 1, 1]} : vector<2x8x32xbf16> to vector<2x8x8xbf16>
    "tpu.trace_start"() <{level = 10 : i32, message = "bnm,bmd->bnd"}> : () -> ()
    %cst_33 = arith.constant dense<0.000000e+00> : vector<2x8x8xf32>
    %66 = tpu.matmul %64, %65, %cst_33 {dimension_numbers = #tpu.dot_dimension_numbers<[2], [1], [1], [2], [0, 0, 0, 1, 1, 2], [0], [0]>} : vector<2x8x8xbf16>, vector<2x8x8xbf16>, vector<2x8x8xf32> -> vector<2x8x8xf32>
    "tpu.trace_stop"() : () -> ()
    %c0_34 = arith.constant 0 : index
    %c0_35 = arith.constant 0 : index
    %c8 = arith.constant 8 : index
    %67 = vector.load %arg27[%c0_34, %c0_35, %c8] : memref<2x8x32xf32, #tpu.memory_space<vmem>>, vector<2x8x8xf32>
    tpu.vector_store %arg27[%c0_34, %c0_35, %c8], %66 {strides = array<i32>} : memref<2x8x32xf32, #tpu.memory_space<vmem>>, vector<2x8x8xf32>,
    %68 = vector.extract_strided_slice %29 {offsets = [0, 0, 16], sizes = [2, 8, 8], strides = [1, 1, 1]} : vector<2x8x32xbf16> to vector<2x8x8xbf16>
    %69 = vector.extract_strided_slice %31 {offsets = [0, 0, 16], sizes = [2, 8, 8], strides = [1, 1, 1]} : vector<2x8x32xbf16> to vector<2x8x8xbf16>
    "tpu.trace_start"() <{level = 10 : i32, message = "bnd,bmd->bnm"}> : () -> ()
    %cst_36 = arith.constant dense<0.000000e+00> : vector<2x8x8xf32>
    %70 = tpu.matmul %68, %69, %cst_36 {dimension_numbers = #tpu.dot_dimension_numbers<[2], [2], [1], [1], [0, 0, 0, 1, 1, 1], [0], [0]>} : vector<2x8x8xbf16>, vector<2x8x8xbf16>, vector<2x8x8xf32> -> vector<2x8x8xf32>
    "tpu.trace_stop"() : () -> ()
    %cst_37 = arith.constant dense<0xFF800000> : vector<2x8xf32>
    %71 = vector.multi_reduction <maximumf>, %70, %cst_37 [2] : vector<2x8x8xf32> to vector<2x8xf32>
    %72 = vector.shape_cast %71 : vector<2x8xf32> to vector<2x8x1xf32>
    %73 = vector.broadcast %72 : vector<2x8x1xf32> to vector<2x8x8xf32>
    %74 = arith.subf %70, %73 : vector<2x8x8xf32>
    %75 = math.exp %74 : vector<2x8x8xf32>
    %cst_38 = arith.constant dense<0.000000e+00> : vector<2x8xf32>
    %76 = vector.multi_reduction <add>, %75, %cst_38 [2] : vector<2x8x8xf32> to vector<2x8xf32>
    %77 = vector.shape_cast %76 : vector<2x8xf32> to vector<2x8x1xf32>
    %78 = tpu.reciprocal %77 {approx = true} : vector<2x8x1xf32> -> vector<2x8x1xf32>
    %79 = vector.broadcast %78 : vector<2x8x1xf32> to vector<2x8x8xf32>
    %80 = arith.mulf %75, %79 : vector<2x8x8xf32>
    %81 = arith.truncf %80 : vector<2x8x8xf32> to vector<2x8x8xbf16>
    %82 = vector.extract_strided_slice %33 {offsets = [0, 0, 16], sizes = [2, 8, 8], strides = [1, 1, 1]} : vector<2x8x32xbf16> to vector<2x8x8xbf16>
    "tpu.trace_start"() <{level = 10 : i32, message = "bnm,bmd->bnd"}> : () -> ()
    %cst_39 = arith.constant dense<0.000000e+00> : vector<2x8x8xf32>
    %83 = tpu.matmul %81, %82, %cst_39 {dimension_numbers = #tpu.dot_dimension_numbers<[2], [1], [1], [2], [0, 0, 0, 1, 1, 2], [0], [0]>} : vector<2x8x8xbf16>, vector<2x8x8xbf16>, vector<2x8x8xf32> -> vector<2x8x8xf32>
    "tpu.trace_stop"() : () -> ()
    %c0_40 = arith.constant 0 : index
    %c0_41 = arith.constant 0 : index
    %c16 = arith.constant 16 : index
    %84 = vector.load %arg27[%c0_40, %c0_41, %c16] : memref<2x8x32xf32, #tpu.memory_space<vmem>>, vector<2x8x8xf32>
    tpu.vector_store %arg27[%c0_40, %c0_41, %c16], %83 {strides = array<i32>} : memref<2x8x32xf32, #tpu.memory_space<vmem>>, vector<2x8x8xf32>,
    %85 = vector.extract_strided_slice %29 {offsets = [0, 0, 24], sizes = [2, 8, 8], strides = [1, 1, 1]} : vector<2x8x32xbf16> to vector<2x8x8xbf16>
    %86 = vector.extract_strided_slice %31 {offsets = [0, 0, 24], sizes = [2, 8, 8], strides = [1, 1, 1]} : vector<2x8x32xbf16> to vector<2x8x8xbf16>
    "tpu.trace_start"() <{level = 10 : i32, message = "bnd,bmd->bnm"}> : () -> ()
    %cst_42 = arith.constant dense<0.000000e+00> : vector<2x8x8xf32>
    %87 = tpu.matmul %85, %86, %cst_42 {dimension_numbers = #tpu.dot_dimension_numbers<[2], [2], [1], [1], [0, 0, 0, 1, 1, 1], [0], [0]>} : vector<2x8x8xbf16>, vector<2x8x8xbf16>, vector<2x8x8xf32> -> vector<2x8x8xf32>
    "tpu.trace_stop"() : () -> ()
    %cst_43 = arith.constant dense<0xFF800000> : vector<2x8xf32>
    %88 = vector.multi_reduction <maximumf>, %87, %cst_43 [2] : vector<2x8x8xf32> to vector<2x8xf32>
    %89 = vector.shape_cast %88 : vector<2x8xf32> to vector<2x8x1xf32>
    %90 = vector.broadcast %89 : vector<2x8x1xf32> to vector<2x8x8xf32>
    %91 = arith.subf %87, %90 : vector<2x8x8xf32>
    %92 = math.exp %91 : vector<2x8x8xf32>
    %cst_44 = arith.constant dense<0.000000e+00> : vector<2x8xf32>
    %93 = vector.multi_reduction <add>, %92, %cst_44 [2] : vector<2x8x8xf32> to vector<2x8xf32>
    %94 = vector.shape_cast %93 : vector<2x8xf32> to vector<2x8x1xf32>
    %95 = tpu.reciprocal %94 {approx = true} : vector<2x8x1xf32> -> vector<2x8x1xf32>
    %96 = vector.broadcast %95 : vector<2x8x1xf32> to vector<2x8x8xf32>
    %97 = arith.mulf %92, %96 : vector<2x8x8xf32>
    %98 = arith.truncf %97 : vector<2x8x8xf32> to vector<2x8x8xbf16>
    %99 = vector.extract_strided_slice %33 {offsets = [0, 0, 24], sizes = [2, 8, 8], strides = [1, 1, 1]} : vector<2x8x32xbf16> to vector<2x8x8xbf16>
    "tpu.trace_start"() <{level = 10 : i32, message = "bnm,bmd->bnd"}> : () -> ()
    %cst_45 = arith.constant dense<0.000000e+00> : vector<2x8x8xf32>
    %100 = tpu.matmul %98, %99, %cst_45 {dimension_numbers = #tpu.dot_dimension_numbers<[2], [1], [1], [2], [0, 0, 0, 1, 1, 2], [0], [0]>} : vector<2x8x8xbf16>, vector<2x8x8xbf16>, vector<2x8x8xf32> -> vector<2x8x8xf32>
    "tpu.trace_stop"() : () -> ()
    %c0_46 = arith.constant 0 : index
    %c0_47 = arith.constant 0 : index
    %c24 = arith.constant 24 : index
    %101 = vector.load %arg27[%c0_46, %c0_47, %c24] : memref<2x8x32xf32, #tpu.memory_space<vmem>>, vector<2x8x8xf32>
    tpu.vector_store %arg27[%c0_46, %c0_47, %c24], %100 {strides = array<i32>} : memref<2x8x32xf32, #tpu.memory_space<vmem>>, vector<2x8x8xf32>,
    %c0_48 = arith.constant 0 : index
    %c0_49 = arith.constant 0 : index
    %c0_50 = arith.constant 0 : index
    %102 = vector.load %arg27[%c0_48, %c0_49, %c0_50] : memref<2x8x32xf32, #tpu.memory_space<vmem>>, vector<2x8x32xf32>
    %103 = vector.shape_cast %102 : vector<2x8x32xf32> to vector<16x32xf32>
    %c0_51 = arith.constant 0 : index
    %c0_52 = arith.constant 0 : index
    %c0_53 = arith.constant 0 : index
    %104 = vector.load %arg11[%c0_51, %c0_52, %c0_53] : memref<1x32x32xbf16, #tpu.memory_space<vmem>>, vector<1x32x32xbf16>
    %105 = vector.shape_cast %104 : vector<1x32x32xbf16> to vector<32x32xbf16>
    %106 = arith.truncf %103 : vector<16x32xf32> to vector<16x32xbf16>
    %cst_54 = arith.constant dense<0.000000e+00> : vector<16x32xf32>
    %107 = tpu.matmul %106, %105, %cst_54 {dimension_numbers = #tpu.dot_dimension_numbers<[1], [0], [0], [1], [0, 0, 1, 1], [], []>} : vector<16x32xbf16>, vector<32x32xbf16>, vector<16x32xf32> -> vector<16x32xf32>
    %c0_55 = arith.constant 0 : index
    %c0_56 = arith.constant 0 : index
    %c0_57 = arith.constant 0 : index
    %108 = vector.load %arg12[%c0_55, %c0_56, %c0_57] : memref<1x1x32xf32, #tpu.memory_space<vmem>>, vector<1x1x32xf32>
    %109 = vector.shape_cast %108 : vector<1x1x32xf32> to vector<1x32xf32>
    %110 = vector.broadcast %109 : vector<1x32xf32> to vector<16x32xf32>
    %111 = arith.addf %107, %110 : vector<16x32xf32>
    %112 = arith.addf %3, %111 : vector<16x32xf32>
    %c0_58 = arith.constant 0 : index
    %c0_59 = arith.constant 0 : index
    %c0_60 = arith.constant 0 : index
    %113 = vector.load %arg13[%c0_58, %c0_59, %c0_60] : memref<1x1x32xf32, #tpu.memory_space<vmem>>, vector<1x1x32xf32>
    %114 = vector.shape_cast %113 : vector<1x1x32xf32> to vector<1x32xf32>
    %c0_61 = arith.constant 0 : index
    %c0_62 = arith.constant 0 : index
    %c0_63 = arith.constant 0 : index
    %115 = vector.load %arg14[%c0_61, %c0_62, %c0_63] : memref<1x1x32xf32, #tpu.memory_space<vmem>>, vector<1x1x32xf32>
    %116 = vector.shape_cast %115 : vector<1x1x32xf32> to vector<1x32xf32>
    %cst_64 = arith.constant dense<0.000000e+00> : vector<16xf32>
    %117 = vector.multi_reduction <add>, %112, %cst_64 [1] : vector<16x32xf32> to vector<16xf32>
    %118 = vector.shape_cast %117 : vector<16xf32> to vector<16x1xf32>
    %cst_65 = arith.constant 3.200000e+01 : f32
    %119 = vector.broadcast %cst_65 : f32 to vector<16x1xf32>
    %120 = arith.divf %118, %119 : vector<16x1xf32>
    %121 = vector.broadcast %120 : vector<16x1xf32> to vector<16x32xf32>
    %122 = arith.subf %112, %121 : vector<16x32xf32>
    %123 = arith.mulf %122, %122 : vector<16x32xf32>
    %cst_66 = arith.constant dense<0.000000e+00> : vector<16xf32>
    %124 = vector.multi_reduction <add>, %123, %cst_66 [1] : vector<16x32xf32> to vector<16xf32>
    %125 = vector.shape_cast %124 : vector<16xf32> to vector<16x1xf32>
    %cst_67 = arith.constant 3.200000e+01 : f32
    %126 = vector.broadcast %cst_67 : f32 to vector<16x1xf32>
    %127 = arith.divf %125, %126 : vector<16x1xf32>
    %cst_68 = arith.constant 9.99999974E-6 : f32
    %128 = vector.broadcast %cst_68 : f32 to vector<16x1xf32>
    %129 = arith.addf %127, %128 : vector<16x1xf32>
    %130 = math.rsqrt %129 : vector<16x1xf32>
    %131 = vector.broadcast %130 : vector<16x1xf32> to vector<16x32xf32>
    %132 = arith.mulf %122, %131 : vector<16x32xf32>
    %133 = vector.broadcast %114 : vector<1x32xf32> to vector<16x32xf32>
    %134 = arith.mulf %132, %133 : vector<16x32xf32>
    %135 = vector.broadcast %116 : vector<1x32xf32> to vector<16x32xf32>
    %136 = arith.addf %134, %135 : vector<16x32xf32>
    %c0_69 = arith.constant 0 : index
    %c0_70 = arith.constant 0 : index
    %c0_71 = arith.constant 0 : index
    %137 = vector.load %arg15[%c0_69, %c0_70, %c0_71] : memref<1x32x64xbf16, #tpu.memory_space<vmem>>, vector<1x32x64xbf16>
    %138 = vector.shape_cast %137 : vector<1x32x64xbf16> to vector<32x64xbf16>
    %139 = arith.truncf %136 : vector<16x32xf32> to vector<16x32xbf16>
    %cst_72 = arith.constant dense<0.000000e+00> : vector<16x64xf32>
    %140 = tpu.matmul %139, %138, %cst_72 {dimension_numbers = #tpu.dot_dimension_numbers<[1], [0], [0], [1], [0, 0, 1, 1], [], []>} : vector<16x32xbf16>, vector<32x64xbf16>, vector<16x64xf32> -> vector<16x64xf32>
    %c0_73 = arith.constant 0 : index
    %c0_74 = arith.constant 0 : index
    %c0_75 = arith.constant 0 : index
    %141 = vector.load %arg16[%c0_73, %c0_74, %c0_75] : memref<1x1x64xf32, #tpu.memory_space<vmem>>, vector<1x1x64xf32>
    %142 = vector.shape_cast %141 : vector<1x1x64xf32> to vector<1x64xf32>
    %143 = vector.broadcast %142 : vector<1x64xf32> to vector<16x64xf32>
    %144 = arith.addf %140, %143 : vector<16x64xf32>
    %cst_76 = arith.constant 0.000000e+00 : f32
    %145 = vector.broadcast %cst_76 : f32 to vector<16x64xf32>
    %146 = arith.maximumf %144, %145 : vector<16x64xf32>
    %c0_77 = arith.constant 0 : index
    %c0_78 = arith.constant 0 : index
    %c0_79 = arith.constant 0 : index
    %147 = vector.load %arg17[%c0_77, %c0_78, %c0_79] : memref<1x64x32xbf16, #tpu.memory_space<vmem>>, vector<1x64x32xbf16>
    %148 = vector.shape_cast %147 : vector<1x64x32xbf16> to vector<64x32xbf16>
    %149 = arith.truncf %146 : vector<16x64xf32> to vector<16x64xbf16>
    %cst_80 = arith.constant dense<0.000000e+00> : vector<16x32xf32>
    %150 = tpu.matmul %149, %148, %cst_80 {dimension_numbers = #tpu.dot_dimension_numbers<[1], [0], [0], [1], [0, 0, 1, 1], [], []>} : vector<16x64xbf16>, vector<64x32xbf16>, vector<16x32xf32> -> vector<16x32xf32>
    %c0_81 = arith.constant 0 : index
    %c0_82 = arith.constant 0 : index
    %c0_83 = arith.constant 0 : index
    %151 = vector.load %arg18[%c0_81, %c0_82, %c0_83] : memref<1x1x32xf32, #tpu.memory_space<vmem>>, vector<1x1x32xf32>
    %152 = vector.shape_cast %151 : vector<1x1x32xf32> to vector<1x32xf32>
    %153 = vector.broadcast %152 : vector<1x32xf32> to vector<16x32xf32>
    %154 = arith.addf %150, %153 : vector<16x32xf32>
    %155 = arith.addf %136, %154 : vector<16x32xf32>
    %c0_84 = arith.constant 0 : index
    %c0_85 = arith.constant 0 : index
    %c0_86 = arith.constant 0 : index
    %156 = vector.load %arg19[%c0_84, %c0_85, %c0_86] : memref<1x1x32xf32, #tpu.memory_space<vmem>>, vector<1x1x32xf32>
    %157 = vector.shape_cast %156 : vector<1x1x32xf32> to vector<1x32xf32>
    %c0_87 = arith.constant 0 : index
    %c0_88 = arith.constant 0 : index
    %c0_89 = arith.constant 0 : index
    %158 = vector.load %arg20[%c0_87, %c0_88, %c0_89] : memref<1x1x32xf32, #tpu.memory_space<vmem>>, vector<1x1x32xf32>
    %159 = vector.shape_cast %158 : vector<1x1x32xf32> to vector<1x32xf32>
    %cst_90 = arith.constant dense<0.000000e+00> : vector<16xf32>
    %160 = vector.multi_reduction <add>, %155, %cst_90 [1] : vector<16x32xf32> to vector<16xf32>
    %161 = vector.shape_cast %160 : vector<16xf32> to vector<16x1xf32>
    %cst_91 = arith.constant 3.200000e+01 : f32
    %162 = vector.broadcast %cst_91 : f32 to vector<16x1xf32>
    %163 = arith.divf %161, %162 : vector<16x1xf32>
    %164 = vector.broadcast %163 : vector<16x1xf32> to vector<16x32xf32>
    %165 = arith.subf %155, %164 : vector<16x32xf32>
    %166 = arith.mulf %165, %165 : vector<16x32xf32>
    %cst_92 = arith.constant dense<0.000000e+00> : vector<16xf32>
    %167 = vector.multi_reduction <add>, %166, %cst_92 [1] : vector<16x32xf32> to vector<16xf32>
    %168 = vector.shape_cast %167 : vector<16xf32> to vector<16x1xf32>
    %cst_93 = arith.constant 3.200000e+01 : f32
    %169 = vector.broadcast %cst_93 : f32 to vector<16x1xf32>
    %170 = arith.divf %168, %169 : vector<16x1xf32>
    %cst_94 = arith.constant 9.99999974E-6 : f32
    %171 = vector.broadcast %cst_94 : f32 to vector<16x1xf32>
    %172 = arith.addf %170, %171 : vector<16x1xf32>
    %173 = math.rsqrt %172 : vector<16x1xf32>
    %174 = vector.broadcast %173 : vector<16x1xf32> to vector<16x32xf32>
    %175 = arith.mulf %165, %174 : vector<16x32xf32>
    %176 = vector.broadcast %157 : vector<1x32xf32> to vector<16x32xf32>
    %177 = arith.mulf %175, %176 : vector<16x32xf32>
    %178 = vector.broadcast %159 : vector<1x32xf32> to vector<16x32xf32>
    %179 = arith.addf %177, %178 : vector<16x32xf32>
    %c0_95 = arith.constant 0 : index
    %c0_96 = arith.constant 0 : index
    %180 = vector.load %arg26[%c0_95, %c0_96] : memref<16x32xf32, #tpu.memory_space<vmem>>, vector<16x32xf32>
    tpu.vector_store %arg26[%c0_95, %c0_96], %179 {strides = array<i32>} : memref<16x32xf32, #tpu.memory_space<vmem>>, vector<16x32xf32>,
    %c1_i32 = arith.constant 1 : i32
    %181 = arith.cmpi eq, %arg1, %c1_i32 : i32
    %182 = arith.extui %181 : i1 to i32
    %c0_i32_97 = arith.constant 0 : i32
    %183 = arith.cmpi ne, %182, %c0_i32_97 : i32
    scf.if %183 {
      %c0_98 = arith.constant 0 : index
      %c0_99 = arith.constant 0 : index
      %184 = vector.load %arg26[%c0_98, %c0_99] : memref<16x32xf32, #tpu.memory_space<vmem>>, vector<16x32xf32>
      %c0_100 = arith.constant 0 : index
      %c0_101 = arith.constant 0 : index
      %185 = vector.load %arg21[%c0_100, %c0_101] : memref<1x32xf32, #tpu.memory_space<vmem>>, vector<1x32xf32>
      %c0_102 = arith.constant 0 : index
      %c0_103 = arith.constant 0 : index
      %186 = vector.load %arg22[%c0_102, %c0_103] : memref<1x32xf32, #tpu.memory_space<vmem>>, vector<1x32xf32>
      %cst_104 = arith.constant dense<0.000000e+00> : vector<16xf32>
      %187 = vector.multi_reduction <add>, %184, %cst_104 [1] : vector<16x32xf32> to vector<16xf32>
      %188 = vector.shape_cast %187 : vector<16xf32> to vector<16x1xf32>
      %cst_105 = arith.constant 3.200000e+01 : f32
      %189 = vector.broadcast %cst_105 : f32 to vector<16x1xf32>
      %190 = arith.divf %188, %189 : vector<16x1xf32>
      %191 = vector.broadcast %190 : vector<16x1xf32> to vector<16x32xf32>
      %192 = arith.subf %184, %191 : vector<16x32xf32>
      %193 = arith.mulf %192, %192 : vector<16x32xf32>
      %cst_106 = arith.constant dense<0.000000e+00> : vector<16xf32>
      %194 = vector.multi_reduction <add>, %193, %cst_106 [1] : vector<16x32xf32> to vector<16xf32>
      %195 = vector.shape_cast %194 : vector<16xf32> to vector<16x1xf32>
      %cst_107 = arith.constant 3.200000e+01 : f32
      %196 = vector.broadcast %cst_107 : f32 to vector<16x1xf32>
      %197 = arith.divf %195, %196 : vector<16x1xf32>
      %cst_108 = arith.constant 9.99999974E-6 : f32
      %198 = vector.broadcast %cst_108 : f32 to vector<16x1xf32>
      %199 = arith.addf %197, %198 : vector<16x1xf32>
      %200 = math.rsqrt %199 : vector<16x1xf32>
      %201 = vector.broadcast %200 : vector<16x1xf32> to vector<16x32xf32>
      %202 = arith.mulf %192, %201 : vector<16x32xf32>
      %203 = vector.broadcast %185 : vector<1x32xf32> to vector<16x32xf32>
      %204 = arith.mulf %202, %203 : vector<16x32xf32>
      %205 = vector.broadcast %186 : vector<1x32xf32> to vector<16x32xf32>
      %206 = arith.addf %204, %205 : vector<16x32xf32>
      %c0_109 = arith.constant 0 : index
      %c0_110 = arith.constant 0 : index
      %207 = vector.load %arg23[%c0_109, %c0_110] : memref<32x8xbf16, #tpu.memory_space<vmem>>, vector<32x8xbf16>
      %208 = arith.truncf %206 : vector<16x32xf32> to vector<16x32xbf16>
      %cst_111 = arith.constant dense<0.000000e+00> : vector<16x8xf32>
      %209 = tpu.matmul %208, %207, %cst_111 {dimension_numbers = #tpu.dot_dimension_numbers<[1], [0], [0], [1], [0, 0, 1, 1], [], []>} : vector<16x32xbf16>, vector<32x8xbf16>, vector<16x8xf32> -> vector<16x8xf32>
      %c0_112 = arith.constant 0 : index
      %c0_113 = arith.constant 0 : index
      %210 = vector.load %arg24[%c0_112, %c0_113] : memref<1x8xf32, #tpu.memory_space<vmem>>, vector<1x8xf32>
      %211 = vector.broadcast %210 : vector<1x8xf32> to vector<16x8xf32>
      %212 = arith.addf %209, %211 : vector<16x8xf32>
      %213 = vector.shape_cast %212 : vector<16x8xf32> to vector<2x8x8xf32>
      %c0_114 = arith.constant 0 : index
      %c0_115 = arith.constant 0 : index
      %c0_116 = arith.constant 0 : index
      %214 = vector.load %arg29[%c0_114, %c0_115, %c0_116] : memref<2x8x1xf32, #tpu.memory_space<vmem>>, vector<2x8x1xf32>
      %215 = vector.broadcast %214 : vector<2x8x1xf32> to vector<2x8x8xf32>
      %216 = arith.mulf %213, %215 : vector<2x8x8xf32>
      %c0_117 = arith.constant 0 : index
      %c0_118 = arith.constant 0 : index
      %c0_119 = arith.constant 0 : index
      %217 = vector.load %arg28[%c0_117, %c0_118, %c0_119] : memref<2x8x1xf32, #tpu.memory_space<vmem>>, vector<2x8x1xf32>
      %218 = vector.broadcast %217 : vector<2x8x1xf32> to vector<2x8x8xf32>
      %219 = arith.addf %216, %218 : vector<2x8x8xf32>
      %c0_120 = arith.constant 0 : index
      %c0_121 = arith.constant 0 : index
      %c0_122 = arith.constant 0 : index
      %220 = vector.load %arg25[%c0_120, %c0_121, %c0_122] : memref<2x8x8xf32, #tpu.memory_space<vmem>>, vector<2x8x8xf32>
      tpu.vector_store %arg25[%c0_120, %c0_121, %c0_122], %219 {strides = array<i32>} : memref<2x8x8xf32, #tpu.memory_space<vmem>>, vector<2x8x8xf32>,
    } else {
    }
    return
  }
  func.func @transform_0(%arg0: i32, %arg1: i32) -> (i32, i32, i32) {
    %c0_i32 = arith.constant 0 : i32
    %c0_i32_0 = arith.constant 0 : i32
    %c0_i32_1 = arith.constant 0 : i32
    return %arg0, %c0_i32, %c0_i32_0 : i32, i32, i32
  }
  func.func @transform_1(%arg0: i32, %arg1: i32) -> (i32, i32) {
    %c0_i32 = arith.constant 0 : i32
    %c0_i32_0 = arith.constant 0 : i32
    %c0_i32_1 = arith.constant 0 : i32
    return %c0_i32, %c0_i32_0 : i32, i32
  }
  func.func @transform_2(%arg0: i32, %arg1: i32) -> (i32, i32) {
    %c0_i32 = arith.constant 0 : i32
    %c0_i32_0 = arith.constant 0 : i32
    %c0_i32_1 = arith.constant 0 : i32
    return %c0_i32, %c0_i32_0 : i32, i32
  }
  func.func @transform_3(%arg0: i32, %arg1: i32) -> (i32, i32, i32) {
    %c0_i32 = arith.constant 0 : i32
    %c0_i32_0 = arith.constant 0 : i32
    %c0_i32_1 = arith.constant 0 : i32
    return %arg1, %c0_i32, %c0_i32_0 : i32, i32, i32
  }
  func.func @transform_4(%arg0: i32, %arg1: i32) -> (i32, i32, i32) {
    %c0_i32 = arith.constant 0 : i32
    %c0_i32_0 = arith.constant 0 : i32
    %c0_i32_1 = arith.constant 0 : i32
    return %arg1, %c0_i32, %c0_i32_0 : i32, i32, i32
  }
  func.func @transform_5(%arg0: i32, %arg1: i32) -> (i32, i32, i32) {
    %c0_i32 = arith.constant 0 : i32
    %c0_i32_0 = arith.constant 0 : i32
    %c0_i32_1 = arith.constant 0 : i32
    return %arg1, %c0_i32, %c0_i32_0 : i32, i32, i32
  }
  func.func @transform_6(%arg0: i32, %arg1: i32) -> (i32, i32, i32) {
    %c0_i32 = arith.constant 0 : i32
    %c0_i32_0 = arith.constant 0 : i32
    %c0_i32_1 = arith.constant 0 : i32
    return %arg1, %c0_i32, %c0_i32_0 : i32, i32, i32
  }
  func.func @transform_7(%arg0: i32, %arg1: i32) -> (i32, i32, i32) {
    %c0_i32 = arith.constant 0 : i32
    %c0_i32_0 = arith.constant 0 : i32
    %c0_i32_1 = arith.constant 0 : i32
    return %arg1, %c0_i32, %c0_i32_0 : i32, i32, i32
  }
  func.func @transform_8(%arg0: i32, %arg1: i32) -> (i32, i32, i32) {
    %c0_i32 = arith.constant 0 : i32
    %c0_i32_0 = arith.constant 0 : i32
    %c0_i32_1 = arith.constant 0 : i32
    return %arg1, %c0_i32, %c0_i32_0 : i32, i32, i32
  }
  func.func @transform_9(%arg0: i32, %arg1: i32) -> (i32, i32, i32) {
    %c0_i32 = arith.constant 0 : i32
    %c0_i32_0 = arith.constant 0 : i32
    %c0_i32_1 = arith.constant 0 : i32
    return %arg1, %c0_i32, %c0_i32_0 : i32, i32, i32
  }
  func.func @transform_10(%arg0: i32, %arg1: i32) -> (i32, i32, i32) {
    %c0_i32 = arith.constant 0 : i32
    %c0_i32_0 = arith.constant 0 : i32
    %c0_i32_1 = arith.constant 0 : i32
    return %arg1, %c0_i32, %c0_i32_0 : i32, i32, i32
  }
  func.func @transform_11(%arg0: i32, %arg1: i32) -> (i32, i32, i32) {
    %c0_i32 = arith.constant 0 : i32
    %c0_i32_0 = arith.constant 0 : i32
    %c0_i32_1 = arith.constant 0 : i32
    return %arg1, %c0_i32, %c0_i32_0 : i32, i32, i32
  }
  func.func @transform_12(%arg0: i32, %arg1: i32) -> (i32, i32, i32) {
    %c0_i32 = arith.constant 0 : i32
    %c0_i32_0 = arith.constant 0 : i32
    %c0_i32_1 = arith.constant 0 : i32
    return %arg1, %c0_i32, %c0_i32_0 : i32, i32, i32
  }
  func.func @transform_13(%arg0: i32, %arg1: i32) -> (i32, i32, i32) {
    %c0_i32 = arith.constant 0 : i32
    %c0_i32_0 = arith.constant 0 : i32
    %c0_i32_1 = arith.constant 0 : i32
    return %arg1, %c0_i32, %c0_i32_0 : i32, i32, i32
  }
  func.func @transform_14(%arg0: i32, %arg1: i32) -> (i32, i32, i32) {
    %c0_i32 = arith.constant 0 : i32
    %c0_i32_0 = arith.constant 0 : i32
    %c0_i32_1 = arith.constant 0 : i32
    return %arg1, %c0_i32, %c0_i32_0 : i32, i32, i32
  }
  func.func @transform_15(%arg0: i32, %arg1: i32) -> (i32, i32, i32) {
    %c0_i32 = arith.constant 0 : i32
    %c0_i32_0 = arith.constant 0 : i32
    %c0_i32_1 = arith.constant 0 : i32
    return %arg1, %c0_i32, %c0_i32_0 : i32, i32, i32
  }
  func.func @transform_16(%arg0: i32, %arg1: i32) -> (i32, i32, i32) {
    %c0_i32 = arith.constant 0 : i32
    %c0_i32_0 = arith.constant 0 : i32
    %c0_i32_1 = arith.constant 0 : i32
    return %arg1, %c0_i32, %c0_i32_0 : i32, i32, i32
  }
  func.func @transform_17(%arg0: i32, %arg1: i32) -> (i32, i32, i32) {
    %c0_i32 = arith.constant 0 : i32
    %c0_i32_0 = arith.constant 0 : i32
    %c0_i32_1 = arith.constant 0 : i32
    return %arg1, %c0_i32, %c0_i32_0 : i32, i32, i32
  }
  func.func @transform_18(%arg0: i32, %arg1: i32) -> (i32, i32, i32) {
    %c0_i32 = arith.constant 0 : i32
    %c0_i32_0 = arith.constant 0 : i32
    %c0_i32_1 = arith.constant 0 : i32
    return %arg1, %c0_i32, %c0_i32_0 : i32, i32, i32
  }
  func.func @transform_19(%arg0: i32, %arg1: i32) -> (i32, i32) {
    %c0_i32 = arith.constant 0 : i32
    %c0_i32_0 = arith.constant 0 : i32
    %c0_i32_1 = arith.constant 0 : i32
    return %c0_i32, %c0_i32_0 : i32, i32
  }
  func.func @transform_20(%arg0: i32, %arg1: i32) -> (i32, i32) {
    %c0_i32 = arith.constant 0 : i32
    %c0_i32_0 = arith.constant 0 : i32
    %c0_i32_1 = arith.constant 0 : i32
    return %c0_i32, %c0_i32_0 : i32, i32
  }
  func.func @transform_21(%arg0: i32, %arg1: i32) -> (i32, i32) {
    %c0_i32 = arith.constant 0 : i32
    %c0_i32_0 = arith.constant 0 : i32
    %c0_i32_1 = arith.constant 0 : i32
    return %c0_i32, %c0_i32_0 : i32, i32
  }
  func.func @transform_22(%arg0: i32, %arg1: i32) -> (i32, i32) {
    %c0_i32 = arith.constant 0 : i32
    %c0_i32_0 = arith.constant 0 : i32
    %c0_i32_1 = arith.constant 0 : i32
    return %c0_i32, %c0_i32_0 : i32, i32
  }
  func.func @transform_23(%arg0: i32, %arg1: i32) -> (i32, i32, i32) {
    %c0_i32 = arith.constant 0 : i32
    %c0_i32_0 = arith.constant 0 : i32
    %c0_i32_1 = arith.constant 0 : i32
    return %arg0, %c0_i32, %c0_i32_0 : i32, i32, i32
  }
}

</mosaic_0001>

<llo_original>
// kernel: tpu_custom_call.1
$region0: #{tpu_custom_call.1}
  #allocation0 [shape = 'u32[]', space=smem, size = 0x4, offset = 0x4, fixed_abs, tag = 'smem constant byte address 0x4 - core index']
  #allocation1 [shape = 'u32[72,128]{1,0:T(1,128)}', space=vmem, size = 0x9000, scoped, tag = 'internal scratch']
  #allocation2 [shape = 'f32[16,32]{1,0:T(8,128)}', space=vmem, size = 0x2000, scoped, tag = 'scratch operand']
  #allocation3 [shape = 'f32[2,8,32]{2,1,0:T(8,128)}', space=vmem, size = 0x2000, scoped, tag = 'scratch operand']
  #allocation4 [shape = 'f32[2,8,1]{2,1,0:T(8,128)}', space=vmem, size = 0x2000, scoped, tag = 'scratch operand']
  #allocation5 [shape = 'f32[2,8,1]{2,1,0:T(8,128)}', space=vmem, size = 0x2000, scoped, tag = 'scratch operand']
  %s0 = inlined_call_operand.vmem [shape: f32[4,8,16], index: 0, kind: input, shape index: {}]
  %s1 = inlined_call_operand.hbm [shape: bf16[16,32], index: 1, kind: input, shape index: {}]
  %s2 = inlined_call_operand.hbm [shape: f32[1,32], index: 2, kind: input, shape index: {}]
  %s3 = inlined_call_operand.vmem [shape: bf16[2,32,32], index: 3, kind: input, shape index: {}]
  %s4 = inlined_call_operand.hbm [shape: f32[2,1,32], index: 4, kind: input, shape index: {}]
  %s5 = inlined_call_operand.vmem [shape: bf16[2,32,32], index: 5, kind: input, shape index: {}]
  %s6 = inlined_call_operand.hbm [shape: f32[2,1,32], index: 6, kind: input, shape index: {}]
  %s7 = inlined_call_operand.hbm [shape: bf16[2,32,32], index: 7, kind: input, shape index: {}]
  %s8 = inlined_call_operand.hbm [shape: f32[2,1,32], index: 8, kind: input, shape index: {}]
  %s9 = inlined_call_operand.hbm [shape: bf16[2,32,32], index: 9, kind: input, shape index: {}]
  %s10 = inlined_call_operand.hbm [shape: f32[2,1,32], index: 10, kind: input, shape index: {}]
  %s11 = inlined_call_operand.hbm [shape: f32[2,1,32], index: 11, kind: input, shape index: {}]
  %s12 = inlined_call_operand.hbm [shape: f32[2,1,32], index: 12, kind: input, shape index: {}]
  %s13 = inlined_call_operand.hbm [shape: bf16[2,32,64], index: 13, kind: input, shape index: {}]
  %s14 = inlined_call_operand.hbm [shape: f32[2,1,64], index: 14, kind: input, shape index: {}]
  %s15 = inlined_call_operand.vmem [shape: bf16[2,64,32], index: 15, kind: input, shape index: {}]
  %s16 = inlined_call_operand.hbm [shape: f32[2,1,32], index: 16, kind: input, shape index: {}]
  %s17 = inlined_call_operand.hbm [shape: f32[2,1,32], index: 17, kind: input, shape index: {}]
  %s18 = inlined_call_operand.hbm [shape: f32[2,1,32], index: 18, kind: input, shape index: {}]
  %s19 = inlined_call_operand.vmem [shape: f32[1,32], index: 19, kind: input, shape index: {}]
  %s20 = inlined_call_operand.vmem [shape: f32[1,32], index: 20, kind: input, shape index: {}]
  %s21 = inlined_call_operand.vmem [shape: bf16[32,8], index: 21, kind: input, shape index: {}]
  %s22 = inlined_call_operand.vmem [shape: f32[1,8], index: 22, kind: input, shape index: {}]
  %s23 = inlined_call_operand.hbm [shape: f32[4,8,8], index: 23, kind: output, shape index: {}]
  %s24 = sld [smem:[#allocation0]]
  $region193: #{tpu_custom_call.1} parent=0
    _
  %s26 = ssub.s32 1, %s24
  %s27 = scalar_select 0, %s26, %s24
  $region1: #{tpu_custom_call.1} parent=0
    #allocation6 [shape = 'u8[4096]{0}', space=vmem, size = 0x1000, scoped, tag = 'input window, operand 1, single buffered']
    #allocation7 [shape = 's32[2]{0}', space=sflag, size = 0x8, scoped, tag = 'scoped memory for tpu_custom_call.1']
    #allocation8 [shape = 's32[2]{0}', space=sflag, size = 0x8, scoped, tag = 'scoped memory for tpu_custom_call.1']
    #allocation9 [shape = 'u8[512]{0}', space=vmem, size = 0x400, scoped, tag = 'input window, operand 2, single buffered']
    #allocation10 [shape = 's32[1]{0}', space=sflag, size = 0x4, scoped, tag = 'scoped memory for tpu_custom_call.1']
    #allocation11 [shape = 'u8[1024]{0}', space=vmem, size = 0x400, scoped, tag = 'input window, operand 4']
    #allocation12 [shape = 'u8[1024]{0}', space=vmem, size = 0x400, scoped, tag = 'input window, operand 6']
    #allocation13 [shape = 'u8[16384]{0}', space=vmem, size = 0x4000, scoped, tag = 'input window, operand 7']
    #allocation14 [shape = 'u8[1024]{0}', space=vmem, size = 0x400, scoped, tag = 'input window, operand 8']
    #allocation15 [shape = 'u8[16384]{0}', space=vmem, size = 0x4000, scoped, tag = 'input window, operand 9']
    #allocation16 [shape = 'u8[1024]{0}', space=vmem, size = 0x400, scoped, tag = 'input window, operand 10']
    #allocation17 [shape = 'u8[1024]{0}', space=vmem, size = 0x400, scoped, tag = 'input window, operand 11']
    #allocation18 [shape = 'u8[1024]{0}', space=vmem, size = 0x400, scoped, tag = 'input window, operand 12']
    #allocation19 [shape = 'u8[16384]{0}', space=vmem, size = 0x4000, scoped, tag = 'input window, operand 13']
    #allocation20 [shape = 'u8[1024]{0}', space=vmem, size = 0x400, scoped, tag = 'input window, operand 14']
    #allocation21 [shape = 'u8[1024]{0}', space=vmem, size = 0x400, scoped, tag = 'input window, operand 16']
    #allocation22 [shape = 'u8[1024]{0}', space=vmem, size = 0x400, scoped, tag = 'input window, operand 17']
    #allocation23 [shape = 'u8[1024]{0}', space=vmem, size = 0x400, scoped, tag = 'input window, operand 18']
    #allocation24 [shape = 'u8[16384]{0}', space=vmem, size = 0x4000, scoped, tag = 'output window, operand 0']
    %28 = vsyncpa [#allocation7], 0
    %29 = vsyncpa [#allocation10], 0
    %30 = vsyncpa [#allocation8], 0
    %s31 = scalar_lea.sflag [#allocation8], 1
    %32 = vsyncpa %s31, 0
    loop: start=0, step=1, limit=6
    $region2: #{tpu_custom_call.1} parent=1 // loop_pre_header
      _
    $region3: #{tpu_custom_call.1} parent=1 // loop_header
      %s34 = sphi 0, %s38
      %p35 = scmp.ge.s32.totalorder %s34, 6
      %s41 = sphi 0, %s53
      %s42 = sphi 0, %s49
      %s43 = sphi 0, %s41
      %s44 = sphi 0, %s42
      %s45 = sphi 0, %s43
      %s46 = sphi 0, %s44
      %s56 = sphi 0, %s58
      %s59 = sphi 0, %s56
      %s60 = sphi 0, %s59
      %s76 = sphi 0, %s60
      %s80 = sphi 0, %s80
      %s82 = sphi 0, %s80
      %s83 = sphi 0, %s82
      %s97 = sphi 0, %s83
      %s101 = sphi 0, %s101
      %s103 = sphi 0, %s101
      %s104 = sphi 0, %s103
      %s118 = sphi 0, %s104
      %s124 = sphi 0, %s126
      %s127 = sphi 0, %s124
      %s128 = sphi 0, %s127
      %s144 = sphi 0, %s128
      %s150 = sphi 0, %s152
      %s153 = sphi 0, %s150
      %s154 = sphi 0, %s153
      %s170 = sphi 0, %s154
      %s176 = sphi 0, %s178
      %s179 = sphi 0, %s176
      %s180 = sphi 0, %s179
      %s196 = sphi 0, %s180
      %s202 = sphi 0, %s204
      %s205 = sphi 0, %s202
      %s206 = sphi 0, %s205
      %s222 = sphi 0, %s206
      %s228 = sphi 0, %s230
      %s231 = sphi 0, %s228
      %s232 = sphi 0, %s231
      %s248 = sphi 0, %s232
      %s254 = sphi 0, %s256
      %s257 = sphi 0, %s254
      %s258 = sphi 0, %s257
      %s274 = sphi 0, %s258
      %s280 = sphi 0, %s282
      %s283 = sphi 0, %s280
      %s284 = sphi 0, %s283
      %s300 = sphi 0, %s284
      %s306 = sphi 0, %s308
      %s309 = sphi 0, %s306
      %s310 = sphi 0, %s309
      %s326 = sphi 0, %s310
      %s332 = sphi 0, %s334
      %s335 = sphi 0, %s332
      %s336 = sphi 0, %s335
      %s352 = sphi 0, %s336
      %s358 = sphi 0, %s360
      %s361 = sphi 0, %s358
      %s362 = sphi 0, %s361
      %s378 = sphi 0, %s362
      %s384 = sphi 0, %s386
      %s387 = sphi 0, %s384
      %s388 = sphi 0, %s387
      %s404 = sphi 0, %s388
      %s410 = sphi 0, %s412
      %s413 = sphi 0, %s410
      %s414 = sphi 0, %s413
      %s430 = sphi 0, %s414
      %s436 = sphi 0, %s438
      %s439 = sphi 0, %s436
      %s440 = sphi 0, %s439
      %s456 = sphi 0, %s440
      %s462 = sphi 0, %s464
      %s465 = sphi 0, %s462
      %s466 = sphi 0, %s465
      %s482 = sphi 0, %s466
      %s488 = sphi 0, %s490
      %s491 = sphi 0, %s488
      %s492 = sphi 0, %s491
      %s508 = sphi 0, %s492
      %s514 = sphi 0, %s516
      %s517 = sphi 0, %s514
      %s518 = sphi 0, %s517
      %s534 = sphi 0, %s518
      %s538 = sphi 0, %s538
      %s540 = sphi 0, %s538
      %s541 = sphi 0, %s540
      %s555 = sphi 0, %s541
      %s559 = sphi 0, %s559
      %s561 = sphi 0, %s559
      %s562 = sphi 0, %s561
      %s576 = sphi 0, %s562
      %s580 = sphi 0, %s580
      %s582 = sphi 0, %s580
      %s583 = sphi 0, %s582
      %s597 = sphi 0, %s583
      %s601 = sphi 0, %s601
      %s603 = sphi 0, %s601
      %s604 = sphi 0, %s603
      %s618 = sphi 0, %s604
      %s624 = sphi 0, %s626
      %s627 = sphi 0, %s624
      %s628 = sphi 0, %s627
      %s644 = sphi 0, %s628
    $region4: #{tpu_custom_call.1} parent=1 // loop_header_branch
      %37 = sbr.rel (%p35) target = $region8
    $region5: #{tpu_custom_call.1} parent=1 // loop_body
      %s39 = ssub.s32 %s34, 1
      %s40 = ssub.s32 %s34, 2
      %s47 = sadd.s32 1, %s42
      %p48 = scmp.ge.s32.totalorder %s47, 2
      %s49 = scalar_select %p48, 0, %s47
      %s50 = sadd.s32 1, %s41
      %s51 = scalar_select %p48, %s50, %s41
      %p52 = scmp.ge.s32.totalorder %s51, 2
      %s53 = scalar_select %p52, 0, %s51
      %s54 = ssub.s32 %s41, %s53
      %p55 = scmp.eq.s32.totalorder %s54, 0
      %s57 = sadd.s32 %s56, 1
      %s58 = scalar_select %p55, %s56, %s57
      %p61 = pneg %p55
      %p62 = scmp.eq.s32.totalorder %s34, 3
      %p63 = por %p61, %p62
      %p64 = scmp.ne.s32.totalorder %s56, %s59
      %p65 = scmp.eq.s32.totalorder %s34, 0
      %p66 = por %p64, %p65
      %p67 = scmp.ne.s32.totalorder %s56, %s59
      %p68 = scmp.eq.s32.totalorder %s39, 3
      %p69 = por %p67, %p68
      %p70 = scmp.ne.s32.totalorder %s59, %s60
      %p71 = scmp.eq.s32.totalorder %s39, 0
      %p72 = por %p70, %p71
      %p73 = scmp.ne.s32.totalorder %s59, %s60
      %p74 = scmp.eq.s32.totalorder %s40, 3
      %p75 = por %p73, %p74
      %p77 = scmp.ne.s32.totalorder %s60, %s76
      %p78 = scmp.eq.s32.totalorder %s40, 0
      %p79 = por %p77, %p78
      %s81 = sadd.s32 %s80, 1
      %p84 = scmp.eq.s32.totalorder %s34, 3
      %p85 = scmp.ne.s32.totalorder %s80, %s82
      %p86 = scmp.eq.s32.totalorder %s34, 0
      %p87 = por %p85, %p86
      %p88 = scmp.ne.s32.totalorder %s80, %s82
      %p89 = scmp.eq.s32.totalorder %s39, 3
      %p90 = por %p88, %p89
      %p91 = scmp.ne.s32.totalorder %s82, %s83
      %p92 = scmp.eq.s32.totalorder %s39, 0
      %p93 = por %p91, %p92
      %p94 = scmp.ne.s32.totalorder %s82, %s83
      %p95 = scmp.eq.s32.totalorder %s40, 3
      %p96 = por %p94, %p95
      %p98 = scmp.ne.s32.totalorder %s83, %s97
      %p99 = scmp.eq.s32.totalorder %s40, 0
      %p100 = por %p98, %p99
      %s102 = sadd.s32 %s101, 1
      %p105 = scmp.eq.s32.totalorder %s34, 3
      %p106 = scmp.ne.s32.totalorder %s101, %s103
      %p107 = scmp.eq.s32.totalorder %s34, 0
      %p108 = por %p106, %p107
      %p109 = scmp.ne.s32.totalorder %s101, %s103
      %p110 = scmp.eq.s32.totalorder %s39, 3
      %p111 = por %p109, %p110
      %p112 = scmp.ne.s32.totalorder %s103, %s104
      %p113 = scmp.eq.s32.totalorder %s39, 0
      %p114 = por %p112, %p113
      %p115 = scmp.ne.s32.totalorder %s103, %s104
      %p116 = scmp.eq.s32.totalorder %s40, 3
      %p117 = por %p115, %p116
      %p119 = scmp.ne.s32.totalorder %s104, %s118
      %p120 = scmp.eq.s32.totalorder %s40, 0
      %p121 = por %p119, %p120
      %s122 = ssub.s32 %s42, %s49
      %p123 = scmp.eq.s32.totalorder %s122, 0
      %s125 = sadd.s32 %s124, 1
      %s126 = scalar_select %p123, %s124, %s125
      %p129 = pneg %p123
      %p130 = scmp.eq.s32.totalorder %s34, 3
      %p131 = por %p129, %p130
      %p132 = scmp.ne.s32.totalorder %s124, %s127
      %p133 = scmp.eq.s32.totalorder %s34, 0
      %p134 = por %p132, %p133
      %p135 = scmp.ne.s32.totalorder %s124, %s127
      %p136 = scmp.eq.s32.totalorder %s39, 3
      %p137 = por %p135, %p136
      %p138 = scmp.ne.s32.totalorder %s127, %s128
      %p139 = scmp.eq.s32.totalorder %s39, 0
      %p140 = por %p138, %p139
      %p141 = scmp.ne.s32.totalorder %s127, %s128
      %p142 = scmp.eq.s32.totalorder %s40, 3
      %p143 = por %p141, %p142
      %p145 = scmp.ne.s32.totalorder %s128, %s144
      %p146 = scmp.eq.s32.totalorder %s40, 0
      %p147 = por %p145, %p146
      %s148 = ssub.s32 %s42, %s49
      %p149 = scmp.eq.s32.totalorder %s148, 0
      %s151 = sadd.s32 %s150, 1
      %s152 = scalar_select %p149, %s150, %s151
      %p155 = pneg %p149
      %p156 = scmp.eq.s32.totalorder %s34, 3
      %p157 = por %p155, %p156
      %p158 = scmp.ne.s32.totalorder %s150, %s153
      %p159 = scmp.eq.s32.totalorder %s34, 0
      %p160 = por %p158, %p159
      %p161 = scmp.ne.s32.totalorder %s150, %s153
      %p162 = scmp.eq.s32.totalorder %s39, 3
      %p163 = por %p161, %p162
      %p164 = scmp.ne.s32.totalorder %s153, %s154
      %p165 = scmp.eq.s32.totalorder %s39, 0
      %p166 = por %p164, %p165
      %p167 = scmp.ne.s32.totalorder %s153, %s154
      %p168 = scmp.eq.s32.totalorder %s40, 3
      %p169 = por %p167, %p168
      %p171 = scmp.ne.s32.totalorder %s154, %s170
      %p172 = scmp.eq.s32.totalorder %s40, 0
      %p173 = por %p171, %p172
      %s174 = ssub.s32 %s42, %s49
      %p175 = scmp.eq.s32.totalorder %s174, 0
      %s177 = sadd.s32 %s176, 1
      %s178 = scalar_select %p175, %s176, %s177
      %p181 = pneg %p175
      %p182 = scmp.eq.s32.totalorder %s34, 3
      %p183 = por %p181, %p182
      %p184 = scmp.ne.s32.totalorder %s176, %s179
      %p185 = scmp.eq.s32.totalorder %s34, 0
      %p186 = por %p184, %p185
      %p187 = scmp.ne.s32.totalorder %s176, %s179
      %p188 = scmp.eq.s32.totalorder %s39, 3
      %p189 = por %p187, %p188
      %p190 = scmp.ne.s32.totalorder %s179, %s180
      %p191 = scmp.eq.s32.totalorder %s39, 0
      %p192 = por %p190, %p191
      %p193 = scmp.ne.s32.totalorder %s179, %s180
      %p194 = scmp.eq.s32.totalorder %s40, 3
      %p195 = por %p193, %p194
      %p197 = scmp.ne.s32.totalorder %s180, %s196
      %p198 = scmp.eq.s32.totalorder %s40, 0
      %p199 = por %p197, %p198
      %s200 = ssub.s32 %s42, %s49
      %p201 = scmp.eq.s32.totalorder %s200, 0
      %s203 = sadd.s32 %s202, 1
      %s204 = scalar_select %p201, %s202, %s203
      %p207 = pneg %p201
      %p208 = scmp.eq.s32.totalorder %s34, 3
      %p209 = por %p207, %p208
      %p210 = scmp.ne.s32.totalorder %s202, %s205
      %p211 = scmp.eq.s32.totalorder %s34, 0
      %p212 = por %p210, %p211
      %p213 = scmp.ne.s32.totalorder %s202, %s205
      %p214 = scmp.eq.s32.totalorder %s39, 3
      %p215 = por %p213, %p214
      %p216 = scmp.ne.s32.totalorder %s205, %s206
      %p217 = scmp.eq.s32.totalorder %s39, 0
      %p218 = por %p216, %p217
      %p219 = scmp.ne.s32.totalorder %s205, %s206
      %p220 = scmp.eq.s32.totalorder %s40, 3
      %p221 = por %p219, %p220
      %p223 = scmp.ne.s32.totalorder %s206, %s222
      %p224 = scmp.eq.s32.totalorder %s40, 0
      %p225 = por %p223, %p224
      %s226 = ssub.s32 %s42, %s49
      %p227 = scmp.eq.s32.totalorder %s226, 0
      %s229 = sadd.s32 %s228, 1
      %s230 = scalar_select %p227, %s228, %s229
      %p233 = pneg %p227
      %p234 = scmp.eq.s32.totalorder %s34, 3
      %p235 = por %p233, %p234
      %p236 = scmp.ne.s32.totalorder %s228, %s231
      %p237 = scmp.eq.s32.totalorder %s34, 0
      %p238 = por %p236, %p237
      %p239 = scmp.ne.s32.totalorder %s228, %s231
      %p240 = scmp.eq.s32.totalorder %s39, 3
      %p241 = por %p239, %p240
      %p242 = scmp.ne.s32.totalorder %s231, %s232
      %p243 = scmp.eq.s32.totalorder %s39, 0
      %p244 = por %p242, %p243
      %p245 = scmp.ne.s32.totalorder %s231, %s232
      %p246 = scmp.eq.s32.totalorder %s40, 3
      %p247 = por %p245, %p246
      %p249 = scmp.ne.s32.totalorder %s232, %s248
      %p250 = scmp.eq.s32.totalorder %s40, 0
      %p251 = por %p249, %p250
      %s252 = ssub.s32 %s42, %s49
      %p253 = scmp.eq.s32.totalorder %s252, 0
      %s255 = sadd.s32 %s254, 1
      %s256 = scalar_select %p253, %s254, %s255
      %p259 = pneg %p253
      %p260 = scmp.eq.s32.totalorder %s34, 3
      %p261 = por %p259, %p260
      %p262 = scmp.ne.s32.totalorder %s254, %s257
      %p263 = scmp.eq.s32.totalorder %s34, 0
      %p264 = por %p262, %p263
      %p265 = scmp.ne.s32.totalorder %s254, %s257
      %p266 = scmp.eq.s32.totalorder %s39, 3
      %p267 = por %p265, %p266
      %p268 = scmp.ne.s32.totalorder %s257, %s258
      %p269 = scmp.eq.s32.totalorder %s39, 0
      %p270 = por %p268, %p269
      %p271 = scmp.ne.s32.totalorder %s257, %s258
      %p272 = scmp.eq.s32.totalorder %s40, 3
      %p273 = por %p271, %p272
      %p275 = scmp.ne.s32.totalorder %s258, %s274
      %p276 = scmp.eq.s32.totalorder %s40, 0
      %p277 = por %p275, %p276
      %s278 = ssub.s32 %s42, %s49
      %p279 = scmp.eq.s32.totalorder %s278, 0
      %s281 = sadd.s32 %s280, 1
      %s282 = scalar_select %p279, %s280, %s281
      %p285 = pneg %p279
      %p286 = scmp.eq.s32.totalorder %s34, 3
      %p287 = por %p285, %p286
      %p288 = scmp.ne.s32.totalorder %s280, %s283
      %p289 = scmp.eq.s32.totalorder %s34, 0
      %p290 = por %p288, %p289
      %p291 = scmp.ne.s32.totalorder %s280, %s283
      %p292 = scmp.eq.s32.totalorder %s39, 3
      %p293 = por %p291, %p292
      %p294 = scmp.ne.s32.totalorder %s283, %s284
      %p295 = scmp.eq.s32.totalorder %s39, 0
      %p296 = por %p294, %p295
      %p297 = scmp.ne.s32.totalorder %s283, %s284
      %p298 = scmp.eq.s32.totalorder %s40, 3
      %p299 = por %p297, %p298
      %p301 = scmp.ne.s32.totalorder %s284, %s300
      %p302 = scmp.eq.s32.totalorder %s40, 0
      %p303 = por %p301, %p302
      %s304 = ssub.s32 %s42, %s49
      %p305 = scmp.eq.s32.totalorder %s304, 0
      %s307 = sadd.s32 %s306, 1
      %s308 = scalar_select %p305, %s306, %s307
      %p311 = pneg %p305
      %p312 = scmp.eq.s32.totalorder %s34, 3
      %p313 = por %p311, %p312
      %p314 = scmp.ne.s32.totalorder %s306, %s309
      %p315 = scmp.eq.s32.totalorder %s34, 0
      %p316 = por %p314, %p315
      %p317 = scmp.ne.s32.totalorder %s306, %s309
      %p318 = scmp.eq.s32.totalorder %s39, 3
      %p319 = por %p317, %p318
      %p320 = scmp.ne.s32.totalorder %s309, %s310
      %p321 = scmp.eq.s32.totalorder %s39, 0
      %p322 = por %p320, %p321
      %p323 = scmp.ne.s32.totalorder %s309, %s310
      %p324 = scmp.eq.s32.totalorder %s40, 3
      %p325 = por %p323, %p324
      %p327 = scmp.ne.s32.totalorder %s310, %s326
      %p328 = scmp.eq.s32.totalorder %s40, 0
      %p329 = por %p327, %p328
      %s330 = ssub.s32 %s42, %s49
      %p331 = scmp.eq.s32.totalorder %s330, 0
      %s333 = sadd.s32 %s332, 1
      %s334 = scalar_select %p331, %s332, %s333
      %p337 = pneg %p331
      %p338 = scmp.eq.s32.totalorder %s34, 3
      %p339 = por %p337, %p338
      %p340 = scmp.ne.s32.totalorder %s332, %s335
      %p341 = scmp.eq.s32.totalorder %s34, 0
      %p342 = por %p340, %p341
      %p343 = scmp.ne.s32.totalorder %s332, %s335
      %p344 = scmp.eq.s32.totalorder %s39, 3
      %p345 = por %p343, %p344
      %p346 = scmp.ne.s32.totalorder %s335, %s336
      %p347 = scmp.eq.s32.totalorder %s39, 0
      %p348 = por %p346, %p347
      %p349 = scmp.ne.s32.totalorder %s335, %s336
      %p350 = scmp.eq.s32.totalorder %s40, 3
      %p351 = por %p349, %p350
      %p353 = scmp.ne.s32.totalorder %s336, %s352
      %p354 = scmp.eq.s32.totalorder %s40, 0
      %p355 = por %p353, %p354
      %s356 = ssub.s32 %s42, %s49
      %p357 = scmp.eq.s32.totalorder %s356, 0
      %s359 = sadd.s32 %s358, 1
      %s360 = scalar_select %p357, %s358, %s359
      %p363 = pneg %p357
      %p364 = scmp.eq.s32.totalorder %s34, 3
      %p365 = por %p363, %p364
      %p366 = scmp.ne.s32.totalorder %s358, %s361
      %p367 = scmp.eq.s32.totalorder %s34, 0
      %p368 = por %p366, %p367
      %p369 = scmp.ne.s32.totalorder %s358, %s361
      %p370 = scmp.eq.s32.totalorder %s39, 3
      %p371 = por %p369, %p370
      %p372 = scmp.ne.s32.totalorder %s361, %s362
      %p373 = scmp.eq.s32.totalorder %s39, 0
      %p374 = por %p372, %p373
      %p375 = scmp.ne.s32.totalorder %s361, %s362
      %p376 = scmp.eq.s32.totalorder %s40, 3
      %p377 = por %p375, %p376
      %p379 = scmp.ne.s32.totalorder %s362, %s378
      %p380 = scmp.eq.s32.totalorder %s40, 0
      %p381 = por %p379, %p380
      %s382 = ssub.s32 %s42, %s49
      %p383 = scmp.eq.s32.totalorder %s382, 0
      %s385 = sadd.s32 %s384, 1
      %s386 = scalar_select %p383, %s384, %s385
      %p389 = pneg %p383
      %p390 = scmp.eq.s32.totalorder %s34, 3
      %p391 = por %p389, %p390
      %p392 = scmp.ne.s32.totalorder %s384, %s387
      %p393 = scmp.eq.s32.totalorder %s34, 0
      %p394 = por %p392, %p393
      %p395 = scmp.ne.s32.totalorder %s384, %s387
      %p396 = scmp.eq.s32.totalorder %s39, 3
      %p397 = por %p395, %p396
      %p398 = scmp.ne.s32.totalorder %s387, %s388
      %p399 = scmp.eq.s32.totalorder %s39, 0
      %p400 = por %p398, %p399
      %p401 = scmp.ne.s32.totalorder %s387, %s388
      %p402 = scmp.eq.s32.totalorder %s40, 3
      %p403 = por %p401, %p402
      %p405 = scmp.ne.s32.totalorder %s388, %s404
      %p406 = scmp.eq.s32.totalorder %s40, 0
      %p407 = por %p405, %p406
      %s408 = ssub.s32 %s42, %s49
      %p409 = scmp.eq.s32.totalorder %s408, 0
      %s411 = sadd.s32 %s410, 1
      %s412 = scalar_select %p409, %s410, %s411
      %p415 = pneg %p409
      %p416 = scmp.eq.s32.totalorder %s34, 3
      %p417 = por %p415, %p416
      %p418 = scmp.ne.s32.totalorder %s410, %s413
      %p419 = scmp.eq.s32.totalorder %s34, 0
      %p420 = por %p418, %p419
      %p421 = scmp.ne.s32.totalorder %s410, %s413
      %p422 = scmp.eq.s32.totalorder %s39, 3
      %p423 = por %p421, %p422
      %p424 = scmp.ne.s32.totalorder %s413, %s414
      %p425 = scmp.eq.s32.totalorder %s39, 0
      %p426 = por %p424, %p425
      %p427 = scmp.ne.s32.totalorder %s413, %s414
      %p428 = scmp.eq.s32.totalorder %s40, 3
      %p429 = por %p427, %p428
      %p431 = scmp.ne.s32.totalorder %s414, %s430
      %p432 = scmp.eq.s32.totalorder %s40, 0
      %p433 = por %p431, %p432
      %s434 = ssub.s32 %s42, %s49
      %p435 = scmp.eq.s32.totalorder %s434, 0
      %s437 = sadd.s32 %s436, 1
      %s438 = scalar_select %p435, %s436, %s437
      %p441 = pneg %p435
      %p442 = scmp.eq.s32.totalorder %s34, 3
      %p443 = por %p441, %p442
      %p444 = scmp.ne.s32.totalorder %s436, %s439
      %p445 = scmp.eq.s32.totalorder %s34, 0
      %p446 = por %p444, %p445
      %p447 = scmp.ne.s32.totalorder %s436, %s439
      %p448 = scmp.eq.s32.totalorder %s39, 3
      %p449 = por %p447, %p448
      %p450 = scmp.ne.s32.totalorder %s439, %s440
      %p451 = scmp.eq.s32.totalorder %s39, 0
      %p452 = por %p450, %p451
      %p453 = scmp.ne.s32.totalorder %s439, %s440
      %p454 = scmp.eq.s32.totalorder %s40, 3
      %p455 = por %p453, %p454
      %p457 = scmp.ne.s32.totalorder %s440, %s456
      %p458 = scmp.eq.s32.totalorder %s40, 0
      %p459 = por %p457, %p458
      %s460 = ssub.s32 %s42, %s49
      %p461 = scmp.eq.s32.totalorder %s460, 0
      %s463 = sadd.s32 %s462, 1
      %s464 = scalar_select %p461, %s462, %s463
      %p467 = pneg %p461
      %p468 = scmp.eq.s32.totalorder %s34, 3
      %p469 = por %p467, %p468
      %p470 = scmp.ne.s32.totalorder %s462, %s465
      %p471 = scmp.eq.s32.totalorder %s34, 0
      %p472 = por %p470, %p471
      %p473 = scmp.ne.s32.totalorder %s462, %s465
      %p474 = scmp.eq.s32.totalorder %s39, 3
      %p475 = por %p473, %p474
      %p476 = scmp.ne.s32.totalorder %s465, %s466
      %p477 = scmp.eq.s32.totalorder %s39, 0
      %p478 = por %p476, %p477
      %p479 = scmp.ne.s32.totalorder %s465, %s466
      %p480 = scmp.eq.s32.totalorder %s40, 3
      %p481 = por %p479, %p480
      %p483 = scmp.ne.s32.totalorder %s466, %s482
      %p484 = scmp.eq.s32.totalorder %s40, 0
      %p485 = por %p483, %p484
      %s486 = ssub.s32 %s42, %s49
      %p487 = scmp.eq.s32.totalorder %s486, 0
      %s489 = sadd.s32 %s488, 1
      %s490 = scalar_select %p487, %s488, %s489
      %p493 = pneg %p487
      %p494 = scmp.eq.s32.totalorder %s34, 3
      %p495 = por %p493, %p494
      %p496 = scmp.ne.s32.totalorder %s488, %s491
      %p497 = scmp.eq.s32.totalorder %s34, 0
      %p498 = por %p496, %p497
      %p499 = scmp.ne.s32.totalorder %s488, %s491
      %p500 = scmp.eq.s32.totalorder %s39, 3
      %p501 = por %p499, %p500
      %p502 = scmp.ne.s32.totalorder %s491, %s492
      %p503 = scmp.eq.s32.totalorder %s39, 0
      %p504 = por %p502, %p503
      %p505 = scmp.ne.s32.totalorder %s491, %s492
      %p506 = scmp.eq.s32.totalorder %s40, 3
      %p507 = por %p505, %p506
      %p509 = scmp.ne.s32.totalorder %s492, %s508
      %p510 = scmp.eq.s32.totalorder %s40, 0
      %p511 = por %p509, %p510
      %s512 = ssub.s32 %s42, %s49
      %p513 = scmp.eq.s32.totalorder %s512, 0
      %s515 = sadd.s32 %s514, 1
      %s516 = scalar_select %p513, %s514, %s515
      %p519 = pneg %p513
      %p520 = scmp.eq.s32.totalorder %s34, 3
      %p521 = por %p519, %p520
      %p522 = scmp.ne.s32.totalorder %s514, %s517
      %p523 = scmp.eq.s32.totalorder %s34, 0
      %p524 = por %p522, %p523
      %p525 = scmp.ne.s32.totalorder %s514, %s517
      %p526 = scmp.eq.s32.totalorder %s39, 3
      %p527 = por %p525, %p526
      %p528 = scmp.ne.s32.totalorder %s517, %s518
      %p529 = scmp.eq.s32.totalorder %s39, 0
      %p530 = por %p528, %p529
      %p531 = scmp.ne.s32.totalorder %s517, %s518
      %p532 = scmp.eq.s32.totalorder %s40, 3
      %p533 = por %p531, %p532
      %p535 = scmp.ne.s32.totalorder %s518, %s534
      %p536 = scmp.eq.s32.totalorder %s40, 0
      %p537 = por %p535, %p536
      %s539 = sadd.s32 %s538, 1
      %p542 = scmp.eq.s32.totalorder %s34, 3
      %p543 = scmp.ne.s32.totalorder %s538, %s540
      %p544 = scmp.eq.s32.totalorder %s34, 0
      %p545 = por %p543, %p544
      %p546 = scmp.ne.s32.totalorder %s538, %s540
      %p547 = scmp.eq.s32.totalorder %s39, 3
      %p548 = por %p546, %p547
      %p549 = scmp.ne.s32.totalorder %s540, %s541
      %p550 = scmp.eq.s32.totalorder %s39, 0
      %p551 = por %p549, %p550
      %p552 = scmp.ne.s32.totalorder %s540, %s541
      %p553 = scmp.eq.s32.totalorder %s40, 3
      %p554 = por %p552, %p553
      %p556 = scmp.ne.s32.totalorder %s541, %s555
      %p557 = scmp.eq.s32.totalorder %s40, 0
      %p558 = por %p556, %p557
      %s560 = sadd.s32 %s559, 1
      %p563 = scmp.eq.s32.totalorder %s34, 3
      %p564 = scmp.ne.s32.totalorder %s559, %s561
      %p565 = scmp.eq.s32.totalorder %s34, 0
      %p566 = por %p564, %p565
      %p567 = scmp.ne.s32.totalorder %s559, %s561
      %p568 = scmp.eq.s32.totalorder %s39, 3
      %p569 = por %p567, %p568
      %p570 = scmp.ne.s32.totalorder %s561, %s562
      %p571 = scmp.eq.s32.totalorder %s39, 0
      %p572 = por %p570, %p571
      %p573 = scmp.ne.s32.totalorder %s561, %s562
      %p574 = scmp.eq.s32.totalorder %s40, 3
      %p575 = por %p573, %p574
      %p577 = scmp.ne.s32.totalorder %s562, %s576
      %p578 = scmp.eq.s32.totalorder %s40, 0
      %p579 = por %p577, %p578
      %s581 = sadd.s32 %s580, 1
      %p584 = scmp.eq.s32.totalorder %s34, 3
      %p585 = scmp.ne.s32.totalorder %s580, %s582
      %p586 = scmp.eq.s32.totalorder %s34, 0
      %p587 = por %p585, %p586
      %p588 = scmp.ne.s32.totalorder %s580, %s582
      %p589 = scmp.eq.s32.totalorder %s39, 3
      %p590 = por %p588, %p589
      %p591 = scmp.ne.s32.totalorder %s582, %s583
      %p592 = scmp.eq.s32.totalorder %s39, 0
      %p593 = por %p591, %p592
      %p594 = scmp.ne.s32.totalorder %s582, %s583
      %p595 = scmp.eq.s32.totalorder %s40, 3
      %p596 = por %p594, %p595
      %p598 = scmp.ne.s32.totalorder %s583, %s597
      %p599 = scmp.eq.s32.totalorder %s40, 0
      %p600 = por %p598, %p599
      %s602 = sadd.s32 %s601, 1
      %p605 = scmp.eq.s32.totalorder %s34, 3
      %p606 = scmp.ne.s32.totalorder %s601, %s603
      %p607 = scmp.eq.s32.totalorder %s34, 0
      %p608 = por %p606, %p607
      %p609 = scmp.ne.s32.totalorder %s601, %s603
      %p610 = scmp.eq.s32.totalorder %s39, 3
      %p611 = por %p609, %p610
      %p612 = scmp.ne.s32.totalorder %s603, %s604
      %p613 = scmp.eq.s32.totalorder %s39, 0
      %p614 = por %p612, %p613
      %p615 = scmp.ne.s32.totalorder %s603, %s604
      %p616 = scmp.eq.s32.totalorder %s40, 3
      %p617 = por %p615, %p616
      %p619 = scmp.ne.s32.totalorder %s604, %s618
      %p620 = scmp.eq.s32.totalorder %s40, 0
      %p621 = por %p619, %p620
      %s622 = ssub.s32 %s41, %s53
      %p623 = scmp.eq.s32.totalorder %s622, 0
      %s625 = sadd.s32 %s624, 1
      %s626 = scalar_select %p623, %s624, %s625
      %p629 = pneg %p623
      %p630 = scmp.eq.s32.totalorder %s34, 3
      %p631 = por %p629, %p630
      %p632 = scmp.ne.s32.totalorder %s624, %s627
      %p633 = scmp.eq.s32.totalorder %s34, 0
      %p634 = por %p632, %p633
      %p635 = scmp.ne.s32.totalorder %s624, %s627
      %p636 = scmp.eq.s32.totalorder %s39, 3
      %p637 = por %p635, %p636
      %p638 = scmp.ne.s32.totalorder %s627, %s628
      %p639 = scmp.eq.s32.totalorder %s39, 0
      %p640 = por %p638, %p639
      %p641 = scmp.ne.s32.totalorder %s627, %s628
      %p642 = scmp.eq.s32.totalorder %s40, 3
      %p643 = por %p641, %p642
      %p645 = scmp.ne.s32.totalorder %s628, %s644
      %p646 = scmp.eq.s32.totalorder %s40, 0
      %p647 = por %p645, %p646
      %p648 = scmp.le.s32.totalorder 1, %s34
      %p649 = scmp.lt.s32.totalorder %s34, 5
      %p650 = pnand %p648, %p649
      %p651 = pneg %p650
      // Predicated region
      $region9: #{tpu_custom_call.1} parent=5 // pred_check
        _
      $region10: #{tpu_custom_call.1} parent=5 // pred_check_branch
        %653 = sbr.rel (%p650) target = $region12
      $region11: #{tpu_custom_call.1} parent=5 // pred_region
        %s654 = ssub.s32 %s34, 1
        // Predicated region
        $region13: #{tpu_custom_call.1} parent=11 // pred_check
          %p655 = pneg %p93
        $region14: #{tpu_custom_call.1} parent=11 // pred_check_branch
          %657 = sbr.rel (%p655) target = $region16
        $region15: #{tpu_custom_call.1} parent=11 // pred_region
          %659 = vsyncadd [#allocation7], 0
          %s660 = sshll.u32 %s1, 4
          %s661 = int_to_ptr.hbm [resolvable:$true] %s660
          %s662 = sshll.u32 [#allocation6], 4
          %s663 = int_to_ptr.vmem [resolvable:$true] %s662
          %668 = dma.hbm_to_vmem [thread:$0]  %s661, 128, %s663, [#allocation7], 64, 64, 4
        $region16: #{tpu_custom_call.1} parent=11 // pred_fallthru
          _
        // Predicated region
        $region17: #{tpu_custom_call.1} parent=11 // pred_check
          %p669 = pneg %p114
        $region18: #{tpu_custom_call.1} parent=11 // pred_check_branch
          %671 = sbr.rel (%p669) target = $region20
        $region19: #{tpu_custom_call.1} parent=11 // pred_region
          %673 = vsyncadd [#allocation10], 0
          %s675 = sshll.u32 %s2, 4
          %s676 = int_to_ptr.hbm [resolvable:$true] %s675
          %s677 = sshll.u32 [#allocation9], 4
          %s678 = int_to_ptr.vmem [resolvable:$true] %s677
          %680 = dma.hbm_to_vmem [thread:$0]  %s676, 16, %s678, [#allocation10]
        $region20: #{tpu_custom_call.1} parent=11 // pred_fallthru
          _
        // Predicated region
        $region21: #{tpu_custom_call.1} parent=11 // pred_check
          %p681 = pneg %p551
        $region22: #{tpu_custom_call.1} parent=11 // pred_check_branch
          %683 = sbr.rel (%p681) target = $region24
        $region23: #{tpu_custom_call.1} parent=11 // pred_region
          _
        $region24: #{tpu_custom_call.1} parent=11 // pred_fallthru
          _
        // Predicated region
        $region25: #{tpu_custom_call.1} parent=11 // pred_check
          %p684 = pneg %p572
        $region26: #{tpu_custom_call.1} parent=11 // pred_check_branch
          %686 = sbr.rel (%p684) target = $region28
        $region27: #{tpu_custom_call.1} parent=11 // pred_region
          _
        $region28: #{tpu_custom_call.1} parent=11 // pred_fallthru
          _
        // Predicated region
        $region29: #{tpu_custom_call.1} parent=11 // pred_check
          %p687 = pneg %p593
        $region30: #{tpu_custom_call.1} parent=11 // pred_check_branch
          %689 = sbr.rel (%p687) target = $region32
        $region31: #{tpu_custom_call.1} parent=11 // pred_region
          _
        $region32: #{tpu_custom_call.1} parent=11 // pred_fallthru
          _
        // Predicated region
        $region33: #{tpu_custom_call.1} parent=11 // pred_check
          %p690 = pneg %p614
        $region34: #{tpu_custom_call.1} parent=11 // pred_check_branch
          %692 = sbr.rel (%p690) target = $region36
        $region35: #{tpu_custom_call.1} parent=11 // pred_region
          _
        $region36: #{tpu_custom_call.1} parent=11 // pred_fallthru
          _
      $region12: #{tpu_custom_call.1} parent=5 // pred_fallthru
        _
      %p693 = scmp.lt.s32.totalorder %s34, 4
      // Predicated region
      $region37: #{tpu_custom_call.1} parent=5 // pred_check
        %p694 = pneg %p693
      $region38: #{tpu_custom_call.1} parent=5 // pred_check_branch
        %696 = sbr.rel (%p694) target = $region40
      $region39: #{tpu_custom_call.1} parent=5 // pred_region
        // Predicated region
        $region41: #{tpu_custom_call.1} parent=39 // pred_check
          %p697 = pneg %p66
        $region42: #{tpu_custom_call.1} parent=39 // pred_check_branch
          %699 = sbr.rel (%p697) target = $region44
        $region43: #{tpu_custom_call.1} parent=39 // pred_region
          %s700 = smul.u32 2, %s41
          %p701 = scmp.lt.s32.totalorder %s700, 3
          %s702 = scalar_select %p701, %s700, 3
          %s703 = smul.addr %s702, 8
          %s704 = scalar_lea.vmem %s0, %s703
          %s705 = smul.u32 2, %s41
        $region44: #{tpu_custom_call.1} parent=39 // pred_fallthru
          _
        // Predicated region
        $region45: #{tpu_custom_call.1} parent=39 // pred_check
          %p706 = pneg %p134
        $region46: #{tpu_custom_call.1} parent=39 // pred_check_branch
          %708 = sbr.rel (%p706) target = $region48
        $region47: #{tpu_custom_call.1} parent=39 // pred_region
          %p709 = scmp.lt.s32.totalorder %s42, 1
          %s710 = scalar_select %p709, %s42, 1
          %s711 = smul.addr %s710, 4
          %s712 = smul.addr %s711, 4
          %s713 = scalar_lea.vmem %s3, %s712
        $region48: #{tpu_custom_call.1} parent=39 // pred_fallthru
          _
        // Predicated region
        $region49: #{tpu_custom_call.1} parent=39 // pred_check
          %p714 = pneg %p160
        $region50: #{tpu_custom_call.1} parent=39 // pred_check_branch
          %716 = sbr.rel (%p714) target = $region52
        $region51: #{tpu_custom_call.1} parent=39 // pred_region
          %s717 = sand.u32 %s34, 1
          %s718 = scalar_lea.sflag [#allocation7], %s717
          %s719 = sand.u32 %s150, 1
          %s720 = scalar_lea.vmem [#allocation11], %s719
          %722 = vsyncadd %s718, 0
          %s723 = scalar_lea.hbm %s4, %s42
          %s725 = sshll.u32 %s723, 4
          %s726 = int_to_ptr.hbm [resolvable:$true] %s725
          %s727 = sshll.u32 %s720, 4
          %s728 = int_to_ptr.vmem [resolvable:$true] %s727
          %730 = dma.hbm_to_vmem [thread:$0]  %s726, 16, %s728, %s718
        $region52: #{tpu_custom_call.1} parent=39 // pred_fallthru
          _
        // Predicated region
        $region53: #{tpu_custom_call.1} parent=39 // pred_check
          %p731 = pneg %p186
        $region54: #{tpu_custom_call.1} parent=39 // pred_check_branch
          %733 = sbr.rel (%p731) target = $region56
        $region55: #{tpu_custom_call.1} parent=39 // pred_region
          %p734 = scmp.lt.s32.totalorder %s42, 1
          %s735 = scalar_select %p734, %s42, 1
          %s736 = smul.addr %s735, 4
          %s737 = smul.addr %s736, 4
          %s738 = scalar_lea.vmem %s5, %s737
        $region56: #{tpu_custom_call.1} parent=39 // pred_fallthru
          _
        // Predicated region
        $region57: #{tpu_custom_call.1} parent=39 // pred_check
          %p739 = pneg %p212
        $region58: #{tpu_custom_call.1} parent=39 // pred_check_branch
          %741 = sbr.rel (%p739) target = $region60
        $region59: #{tpu_custom_call.1} parent=39 // pred_region
          %s742 = sand.u32 %s34, 1
          %s743 = scalar_lea.sflag [#allocation7], %s742
          %s744 = sand.u32 %s202, 1
          %s745 = scalar_lea.vmem [#allocation12], %s744
          %747 = vsyncadd %s743, 0
          %s748 = scalar_lea.hbm %s6, %s42
          %s750 = sshll.u32 %s748, 4
          %s751 = int_to_ptr.hbm [resolvable:$true] %s750
          %s752 = sshll.u32 %s745, 4
          %s753 = int_to_ptr.vmem [resolvable:$true] %s752
          %755 = dma.hbm_to_vmem [thread:$0]  %s751, 16, %s753, %s743
        $region60: #{tpu_custom_call.1} parent=39 // pred_fallthru
          _
        // Predicated region
        $region61: #{tpu_custom_call.1} parent=39 // pred_check
          %p756 = pneg %p238
        $region62: #{tpu_custom_call.1} parent=39 // pred_check_branch
          %758 = sbr.rel (%p756) target = $region64
        $region63: #{tpu_custom_call.1} parent=39 // pred_region
          %s759 = sand.u32 %s34, 1
          %s760 = scalar_lea.sflag [#allocation7], %s759
          %s761 = sand.u32 %s228, 1
          %s762 = smul.addr %s761, 16
          %s763 = scalar_lea.vmem [#allocation13], %s762
          %765 = vsyncadd %s760, 0
          %s766 = smul.addr %s42, 4
          %s767 = smul.addr %s766, 4
          %s768 = scalar_lea.hbm %s7, %s767
          %s769 = sshll.u32 %s768, 4
          %s770 = int_to_ptr.hbm [resolvable:$true] %s769
          %s771 = sshll.u32 %s763, 4
          %s772 = int_to_ptr.vmem [resolvable:$true] %s771
          %777 = dma.hbm_to_vmem [thread:$0]  %s770, 256, %s772, %s760, 64, 64, 4
        $region64: #{tpu_custom_call.1} parent=39 // pred_fallthru
          _
        // Predicated region
        $region65: #{tpu_custom_call.1} parent=39 // pred_check
          %p778 = pneg %p264
        $region66: #{tpu_custom_call.1} parent=39 // pred_check_branch
          %780 = sbr.rel (%p778) target = $region68
        $region67: #{tpu_custom_call.1} parent=39 // pred_region
          %s781 = sand.u32 %s34, 1
          %s782 = scalar_lea.sflag [#allocation7], %s781
          %s783 = sand.u32 %s254, 1
          %s784 = scalar_lea.vmem [#allocation14], %s783
          %786 = vsyncadd %s782, 0
          %s787 = scalar_lea.hbm %s8, %s42
          %s789 = sshll.u32 %s787, 4
          %s790 = int_to_ptr.hbm [resolvable:$true] %s789
          %s791 = sshll.u32 %s784, 4
          %s792 = int_to_ptr.vmem [resolvable:$true] %s791
          %794 = dma.hbm_to_vmem [thread:$0]  %s790, 16, %s792, %s782
        $region68: #{tpu_custom_call.1} parent=39 // pred_fallthru
          _
        // Predicated region
        $region69: #{tpu_custom_call.1} parent=39 // pred_check
          %p795 = pneg %p290
        $region70: #{tpu_custom_call.1} parent=39 // pred_check_branch
          %797 = sbr.rel (%p795) target = $region72
        $region71: #{tpu_custom_call.1} parent=39 // pred_region
          %s798 = sand.u32 %s34, 1
          %s799 = scalar_lea.sflag [#allocation7], %s798
          %s800 = sand.u32 %s280, 1
          %s801 = smul.addr %s800, 16
          %s802 = scalar_lea.vmem [#allocation15], %s801
          %804 = vsyncadd %s799, 0
          %s805 = smul.addr %s42, 4
          %s806 = smul.addr %s805, 4
          %s807 = scalar_lea.hbm %s9, %s806
          %s808 = sshll.u32 %s807, 4
          %s809 = int_to_ptr.hbm [resolvable:$true] %s808
          %s810 = sshll.u32 %s802, 4
          %s811 = int_to_ptr.vmem [resolvable:$true] %s810
          %816 = dma.hbm_to_vmem [thread:$0]  %s809, 256, %s811, %s799, 64, 64, 4
        $region72: #{tpu_custom_call.1} parent=39 // pred_fallthru
          _
        // Predicated region
        $region73: #{tpu_custom_call.1} parent=39 // pred_check
          %p817 = pneg %p316
        $region74: #{tpu_custom_call.1} parent=39 // pred_check_branch
          %819 = sbr.rel (%p817) target = $region76
        $region75: #{tpu_custom_call.1} parent=39 // pred_region
          %s820 = sand.u32 %s34, 1
          %s821 = scalar_lea.sflag [#allocation7], %s820
          %s822 = sand.u32 %s306, 1
          %s823 = scalar_lea.vmem [#allocation16], %s822
          %825 = vsyncadd %s821, 0
          %s826 = scalar_lea.hbm %s10, %s42
          %s828 = sshll.u32 %s826, 4
          %s829 = int_to_ptr.hbm [resolvable:$true] %s828
          %s830 = sshll.u32 %s823, 4
          %s831 = int_to_ptr.vmem [resolvable:$true] %s830
          %833 = dma.hbm_to_vmem [thread:$0]  %s829, 16, %s831, %s821
        $region76: #{tpu_custom_call.1} parent=39 // pred_fallthru
          _
        // Predicated region
        $region77: #{tpu_custom_call.1} parent=39 // pred_check
          %p834 = pneg %p342
        $region78: #{tpu_custom_call.1} parent=39 // pred_check_branch
          %836 = sbr.rel (%p834) target = $region80
        $region79: #{tpu_custom_call.1} parent=39 // pred_region
          %s837 = sand.u32 %s34, 1
          %s838 = scalar_lea.sflag [#allocation7], %s837
          %s839 = sand.u32 %s332, 1
          %s840 = scalar_lea.vmem [#allocation17], %s839
          %842 = vsyncadd %s838, 0
          %s843 = scalar_lea.hbm %s11, %s42
          %s845 = sshll.u32 %s843, 4
          %s846 = int_to_ptr.hbm [resolvable:$true] %s845
          %s847 = sshll.u32 %s840, 4
          %s848 = int_to_ptr.vmem [resolvable:$true] %s847
          %850 = dma.hbm_to_vmem [thread:$0]  %s846, 16, %s848, %s838
        $region80: #{tpu_custom_call.1} parent=39 // pred_fallthru
          _
        // Predicated region
        $region81: #{tpu_custom_call.1} parent=39 // pred_check
          %p851 = pneg %p368
        $region82: #{tpu_custom_call.1} parent=39 // pred_check_branch
          %853 = sbr.rel (%p851) target = $region84
        $region83: #{tpu_custom_call.1} parent=39 // pred_region
          %s854 = sand.u32 %s34, 1
          %s855 = scalar_lea.sflag [#allocation7], %s854
          %s856 = sand.u32 %s358, 1
          %s857 = scalar_lea.vmem [#allocation18], %s856
          %859 = vsyncadd %s855, 0
          %s860 = scalar_lea.hbm %s12, %s42
          %s862 = sshll.u32 %s860, 4
          %s863 = int_to_ptr.hbm [resolvable:$true] %s862
          %s864 = sshll.u32 %s857, 4
          %s865 = int_to_ptr.vmem [resolvable:$true] %s864
          %867 = dma.hbm_to_vmem [thread:$0]  %s863, 16, %s865, %s855
        $region84: #{tpu_custom_call.1} parent=39 // pred_fallthru
          _
        // Predicated region
        $region85: #{tpu_custom_call.1} parent=39 // pred_check
          %p868 = pneg %p394
        $region86: #{tpu_custom_call.1} parent=39 // pred_check_branch
          %870 = sbr.rel (%p868) target = $region88
        $region87: #{tpu_custom_call.1} parent=39 // pred_region
          %s871 = sand.u32 %s34, 1
          %s872 = scalar_lea.sflag [#allocation7], %s871
          %s873 = sand.u32 %s384, 1
          %s874 = smul.addr %s873, 16
          %s875 = scalar_lea.vmem [#allocation19], %s874
          %877 = vsyncadd %s872, 0
          %s878 = smul.addr %s42, 4
          %s879 = smul.addr %s878, 4
          %s880 = scalar_lea.hbm %s13, %s879
          %s881 = sshll.u32 %s880, 4
          %s882 = int_to_ptr.hbm [resolvable:$true] %s881
          %s883 = sshll.u32 %s875, 4
          %s884 = int_to_ptr.vmem [resolvable:$true] %s883
          %889 = dma.hbm_to_vmem [thread:$0]  %s882, 256, %s884, %s872, 64, 64, 4
        $region88: #{tpu_custom_call.1} parent=39 // pred_fallthru
          _
        // Predicated region
        $region89: #{tpu_custom_call.1} parent=39 // pred_check
          %p890 = pneg %p420
        $region90: #{tpu_custom_call.1} parent=39 // pred_check_branch
          %892 = sbr.rel (%p890) target = $region92
        $region91: #{tpu_custom_call.1} parent=39 // pred_region
          %s893 = sand.u32 %s34, 1
          %s894 = scalar_lea.sflag [#allocation7], %s893
          %s895 = sand.u32 %s410, 1
          %s896 = scalar_lea.vmem [#allocation20], %s895
          %898 = vsyncadd %s894, 0
          %s899 = scalar_lea.hbm %s14, %s42
          %s901 = sshll.u32 %s899, 4
          %s902 = int_to_ptr.hbm [resolvable:$true] %s901
          %s903 = sshll.u32 %s896, 4
          %s904 = int_to_ptr.vmem [resolvable:$true] %s903
          %906 = dma.hbm_to_vmem [thread:$0]  %s902, 16, %s904, %s894
        $region92: #{tpu_custom_call.1} parent=39 // pred_fallthru
          _
        // Predicated region
        $region93: #{tpu_custom_call.1} parent=39 // pred_check
          %p907 = pneg %p446
        $region94: #{tpu_custom_call.1} parent=39 // pred_check_branch
          %909 = sbr.rel (%p907) target = $region96
        $region95: #{tpu_custom_call.1} parent=39 // pred_region
          %p910 = scmp.lt.s32.totalorder %s42, 1
          %s911 = scalar_select %p910, %s42, 1
          %s912 = smul.addr %s911, 8
          %s913 = smul.addr %s912, 4
          %s914 = scalar_lea.vmem %s15, %s913
        $region96: #{tpu_custom_call.1} parent=39 // pred_fallthru
          _
        // Predicated region
        $region97: #{tpu_custom_call.1} parent=39 // pred_check
          %p915 = pneg %p472
        $region98: #{tpu_custom_call.1} parent=39 // pred_check_branch
          %917 = sbr.rel (%p915) target = $region100
        $region99: #{tpu_custom_call.1} parent=39 // pred_region
          %s918 = sand.u32 %s34, 1
          %s919 = scalar_lea.sflag [#allocation7], %s918
          %s920 = sand.u32 %s462, 1
          %s921 = scalar_lea.vmem [#allocation21], %s920
          %923 = vsyncadd %s919, 0
          %s924 = scalar_lea.hbm %s16, %s42
          %s926 = sshll.u32 %s924, 4
          %s927 = int_to_ptr.hbm [resolvable:$true] %s926
          %s928 = sshll.u32 %s921, 4
          %s929 = int_to_ptr.vmem [resolvable:$true] %s928
          %931 = dma.hbm_to_vmem [thread:$0]  %s927, 16, %s929, %s919
        $region100: #{tpu_custom_call.1} parent=39 // pred_fallthru
          _
        // Predicated region
        $region101: #{tpu_custom_call.1} parent=39 // pred_check
          %p932 = pneg %p498
        $region102: #{tpu_custom_call.1} parent=39 // pred_check_branch
          %934 = sbr.rel (%p932) target = $region104
        $region103: #{tpu_custom_call.1} parent=39 // pred_region
          %s935 = sand.u32 %s34, 1
          %s936 = scalar_lea.sflag [#allocation7], %s935
          %s937 = sand.u32 %s488, 1
          %s938 = scalar_lea.vmem [#allocation22], %s937
          %940 = vsyncadd %s936, 0
          %s941 = scalar_lea.hbm %s17, %s42
          %s943 = sshll.u32 %s941, 4
          %s944 = int_to_ptr.hbm [resolvable:$true] %s943
          %s945 = sshll.u32 %s938, 4
          %s946 = int_to_ptr.vmem [resolvable:$true] %s945
          %948 = dma.hbm_to_vmem [thread:$0]  %s944, 16, %s946, %s936
        $region104: #{tpu_custom_call.1} parent=39 // pred_fallthru
          _
        // Predicated region
        $region105: #{tpu_custom_call.1} parent=39 // pred_check
          %p949 = pneg %p524
        $region106: #{tpu_custom_call.1} parent=39 // pred_check_branch
          %951 = sbr.rel (%p949) target = $region108
        $region107: #{tpu_custom_call.1} parent=39 // pred_region
          %s952 = sand.u32 %s34, 1
          %s953 = scalar_lea.sflag [#allocation7], %s952
          %s954 = sand.u32 %s514, 1
          %s955 = scalar_lea.vmem [#allocation23], %s954
          %957 = vsyncadd %s953, 0
          %s958 = scalar_lea.hbm %s18, %s42
          %s960 = sshll.u32 %s958, 4
          %s961 = int_to_ptr.hbm [resolvable:$true] %s960
          %s962 = sshll.u32 %s955, 4
          %s963 = int_to_ptr.vmem [resolvable:$true] %s962
          %965 = dma.hbm_to_vmem [thread:$0]  %s961, 16, %s963, %s953
        $region108: #{tpu_custom_call.1} parent=39 // pred_fallthru
          _
      $region40: #{tpu_custom_call.1} parent=5 // pred_fallthru
        _
      %p966 = scmp.le.s32.totalorder 1, %s34
      %p967 = scmp.lt.s32.totalorder %s34, 5
      %p968 = pnand %p966, %p967
      %p969 = pneg %p968
      // Predicated region
      $region109: #{tpu_custom_call.1} parent=5 // pred_check
        _
      $region110: #{tpu_custom_call.1} parent=5 // pred_check_branch
        %971 = sbr.rel (%p968) target = $region112
      $region111: #{tpu_custom_call.1} parent=5 // pred_region
        %s972 = ssub.s32 %s34, 1
        // Predicated region
        $region113: #{tpu_custom_call.1} parent=111 // pred_check
          %p973 = pneg %p93
        $region114: #{tpu_custom_call.1} parent=111 // pred_check_branch
          %975 = sbr.rel (%p973) target = $region116
        $region115: #{tpu_custom_call.1} parent=111 // pred_region
          %977 = dma.done [#allocation7], 128
        $region116: #{tpu_custom_call.1} parent=111 // pred_fallthru
          _
        // Predicated region
        $region117: #{tpu_custom_call.1} parent=111 // pred_check
          %p978 = pneg %p114
        $region118: #{tpu_custom_call.1} parent=111 // pred_check_branch
          %980 = sbr.rel (%p978) target = $region120
        $region119: #{tpu_custom_call.1} parent=111 // pred_region
          %982 = dma.done [#allocation10], 16
        $region120: #{tpu_custom_call.1} parent=111 // pred_fallthru
          _
        %s983 = sand.u32 %s39, 1
        %s984 = scalar_lea.sflag [#allocation7], %s983
        %s985 = sand.u32 %s153, 1
        %s986 = scalar_lea.vmem [#allocation11], %s985
        // Predicated region
        $region121: #{tpu_custom_call.1} parent=111 // pred_check
          %p987 = pneg %p166
        $region122: #{tpu_custom_call.1} parent=111 // pred_check_branch
          %989 = sbr.rel (%p987) target = $region124
        $region123: #{tpu_custom_call.1} parent=111 // pred_region
          %991 = dma.done %s984, 16
        $region124: #{tpu_custom_call.1} parent=111 // pred_fallthru
          _
        %s992 = sand.u32 %s39, 1
        %s993 = scalar_lea.sflag [#allocation7], %s992
        %s994 = sand.u32 %s205, 1
        %s995 = scalar_lea.vmem [#allocation12], %s994
        // Predicated region
        $region125: #{tpu_custom_call.1} parent=111 // pred_check
          %p996 = pneg %p218
        $region126: #{tpu_custom_call.1} parent=111 // pred_check_branch
          %998 = sbr.rel (%p996) target = $region128
        $region127: #{tpu_custom_call.1} parent=111 // pred_region
          %1000 = dma.done %s993, 16
        $region128: #{tpu_custom_call.1} parent=111 // pred_fallthru
          _
        %s1001 = sand.u32 %s39, 1
        %s1002 = scalar_lea.sflag [#allocation7], %s1001
        %s1003 = sand.u32 %s231, 1
        %s1004 = smul.addr %s1003, 16
        %s1005 = scalar_lea.vmem [#allocation13], %s1004
        // Predicated region
        $region129: #{tpu_custom_call.1} parent=111 // pred_check
          %p1006 = pneg %p244
        $region130: #{tpu_custom_call.1} parent=111 // pred_check_branch
          %1008 = sbr.rel (%p1006) target = $region132
        $region131: #{tpu_custom_call.1} parent=111 // pred_region
          %1010 = dma.done %s1002, 256
        $region132: #{tpu_custom_call.1} parent=111 // pred_fallthru
          _
        %s1011 = sand.u32 %s39, 1
        %s1012 = scalar_lea.sflag [#allocation7], %s1011
        %s1013 = sand.u32 %s257, 1
        %s1014 = scalar_lea.vmem [#allocation14], %s1013
        // Predicated region
        $region133: #{tpu_custom_call.1} parent=111 // pred_check
          %p1015 = pneg %p270
        $region134: #{tpu_custom_call.1} parent=111 // pred_check_branch
          %1017 = sbr.rel (%p1015) target = $region136
        $region135: #{tpu_custom_call.1} parent=111 // pred_region
          %1019 = dma.done %s1012, 16
        $region136: #{tpu_custom_call.1} parent=111 // pred_fallthru
          _
        %s1020 = sand.u32 %s39, 1
        %s1021 = scalar_lea.sflag [#allocation7], %s1020
        %s1022 = sand.u32 %s283, 1
        %s1023 = smul.addr %s1022, 16
        %s1024 = scalar_lea.vmem [#allocation15], %s1023
        // Predicated region
        $region137: #{tpu_custom_call.1} parent=111 // pred_check
          %p1025 = pneg %p296
        $region138: #{tpu_custom_call.1} parent=111 // pred_check_branch
          %1027 = sbr.rel (%p1025) target = $region140
        $region139: #{tpu_custom_call.1} parent=111 // pred_region
          %1029 = dma.done %s1021, 256
        $region140: #{tpu_custom_call.1} parent=111 // pred_fallthru
          _
        %s1030 = sand.u32 %s39, 1
        %s1031 = scalar_lea.sflag [#allocation7], %s1030
        %s1032 = sand.u32 %s309, 1
        %s1033 = scalar_lea.vmem [#allocation16], %s1032
        // Predicated region
        $region141: #{tpu_custom_call.1} parent=111 // pred_check
          %p1034 = pneg %p322
        $region142: #{tpu_custom_call.1} parent=111 // pred_check_branch
          %1036 = sbr.rel (%p1034) target = $region144
        $region143: #{tpu_custom_call.1} parent=111 // pred_region
          %1038 = dma.done %s1031, 16
        $region144: #{tpu_custom_call.1} parent=111 // pred_fallthru
          _
        %s1039 = sand.u32 %s39, 1
        %s1040 = scalar_lea.sflag [#allocation7], %s1039
        %s1041 = sand.u32 %s335, 1
        %s1042 = scalar_lea.vmem [#allocation17], %s1041
        // Predicated region
        $region145: #{tpu_custom_call.1} parent=111 // pred_check
          %p1043 = pneg %p348
        $region146: #{tpu_custom_call.1} parent=111 // pred_check_branch
          %1045 = sbr.rel (%p1043) target = $region148
        $region147: #{tpu_custom_call.1} parent=111 // pred_region
          %1047 = dma.done %s1040, 16
        $region148: #{tpu_custom_call.1} parent=111 // pred_fallthru
          _
        %s1048 = sand.u32 %s39, 1
        %s1049 = scalar_lea.sflag [#allocation7], %s1048
        %s1050 = sand.u32 %s361, 1
        %s1051 = scalar_lea.vmem [#allocation18], %s1050
        // Predicated region
        $region149: #{tpu_custom_call.1} parent=111 // pred_check
          %p1052 = pneg %p374
        $region150: #{tpu_custom_call.1} parent=111 // pred_check_branch
          %1054 = sbr.rel (%p1052) target = $region152
        $region151: #{tpu_custom_call.1} parent=111 // pred_region
          %1056 = dma.done %s1049, 16
        $region152: #{tpu_custom_call.1} parent=111 // pred_fallthru
          _
        %s1057 = sand.u32 %s39, 1
        %s1058 = scalar_lea.sflag [#allocation7], %s1057
        %s1059 = sand.u32 %s387, 1
        %s1060 = smul.addr %s1059, 16
        %s1061 = scalar_lea.vmem [#allocation19], %s1060
        // Predicated region
        $region153: #{tpu_custom_call.1} parent=111 // pred_check
          %p1062 = pneg %p400
        $region154: #{tpu_custom_call.1} parent=111 // pred_check_branch
          %1064 = sbr.rel (%p1062) target = $region156
        $region155: #{tpu_custom_call.1} parent=111 // pred_region
          %1066 = dma.done %s1058, 256
        $region156: #{tpu_custom_call.1} parent=111 // pred_fallthru
          _
        %s1067 = sand.u32 %s39, 1
        %s1068 = scalar_lea.sflag [#allocation7], %s1067
        %s1069 = sand.u32 %s413, 1
        %s1070 = scalar_lea.vmem [#allocation20], %s1069
        // Predicated region
        $region157: #{tpu_custom_call.1} parent=111 // pred_check
          %p1071 = pneg %p426
        $region158: #{tpu_custom_call.1} parent=111 // pred_check_branch
          %1073 = sbr.rel (%p1071) target = $region160
        $region159: #{tpu_custom_call.1} parent=111 // pred_region
          %1075 = dma.done %s1068, 16
        $region160: #{tpu_custom_call.1} parent=111 // pred_fallthru
          _
        %s1076 = sand.u32 %s39, 1
        %s1077 = scalar_lea.sflag [#allocation7], %s1076
        %s1078 = sand.u32 %s465, 1
        %s1079 = scalar_lea.vmem [#allocation21], %s1078
        // Predicated region
        $region161: #{tpu_custom_call.1} parent=111 // pred_check
          %p1080 = pneg %p478
        $region162: #{tpu_custom_call.1} parent=111 // pred_check_branch
          %1082 = sbr.rel (%p1080) target = $region164
        $region163: #{tpu_custom_call.1} parent=111 // pred_region
          %1084 = dma.done %s1077, 16
        $region164: #{tpu_custom_call.1} parent=111 // pred_fallthru
          _
        %s1085 = sand.u32 %s39, 1
        %s1086 = scalar_lea.sflag [#allocation7], %s1085
        %s1087 = sand.u32 %s491, 1
        %s1088 = scalar_lea.vmem [#allocation22], %s1087
        // Predicated region
        $region165: #{tpu_custom_call.1} parent=111 // pred_check
          %p1089 = pneg %p504
        $region166: #{tpu_custom_call.1} parent=111 // pred_check_branch
          %1091 = sbr.rel (%p1089) target = $region168
        $region167: #{tpu_custom_call.1} parent=111 // pred_region
          %1093 = dma.done %s1086, 16
        $region168: #{tpu_custom_call.1} parent=111 // pred_fallthru
          _
        %s1094 = sand.u32 %s39, 1
        %s1095 = scalar_lea.sflag [#allocation7], %s1094
        %s1096 = sand.u32 %s517, 1
        %s1097 = scalar_lea.vmem [#allocation23], %s1096
        // Predicated region
        $region169: #{tpu_custom_call.1} parent=111 // pred_check
          %p1098 = pneg %p530
        $region170: #{tpu_custom_call.1} parent=111 // pred_check_branch
          %1100 = sbr.rel (%p1098) target = $region172
        $region171: #{tpu_custom_call.1} parent=111 // pred_region
          %1102 = dma.done %s1095, 16
        $region172: #{tpu_custom_call.1} parent=111 // pred_fallthru
          _
        %s1103 = smul.u32 2, %s43
        %p1104 = scmp.lt.s32.totalorder %s1103, 3
        %s1105 = scalar_select %p1104, %s1103, 3
        %s1106 = smul.addr %s1105, 8
        %s1107 = scalar_lea.vmem %s0, %s1106
        %p1108 = pneg %p72
        %p1109 = pneg %p69
        %p1110 = pneg %p93
        %p1111 = pneg %p90
        %p1112 = pneg %p114
        %p1113 = pneg %p111
        %p1114 = scmp.lt.s32.totalorder %s44, 1
        %s1115 = scalar_select %p1114, %s44, 1
        %s1116 = smul.addr %s1115, 4
        %s1117 = smul.addr %s1116, 4
        %s1118 = scalar_lea.vmem %s3, %s1117
        %p1119 = pneg %p140
        %p1120 = pneg %p137
        %s1121 = sand.u32 %s39, 1
        %s1122 = scalar_lea.sflag [#allocation7], %s1121
        %s1123 = sand.u32 %s153, 1
        %s1124 = scalar_lea.vmem [#allocation11], %s1123
        %p1125 = pneg %p166
        %p1126 = pneg %p163
        %p1127 = scmp.lt.s32.totalorder %s44, 1
        %s1128 = scalar_select %p1127, %s44, 1
        %s1129 = smul.addr %s1128, 4
        %s1130 = smul.addr %s1129, 4
        %s1131 = scalar_lea.vmem %s5, %s1130
        %p1132 = pneg %p192
        %p1133 = pneg %p189
        %s1134 = sand.u32 %s39, 1
        %s1135 = scalar_lea.sflag [#allocation7], %s1134
        %s1136 = sand.u32 %s205, 1
        %s1137 = scalar_lea.vmem [#allocation12], %s1136
        %p1138 = pneg %p218
        %p1139 = pneg %p215
        %s1140 = sand.u32 %s39, 1
        %s1141 = scalar_lea.sflag [#allocation7], %s1140
        %s1142 = sand.u32 %s231, 1
        %s1143 = smul.addr %s1142, 16
        %s1144 = scalar_lea.vmem [#allocation13], %s1143
        %p1145 = pneg %p244
        %p1146 = pneg %p241
        %s1147 = sand.u32 %s39, 1
        %s1148 = scalar_lea.sflag [#allocation7], %s1147
        %s1149 = sand.u32 %s257, 1
        %s1150 = scalar_lea.vmem [#allocation14], %s1149
        %p1151 = pneg %p270
        %p1152 = pneg %p267
        %s1153 = sand.u32 %s39, 1
        %s1154 = scalar_lea.sflag [#allocation7], %s1153
        %s1155 = sand.u32 %s283, 1
        %s1156 = smul.addr %s1155, 16
        %s1157 = scalar_lea.vmem [#allocation15], %s1156
        %p1158 = pneg %p296
        %p1159 = pneg %p293
        %s1160 = sand.u32 %s39, 1
        %s1161 = scalar_lea.sflag [#allocation7], %s1160
        %s1162 = sand.u32 %s309, 1
        %s1163 = scalar_lea.vmem [#allocation16], %s1162
        %p1164 = pneg %p322
        %p1165 = pneg %p319
        %s1166 = sand.u32 %s39, 1
        %s1167 = scalar_lea.sflag [#allocation7], %s1166
        %s1168 = sand.u32 %s335, 1
        %s1169 = scalar_lea.vmem [#allocation17], %s1168
        %p1170 = pneg %p348
        %p1171 = pneg %p345
        %s1172 = sand.u32 %s39, 1
        %s1173 = scalar_lea.sflag [#allocation7], %s1172
        %s1174 = sand.u32 %s361, 1
        %s1175 = scalar_lea.vmem [#allocation18], %s1174
        %p1176 = pneg %p374
        %p1177 = pneg %p371
        %s1178 = sand.u32 %s39, 1
        %s1179 = scalar_lea.sflag [#allocation7], %s1178
        %s1180 = sand.u32 %s387, 1
        %s1181 = smul.addr %s1180, 16
        %s1182 = scalar_lea.vmem [#allocation19], %s1181
        %p1183 = pneg %p400
        %p1184 = pneg %p397
        %s1185 = sand.u32 %s39, 1
        %s1186 = scalar_lea.sflag [#allocation7], %s1185
        %s1187 = sand.u32 %s413, 1
        %s1188 = scalar_lea.vmem [#allocation20], %s1187
        %p1189 = pneg %p426
        %p1190 = pneg %p423
        %p1191 = scmp.lt.s32.totalorder %s44, 1
        %s1192 = scalar_select %p1191, %s44, 1
        %s1193 = smul.addr %s1192, 8
        %s1194 = smul.addr %s1193, 4
        %s1195 = scalar_lea.vmem %s15, %s1194
        %p1196 = pneg %p452
        %p1197 = pneg %p449
        %s1198 = sand.u32 %s39, 1
        %s1199 = scalar_lea.sflag [#allocation7], %s1198
        %s1200 = sand.u32 %s465, 1
        %s1201 = scalar_lea.vmem [#allocation21], %s1200
        %p1202 = pneg %p478
        %p1203 = pneg %p475
        %s1204 = sand.u32 %s39, 1
        %s1205 = scalar_lea.sflag [#allocation7], %s1204
        %s1206 = sand.u32 %s491, 1
        %s1207 = scalar_lea.vmem [#allocation22], %s1206
        %p1208 = pneg %p504
        %p1209 = pneg %p501
        %s1210 = sand.u32 %s39, 1
        %s1211 = scalar_lea.sflag [#allocation7], %s1210
        %s1212 = sand.u32 %s517, 1
        %s1213 = scalar_lea.vmem [#allocation23], %s1212
        %p1214 = pneg %p530
        %p1215 = pneg %p527
        %p1216 = pneg %p551
        %p1217 = pneg %p548
        %p1218 = pneg %p572
        %p1219 = pneg %p569
        %p1220 = pneg %p593
        %p1221 = pneg %p590
        %p1222 = pneg %p614
        %p1223 = pneg %p611
        %p1224 = pneg %p640
        %p1225 = pneg %p637
        %s1226 = sand.u32 %s627, 1
        %s1227 = scalar_lea.sflag [#allocation8], %s1226
        %s1228 = sand.u32 %s627, 1
        %s1229 = smul.addr %s1228, 16
        %s1230 = scalar_lea.vmem [#allocation24], %s1229
        %s1231 = smul.u32 2, %s43
        %p1232 = scmp.lt.s32.totalorder %s1231, 3
        %s1233 = scalar_select %p1232, %s1231, 3
        %s1234 = smul.addr %s1233, 8
        %s1235 = scalar_lea.vmem %s0, %s1234
        %s1236 = smul.u32 2, %s43
        %p1237 = scmp.lt.s32.totalorder %s44, 1
        %s1238 = scalar_select %p1237, %s44, 1
        %s1239 = smul.addr %s1238, 4
        %s1240 = smul.addr %s1239, 4
        %s1241 = scalar_lea.vmem %s3, %s1240
        %p1242 = scmp.lt.s32.totalorder %s44, 1
        %s1243 = scalar_select %p1242, %s44, 1
        %s1244 = smul.addr %s1243, 4
        %s1245 = smul.addr %s1244, 4
        %s1246 = scalar_lea.vmem %s5, %s1245
        %p1247 = scmp.lt.s32.totalorder %s44, 1
        %s1248 = scalar_select %p1247, %s44, 1
        %s1249 = smul.addr %s1248, 8
        %s1250 = smul.addr %s1249, 4
        %s1251 = scalar_lea.vmem %s15, %s1250
        %s1252 = smul.u32 2, %s43
        %p1254 = scmp.eq.s32.totalorder %s44, 0
        // Predicated region
        $region173: #{tpu_custom_call.1} parent=111 // pred_check
          %p1255 = pneg %p1254
        $region174: #{tpu_custom_call.1} parent=111 // pred_check_branch
          %1257 = sbr.rel (%p1255) target = $region176
        $region175: #{tpu_custom_call.1} parent=111 // pred_region
          %v1258 = vld [vmem:[%s1235] sm:$0xff]
          %v1259 = vld [vmem:[%s1235 + $0x8] sm:$0xff]
          %vm1260 = vcmask 130048
          %v1261 = vsel %vm1260, %v1258, 0.0
          %1262 = vadd.xlane.f32.xlu0 %v1261
          %v1263 = vpop.xlane.xlu0 %1262
          %v1264 = vsel %vm1260, %v1259, 0.0
          %1265 = vadd.xlane.f32.xlu0 %v1264
          %v1266 = vpop.xlane.xlu0 %1265
          %v1267 = vrcp.pop 16.0
          %v1268 = vmul.f32 16.0, %v1267
          %v1269 = vsub.f32 1.0, %v1268
          %v1270 = vmul.f32 %v1267, %v1269
          %v1271 = vadd.f32 %v1267, %v1270
          %vm1272 = vweird.f32 %v1267
          %v1273 = vsel %vm1272, %v1267, %v1271
          %v1274 = vmul.f32 %v1263, %v1273
          %v1275 = vmul.f32 %v1266, %v1273
          %v1276 = vsub.f32 %v1258, %v1274
          %v1277 = vsub.f32 %v1259, %v1275
          %v1278 = vmul.f32 %v1276, %v1276
          %v1279 = vmul.f32 %v1277, %v1277
          %v1280 = vsel %vm1260, %v1278, 0.0
          %1281 = vadd.xlane.f32.xlu0 %v1280
          %v1282 = vpop.xlane.xlu0 %1281
          %v1283 = vsel %vm1260, %v1279, 0.0
          %1284 = vadd.xlane.f32.xlu0 %v1283
          %v1285 = vpop.xlane.xlu0 %1284
          %v1286 = vmul.f32 %v1282, %v1273
          %v1287 = vmul.f32 %v1285, %v1273
          %v1288 = vadd.f32 %v1286, 1e-05
          %v1289 = vadd.f32 %v1287, 1e-05
          %v1290 = vrsqrt.pop %v1288
          %v1291 = vmul.f32 %v1290, %v1288
          %v1292 = vmul.f32 %v1291, %v1290
          %v1293 = vmul.f32 0.5, %v1292
          %v1294 = vsub.f32 1.5, %v1293
          %v1295 = vmul.f32 %v1290, %v1294
          %v1296 = vmul.f32 %v1288, %v1295
          %vm1297 = vcmp.eq.f32.partialorder %v1288, inf
          %v1298 = vsel %vm1297, %v1288, %v1296
          %vm1299 = vcmp.eq.f32.partialorder %v1288, 0.0
          %v1300 = vand.u32 %v1288, 2147483648
          %v1301 = vsel %vm1299, %v1300, %v1298
          %v1302 = vrsqrt.pop %v1289
          %v1303 = vmul.f32 %v1302, %v1289
          %v1304 = vmul.f32 %v1303, %v1302
          %v1305 = vmul.f32 0.5, %v1304
          %v1306 = vsub.f32 1.5, %v1305
          %v1307 = vmul.f32 %v1302, %v1306
          %v1308 = vmul.f32 %v1289, %v1307
          %vm1309 = vcmp.eq.f32.partialorder %v1289, inf
          %v1310 = vsel %vm1309, %v1289, %v1308
          %vm1311 = vcmp.eq.f32.partialorder %v1289, 0.0
          %v1312 = vand.u32 %v1289, 2147483648
          %v1313 = vsel %vm1311, %v1312, %v1310
          %vm1314 = vcmask 7168
          %1315 = vst.msk [vmem:[#allocation4] sm:$0xff] %vm1314, %v1274
          %1316 = vst.msk [vmem:[#allocation4 + $0x8] sm:$0xff] %vm1314, %v1275
          %1317 = vst.msk [vmem:[#allocation5] sm:$0xff] %vm1314, %v1301
          %1318 = vst.msk [vmem:[#allocation5 + $0x8] sm:$0xff] %vm1314, %v1313
          %v1319 = vrcp.pop %v1301
          %v1320 = vmul.f32 %v1301, %v1319
          %v1321 = vsub.f32 1.0, %v1320
          %v1322 = vmul.f32 %v1319, %v1321
          %v1323 = vadd.f32 %v1319, %v1322
          %vm1324 = vweird.f32 %v1301
          %vm1325 = vweird.f32 %v1319
          %vm1326 = vmor %vm1324, %vm1325
          %v1327 = vsel %vm1326, %v1319, %v1323
          %v1328 = vand.u32 2147483647, %v1301
          %vm1329 = vcmp.eq.f32.partialorder %v1328, 8.507059e+37
          %v1330 = vand.u32 %v1301, 2147483648
          %v1331 = vor.u32 1.1754944e-38, %v1330
          %v1332 = vsel %vm1329, %v1331, %v1327
          %v1333 = vmul.f32 %v1276, %v1332
          %v1334 = vrcp.pop %v1313
          %v1335 = vmul.f32 %v1313, %v1334
          %v1336 = vsub.f32 1.0, %v1335
          %v1337 = vmul.f32 %v1334, %v1336
          %v1338 = vadd.f32 %v1334, %v1337
          %vm1339 = vweird.f32 %v1313
          %vm1340 = vweird.f32 %v1334
          %vm1341 = vmor %vm1339, %vm1340
          %v1342 = vsel %vm1341, %v1334, %v1338
          %v1343 = vand.u32 2147483647, %v1313
          %vm1344 = vcmp.eq.f32.partialorder %v1343, 8.507059e+37
          %v1345 = vand.u32 %v1313, 2147483648
          %v1346 = vor.u32 1.1754944e-38, %v1345
          %v1347 = vsel %vm1344, %v1346, %v1342
          %v1348 = vmul.f32 %v1277, %v1347
          %v1349 = vld [vmem:[#allocation6] sm:$0xf]
          %v1350 = vld [vmem:[#allocation6 + $0x4] sm:$0xf]
          %v1351 = vpack.c.bf16 %v1348, %v1333
          %v1352 = vld [vmem:[#allocation9] sm:$0x1]
          %v1354 = vperm.slane %v1352, 0
          %v1358 = vunpack.c.l.b16 %v1349
          %v1359 = vunpack.c.l.b16 %v1350
          %v1360 = vpack.c.b16 %v1359, %v1358
          %v1363 = vsel %vm1260, %v1351, 0
          %1365 = vmatpush.bf16.msra.mxu0 0
          %1366 = vmatpush.bf16.msra.mxu0 0
          %1367 = vmatpush.bf16.msra.mxu0 0
          %1368 = vmatpush.bf16.msra.mxu0 0
          %1369 = vmatpush.bf16.msra.mxu0 0
          %1370 = vmatpush.bf16.msra.mxu0 0
          %1371 = vmatpush.bf16.msra.mxu0 0
          %1372 = vmatpush.bf16.msra.mxu0 %v1360
          %1373 = vmatmul.bf16.gmra.mxu0 %v1363
          %v1374 = vpop.f32.mrf.mxu0
          %v1375 = vadd.f32 %v1354, %v1374
          %v1376 = vpop.f32.mrf.mxu0
          %v1377 = vadd.f32 %v1354, %v1376
          %1378 = vdwg.mxu0
          %vm1379 = vcmask 261120
          %1380 = vst.msk [vmem:[#allocation2] sm:$0xff] %vm1379, %v1375
          %1381 = vst.msk [vmem:[#allocation2 + $0x8] sm:$0xff] %vm1379, %v1377
        $region176: #{tpu_custom_call.1} parent=111 // pred_fallthru
          _
        %v1382 = vld [vmem:[#allocation2] sm:$0xff]
        %v1383 = vld [vmem:[#allocation2 + $0x8] sm:$0xff]
        %v1384 = vpack.c.bf16 %v1383, %v1382
        %v1385 = vld [vmem:[%s1241] sm:$0xf]
        %v1386 = vld [vmem:[%s1241 + $0x4] sm:$0xf]
        %v1387 = vld [vmem:[%s1241 + $0x8] sm:$0xf]
        %v1388 = vld [vmem:[%s1241 + $0xc] sm:$0xf]
        %v1389 = vld [vmem:[%s986] sm:$0x1]
        %v1391 = vperm.slane %v1389, 0
        %v1397 = vunpack.c.l.b16 %v1385
        %v1398 = vunpack.c.l.b16 %v1386
        %v1399 = vunpack.c.l.b16 %v1387
        %v1400 = vunpack.c.l.b16 %v1388
        %v1401 = vpack.c.b16 %v1398, %v1397
        %v1402 = vpack.c.b16 %v1400, %v1399
        %vm1405 = vcmask 261120
        %v1407 = vsel %vm1405, %v1384, 0
        %1409 = vmatpush.bf16.msra.mxu0 0
        %1410 = vmatpush.bf16.msra.mxu0 0
        %1411 = vmatpush.bf16.msra.mxu0 0
        %1412 = vmatpush.bf16.msra.mxu0 0
        %1413 = vmatpush.bf16.msra.mxu0 0
        %1414 = vmatpush.bf16.msra.mxu0 0
        %1415 = vmatpush.bf16.msra.mxu0 %v1402
        %1416 = vmatpush.bf16.msra.mxu0 %v1401
        %1417 = vmatmul.bf16.gmra.mxu0 %v1407
        %v1418 = vpop.f32.mrf.mxu0
        %v1419 = vadd.f32 %v1391, %v1418
        %v1420 = vpop.f32.mrf.mxu0
        %v1421 = vadd.f32 %v1391, %v1420
        %1422 = vdwg.mxu0
        %v1423 = vmul.f32 %v1419, 0.35355338
        %v1424 = vmul.f32 %v1421, 0.35355338
        %v1425 = vld [vmem:[%s1246] sm:$0xf]
        %v1426 = vld [vmem:[%s1246 + $0x4] sm:$0xf]
        %v1427 = vld [vmem:[%s1246 + $0x8] sm:$0xf]
        %v1428 = vld [vmem:[%s1246 + $0xc] sm:$0xf]
        %v1429 = vld [vmem:[%s995] sm:$0x1]
        %v1431 = vperm.slane %v1429, 0
        %v1437 = vunpack.c.l.b16 %v1425
        %v1438 = vunpack.c.l.b16 %v1426
        %v1439 = vunpack.c.l.b16 %v1427
        %v1440 = vunpack.c.l.b16 %v1428
        %v1441 = vpack.c.b16 %v1438, %v1437
        %v1442 = vpack.c.b16 %v1440, %v1439
        %1445 = vmatpush.bf16.msra.mxu0 0
        %1446 = vmatpush.bf16.msra.mxu0 0
        %1447 = vmatpush.bf16.msra.mxu0 0
        %1448 = vmatpush.bf16.msra.mxu0 0
        %1449 = vmatpush.bf16.msra.mxu0 0
        %1450 = vmatpush.bf16.msra.mxu0 0
        %1451 = vmatpush.bf16.msra.mxu0 %v1442
        %1452 = vmatpush.bf16.msra.mxu0 %v1441
        %1453 = vmatmul.bf16.gmra.mxu0 %v1407
        %v1454 = vpop.f32.mrf.mxu0
        %v1455 = vadd.f32 %v1431, %v1454
        %v1456 = vpop.f32.mrf.mxu0
        %v1457 = vadd.f32 %v1431, %v1456
        %1458 = vdwg.mxu0
        %v1459 = vld [vmem:[%s1005] sm:$0xf]
        %v1460 = vld [vmem:[%s1005 + $0x4] sm:$0xf]
        %v1461 = vld [vmem:[%s1005 + $0x8] sm:$0xf]
        %v1462 = vld [vmem:[%s1005 + $0xc] sm:$0xf]
        %v1463 = vld [vmem:[%s1014] sm:$0x1]
        %v1465 = vperm.slane %v1463, 0
        %v1471 = vunpack.c.l.b16 %v1459
        %v1472 = vunpack.c.l.b16 %v1460
        %v1473 = vunpack.c.l.b16 %v1461
        %v1474 = vunpack.c.l.b16 %v1462
        %v1475 = vpack.c.b16 %v1472, %v1471
        %v1476 = vpack.c.b16 %v1474, %v1473
        %1479 = vmatpush.bf16.msra.mxu0 0
        %1480 = vmatpush.bf16.msra.mxu0 0
        %1481 = vmatpush.bf16.msra.mxu0 0
        %1482 = vmatpush.bf16.msra.mxu0 0
        %1483 = vmatpush.bf16.msra.mxu0 0
        %1484 = vmatpush.bf16.msra.mxu0 0
        %1485 = vmatpush.bf16.msra.mxu0 %v1476
        %1486 = vmatpush.bf16.msra.mxu0 %v1475
        %1487 = vmatmul.bf16.gmra.mxu0 %v1407
        %v1488 = vpop.f32.mrf.mxu0
        %v1489 = vadd.f32 %v1465, %v1488
        %v1490 = vpop.f32.mrf.mxu0
        %v1491 = vadd.f32 %v1465, %v1490
        %1492 = vdwg.mxu0
        %v1493 = vpack.c.bf16 %v1423, %v1423
        %v1494 = vpack.c.bf16 %v1424, %v1424
        %v1495 = vpack.c.bf16 %v1455, %v1455
        %v1496 = vpack.c.bf16 %v1457, %v1457
        %v1497 = vpack.c.bf16 %v1489, %v1489
        %v1498 = vpack.c.bf16 %v1491, %v1491
        %vm1499 = vcmask 64512
        %v1501 = vsel %vm1499, %v1493, 0
        %v1504 = vsel %vm1499, %v1495, 0
        %1506 = vmatpush.bf16.xpose.msra.mxu0 0
        %1507 = vmatpush.bf16.xpose.msra.mxu0 0
        %1508 = vmatpush.bf16.xpose.msra.mxu0 0
        %1509 = vmatpush.bf16.xpose.msra.mxu0 0
        %1510 = vmatpush.bf16.xpose.msra.mxu0 0
        %1511 = vmatpush.bf16.xpose.msra.mxu0 0
        %1512 = vmatpush.bf16.xpose.msra.mxu0 0
        %1513 = vmatpush.bf16.xpose.msra.mxu0 %v1504
        %1514 = vmatmul.bf16.gmra.mxu0 %v1501
        %v1515 = vpop.f32.mrf.mxu0
        %v1516 = vadd.f32 0.0, %v1515
        %v1517 = vpop.f32.mrf.mxu0
        %1518 = vdwg.mxu0
        %v1520 = vsel %vm1499, %v1494, 0
        %v1523 = vsel %vm1499, %v1496, 0
        %1525 = vmatpush.bf16.xpose.msra.mxu0 0
        %1526 = vmatpush.bf16.xpose.msra.mxu0 0
        %1527 = vmatpush.bf16.xpose.msra.mxu0 0
        %1528 = vmatpush.bf16.xpose.msra.mxu0 0
        %1529 = vmatpush.bf16.xpose.msra.mxu0 0
        %1530 = vmatpush.bf16.xpose.msra.mxu0 0
        %1531 = vmatpush.bf16.xpose.msra.mxu0 0
        %1532 = vmatpush.bf16.xpose.msra.mxu0 %v1523
        %1533 = vmatmul.bf16.gmra.mxu0 %v1520
        %v1534 = vpop.f32.mrf.mxu0
        %v1535 = vadd.f32 0.0, %v1534
        %v1536 = vpop.f32.mrf.mxu0
        %1537 = vdwg.mxu0
        %v1538 = vsel %vm1499, %v1516, -inf
        %1539 = vmax.xlane.f32.xlu0 %v1538
        %v1540 = vpop.xlane.xlu0 %1539
        %v1541 = vsel %vm1499, %v1535, -inf
        %1542 = vmax.xlane.f32.xlu0 %v1541
        %v1543 = vpop.xlane.xlu0 %1542
        %v1544 = vsub.f32 %v1516, %v1540
        %v1545 = vsub.f32 %v1535, %v1543
        %v1546 = vmul.f32 %v1544, 1.442695
        %v1547 = vpow.pop %v1546
        %v1548 = vmul.f32 %v1545, 1.442695
        %v1549 = vpow.pop %v1548
        %v1550 = vsel %vm1499, %v1547, 0.0
        %1551 = vadd.xlane.f32.xlu0 %v1550
        %v1552 = vpop.xlane.xlu0 %1551
        %v1553 = vsel %vm1499, %v1549, 0.0
        %1554 = vadd.xlane.f32.xlu0 %v1553
        %v1555 = vpop.xlane.xlu0 %1554
        %v1556 = vrcp.pop %v1552
        %v1557 = vrcp.pop %v1555
        %v1558 = vmul.f32 %v1547, %v1556
        %v1559 = vmul.f32 %v1549, %v1557
        %v1560 = vpack.c.bf16 %v1558, %v1558
        %v1561 = vpack.c.bf16 %v1559, %v1559
        %v1563 = vsel %vm1499, %v1560, 0
        %vm1565 = vcmask 1043456
        %v1567 = vsel %vm1565, %v1497, 0
        %1569 = vmatpush.bf16.msra.mxu0 0
        %1570 = vmatpush.bf16.msra.mxu0 0
        %1571 = vmatpush.bf16.msra.mxu0 0
        %1572 = vmatpush.bf16.msra.mxu0 0
        %1573 = vmatpush.bf16.msra.mxu0 0
        %1574 = vmatpush.bf16.msra.mxu0 0
        %1575 = vmatpush.bf16.msra.mxu0 0
        %1576 = vmatpush.bf16.msra.mxu0 %v1567
        %1577 = vmatmul.bf16.gmra.mxu0 %v1563
        %v1578 = vpop.f32.mrf.mxu0
        %v1579 = vadd.f32 0.0, %v1578
        %v1580 = vpop.f32.mrf.mxu0
        %1581 = vdwg.mxu0
        %v1583 = vsel %vm1499, %v1561, 0
        %v1586 = vsel %vm1565, %v1498, 0
        %1588 = vmatpush.bf16.msra.mxu0 0
        %1589 = vmatpush.bf16.msra.mxu0 0
        %1590 = vmatpush.bf16.msra.mxu0 0
        %1591 = vmatpush.bf16.msra.mxu0 0
        %1592 = vmatpush.bf16.msra.mxu0 0
        %1593 = vmatpush.bf16.msra.mxu0 0
        %1594 = vmatpush.bf16.msra.mxu0 0
        %1595 = vmatpush.bf16.msra.mxu0 %v1586
        %1596 = vmatmul.bf16.gmra.mxu0 %v1583
        %v1597 = vpop.f32.mrf.mxu0
        %v1598 = vadd.f32 0.0, %v1597
        %v1599 = vpop.f32.mrf.mxu0
        %1600 = vdwg.mxu0
        %1601 = vst.msk [vmem:[#allocation3] sm:$0xff] %vm1499, %v1579
        %1602 = vst.msk [vmem:[#allocation3 + $0x8] sm:$0xff] %vm1499, %v1598
        %v1604 = vunpack.c.l.b16 %v1493
        %v1605 = vpack.c.b16 %v1604, %v1604
        %1606 = vrot.lane.b32.xlu0 %v1605, 120
        %v1607 = vpop.permute.xlu0 %1606
        %v1609 = vunpack.c.l.b16 %v1495
        %v1610 = vpack.c.b16 %v1609, %v1609
        %1611 = vrot.lane.b32.xlu0 %v1610, 120
        %v1612 = vpop.permute.xlu0 %1611
        %v1614 = vsel %vm1499, %v1607, 0
        %v1617 = vsel %vm1499, %v1612, 0
        %1619 = vmatpush.bf16.xpose.msra.mxu0 0
        %1620 = vmatpush.bf16.xpose.msra.mxu0 0
        %1621 = vmatpush.bf16.xpose.msra.mxu0 0
        %1622 = vmatpush.bf16.xpose.msra.mxu0 0
        %1623 = vmatpush.bf16.xpose.msra.mxu0 0
        %1624 = vmatpush.bf16.xpose.msra.mxu0 0
        %1625 = vmatpush.bf16.xpose.msra.mxu0 0
        %1626 = vmatpush.bf16.xpose.msra.mxu0 %v1617
        %1627 = vmatmul.bf16.gmra.mxu0 %v1614
        %v1628 = vpop.f32.mrf.mxu0
        %v1629 = vadd.f32 0.0, %v1628
        %v1630 = vpop.f32.mrf.mxu0
        %1631 = vdwg.mxu0
        %v1633 = vunpack.c.l.b16 %v1494
        %v1634 = vpack.c.b16 %v1633, %v1633
        %1635 = vrot.lane.b32.xlu0 %v1634, 120
        %v1636 = vpop.permute.xlu0 %1635
        %v1638 = vunpack.c.l.b16 %v1496
        %v1639 = vpack.c.b16 %v1638, %v1638
        %1640 = vrot.lane.b32.xlu0 %v1639, 120
        %v1641 = vpop.permute.xlu0 %1640
        %v1643 = vsel %vm1499, %v1636, 0
        %v1646 = vsel %vm1499, %v1641, 0
        %1648 = vmatpush.bf16.xpose.msra.mxu0 0
        %1649 = vmatpush.bf16.xpose.msra.mxu0 0
        %1650 = vmatpush.bf16.xpose.msra.mxu0 0
        %1651 = vmatpush.bf16.xpose.msra.mxu0 0
        %1652 = vmatpush.bf16.xpose.msra.mxu0 0
        %1653 = vmatpush.bf16.xpose.msra.mxu0 0
        %1654 = vmatpush.bf16.xpose.msra.mxu0 0
        %1655 = vmatpush.bf16.xpose.msra.mxu0 %v1646
        %1656 = vmatmul.bf16.gmra.mxu0 %v1643
        %v1657 = vpop.f32.mrf.mxu0
        %v1658 = vadd.f32 0.0, %v1657
        %v1659 = vpop.f32.mrf.mxu0
        %1660 = vdwg.mxu0
        %v1661 = vsel %vm1499, %v1629, -inf
        %1662 = vmax.xlane.f32.xlu0 %v1661
        %v1663 = vpop.xlane.xlu0 %1662
        %v1664 = vsel %vm1499, %v1658, -inf
        %1665 = vmax.xlane.f32.xlu0 %v1664
        %v1666 = vpop.xlane.xlu0 %1665
        %v1667 = vsub.f32 %v1629, %v1663
        %v1668 = vsub.f32 %v1658, %v1666
        %v1669 = vmul.f32 %v1667, 1.442695
        %v1670 = vpow.pop %v1669
        %v1671 = vmul.f32 %v1668, 1.442695
        %v1672 = vpow.pop %v1671
        %v1673 = vsel %vm1499, %v1670, 0.0
        %1674 = vadd.xlane.f32.xlu0 %v1673
        %v1675 = vpop.xlane.xlu0 %1674
        %v1676 = vsel %vm1499, %v1672, 0.0
        %1677 = vadd.xlane.f32.xlu0 %v1676
        %v1678 = vpop.xlane.xlu0 %1677
        %v1679 = vrcp.pop %v1675
        %v1680 = vrcp.pop %v1678
        %v1681 = vmul.f32 %v1670, %v1679
        %v1682 = vmul.f32 %v1672, %v1680
        %v1683 = vpack.c.bf16 %v1681, %v1681
        %v1684 = vpack.c.bf16 %v1682, %v1682
        %v1686 = vunpack.c.l.b16 %v1497
        %v1687 = vpack.c.b16 %v1686, %v1686
        %1688 = vrot.lane.b32.xlu0 %v1687, 120
        %v1689 = vpop.permute.xlu0 %1688
        %v1691 = vsel %vm1499, %v1683, 0
        %v1694 = vsel %vm1565, %v1689, 0
        %1696 = vmatpush.bf16.msra.mxu0 0
        %1697 = vmatpush.bf16.msra.mxu0 0
        %1698 = vmatpush.bf16.msra.mxu0 0
        %1699 = vmatpush.bf16.msra.mxu0 0
        %1700 = vmatpush.bf16.msra.mxu0 0
        %1701 = vmatpush.bf16.msra.mxu0 0
        %1702 = vmatpush.bf16.msra.mxu0 0
        %1703 = vmatpush.bf16.msra.mxu0 %v1694
        %1704 = vmatmul.bf16.gmra.mxu0 %v1691
        %v1705 = vpop.f32.mrf.mxu0
        %v1706 = vadd.f32 0.0, %v1705
        %v1707 = vpop.f32.mrf.mxu0
        %1708 = vdwg.mxu0
        %v1710 = vunpack.c.l.b16 %v1498
        %v1711 = vpack.c.b16 %v1710, %v1710
        %1712 = vrot.lane.b32.xlu0 %v1711, 120
        %v1713 = vpop.permute.xlu0 %1712
        %v1715 = vsel %vm1499, %v1684, 0
        %v1718 = vsel %vm1565, %v1713, 0
        %1720 = vmatpush.bf16.msra.mxu0 0
        %1721 = vmatpush.bf16.msra.mxu0 0
        %1722 = vmatpush.bf16.msra.mxu0 0
        %1723 = vmatpush.bf16.msra.mxu0 0
        %1724 = vmatpush.bf16.msra.mxu0 0
        %1725 = vmatpush.bf16.msra.mxu0 0
        %1726 = vmatpush.bf16.msra.mxu0 0
        %1727 = vmatpush.bf16.msra.mxu0 %v1718
        %1728 = vmatmul.bf16.gmra.mxu0 %v1715
        %v1729 = vpop.f32.mrf.mxu0
        %v1730 = vadd.f32 0.0, %v1729
        %v1731 = vpop.f32.mrf.mxu0
        %1732 = vdwg.mxu0
        %1735 = vrot.lane.b32.xlu0 %v1706, 8
        %v1736 = vpop.permute.xlu0 %1735
        %1737 = vrot.lane.b32.xlu0 %v1730, 8
        %v1738 = vpop.permute.xlu0 %1737
        %vm1741 = vcmask 130112
        %1742 = vst.msk [vmem:[#allocation3] sm:$0xff] %vm1741, %v1736
        %1743 = vst.msk [vmem:[#allocation3 + $0x8] sm:$0xff] %vm1741, %v1738
        %1744 = vrot.lane.b32.xlu0 %v1605, 112
        %v1745 = vpop.permute.xlu0 %1744
        %1746 = vrot.lane.b32.xlu0 %v1610, 112
        %v1747 = vpop.permute.xlu0 %1746
        %v1749 = vsel %vm1499, %v1745, 0
        %v1752 = vsel %vm1499, %v1747, 0
        %1754 = vmatpush.bf16.xpose.msra.mxu0 0
        %1755 = vmatpush.bf16.xpose.msra.mxu0 0
        %1756 = vmatpush.bf16.xpose.msra.mxu0 0
        %1757 = vmatpush.bf16.xpose.msra.mxu0 0
        %1758 = vmatpush.bf16.xpose.msra.mxu0 0
        %1759 = vmatpush.bf16.xpose.msra.mxu0 0
        %1760 = vmatpush.bf16.xpose.msra.mxu0 0
        %1761 = vmatpush.bf16.xpose.msra.mxu0 %v1752
        %1762 = vmatmul.bf16.gmra.mxu0 %v1749
        %v1763 = vpop.f32.mrf.mxu0
        %v1764 = vadd.f32 0.0, %v1763
        %v1765 = vpop.f32.mrf.mxu0
        %1766 = vdwg.mxu0
        %1767 = vrot.lane.b32.xlu0 %v1634, 112
        %v1768 = vpop.permute.xlu0 %1767
        %1769 = vrot.lane.b32.xlu0 %v1639, 112
        %v1770 = vpop.permute.xlu0 %1769
        %v1772 = vsel %vm1499, %v1768, 0
        %v1775 = vsel %vm1499, %v1770, 0
        %1777 = vmatpush.bf16.xpose.msra.mxu0 0
        %1778 = vmatpush.bf16.xpose.msra.mxu0 0
        %1779 = vmatpush.bf16.xpose.msra.mxu0 0
        %1780 = vmatpush.bf16.xpose.msra.mxu0 0
        %1781 = vmatpush.bf16.xpose.msra.mxu0 0
        %1782 = vmatpush.bf16.xpose.msra.mxu0 0
        %1783 = vmatpush.bf16.xpose.msra.mxu0 0
        %1784 = vmatpush.bf16.xpose.msra.mxu0 %v1775
        %1785 = vmatmul.bf16.gmra.mxu0 %v1772
        %v1786 = vpop.f32.mrf.mxu0
        %v1787 = vadd.f32 0.0, %v1786
        %v1788 = vpop.f32.mrf.mxu0
        %1789 = vdwg.mxu0
        %v1790 = vsel %vm1499, %v1764, -inf
        %1791 = vmax.xlane.f32.xlu0 %v1790
        %v1792 = vpop.xlane.xlu0 %1791
        %v1793 = vsel %vm1499, %v1787, -inf
        %1794 = vmax.xlane.f32.xlu0 %v1793
        %v1795 = vpop.xlane.xlu0 %1794
        %v1796 = vsub.f32 %v1764, %v1792
        %v1797 = vsub.f32 %v1787, %v1795
        %v1798 = vmul.f32 %v1796, 1.442695
        %v1799 = vpow.pop %v1798
        %v1800 = vmul.f32 %v1797, 1.442695
        %v1801 = vpow.pop %v1800
        %v1802 = vsel %vm1499, %v1799, 0.0
        %1803 = vadd.xlane.f32.xlu0 %v1802
        %v1804 = vpop.xlane.xlu0 %1803
        %v1805 = vsel %vm1499, %v1801, 0.0
        %1806 = vadd.xlane.f32.xlu0 %v1805
        %v1807 = vpop.xlane.xlu0 %1806
        %v1808 = vrcp.pop %v1804
        %v1809 = vrcp.pop %v1807
        %v1810 = vmul.f32 %v1799, %v1808
        %v1811 = vmul.f32 %v1801, %v1809
        %v1812 = vpack.c.bf16 %v1810, %v1810
        %v1813 = vpack.c.bf16 %v1811, %v1811
        %1814 = vrot.lane.b32.xlu0 %v1687, 112
        %v1815 = vpop.permute.xlu0 %1814
        %v1817 = vsel %vm1499, %v1812, 0
        %v1820 = vsel %vm1565, %v1815, 0
        %1822 = vmatpush.bf16.msra.mxu0 0
        %1823 = vmatpush.bf16.msra.mxu0 0
        %1824 = vmatpush.bf16.msra.mxu0 0
        %1825 = vmatpush.bf16.msra.mxu0 0
        %1826 = vmatpush.bf16.msra.mxu0 0
        %1827 = vmatpush.bf16.msra.mxu0 0
        %1828 = vmatpush.bf16.msra.mxu0 0
        %1829 = vmatpush.bf16.msra.mxu0 %v1820
        %1830 = vmatmul.bf16.gmra.mxu0 %v1817
        %v1831 = vpop.f32.mrf.mxu0
        %v1832 = vadd.f32 0.0, %v1831
        %v1833 = vpop.f32.mrf.mxu0
        %1834 = vdwg.mxu0
        %1835 = vrot.lane.b32.xlu0 %v1711, 112
        %v1836 = vpop.permute.xlu0 %1835
        %v1838 = vsel %vm1499, %v1813, 0
        %v1841 = vsel %vm1565, %v1836, 0
        %1843 = vmatpush.bf16.msra.mxu0 0
        %1844 = vmatpush.bf16.msra.mxu0 0
        %1845 = vmatpush.bf16.msra.mxu0 0
        %1846 = vmatpush.bf16.msra.mxu0 0
        %1847 = vmatpush.bf16.msra.mxu0 0
        %1848 = vmatpush.bf16.msra.mxu0 0
        %1849 = vmatpush.bf16.msra.mxu0 0
        %1850 = vmatpush.bf16.msra.mxu0 %v1841
        %1851 = vmatmul.bf16.gmra.mxu0 %v1838
        %v1852 = vpop.f32.mrf.mxu0
        %v1853 = vadd.f32 0.0, %v1852
        %v1854 = vpop.f32.mrf.mxu0
        %1855 = vdwg.mxu0
        %1858 = vrot.lane.b32.xlu0 %v1832, 16
        %v1859 = vpop.permute.xlu0 %1858
        %1860 = vrot.lane.b32.xlu0 %v1853, 16
        %v1861 = vpop.permute.xlu0 %1860
        %vm1864 = vcmask 195712
        %1865 = vst.msk [vmem:[#allocation3] sm:$0xff] %vm1864, %v1859
        %1866 = vst.msk [vmem:[#allocation3 + $0x8] sm:$0xff] %vm1864, %v1861
        %1867 = vrot.lane.b32.xlu0 %v1605, 104
        %v1868 = vpop.permute.xlu0 %1867
        %1869 = vrot.lane.b32.xlu0 %v1610, 104
        %v1870 = vpop.permute.xlu0 %1869
        %v1872 = vsel %vm1499, %v1868, 0
        %v1875 = vsel %vm1499, %v1870, 0
        %1877 = vmatpush.bf16.xpose.msra.mxu0 0
        %1878 = vmatpush.bf16.xpose.msra.mxu0 0
        %1879 = vmatpush.bf16.xpose.msra.mxu0 0
        %1880 = vmatpush.bf16.xpose.msra.mxu0 0
        %1881 = vmatpush.bf16.xpose.msra.mxu0 0
        %1882 = vmatpush.bf16.xpose.msra.mxu0 0
        %1883 = vmatpush.bf16.xpose.msra.mxu0 0
        %1884 = vmatpush.bf16.xpose.msra.mxu0 %v1875
        %1885 = vmatmul.bf16.gmra.mxu0 %v1872
        %v1886 = vpop.f32.mrf.mxu0
        %v1887 = vadd.f32 0.0, %v1886
        %v1888 = vpop.f32.mrf.mxu0
        %1889 = vdwg.mxu0
        %1890 = vrot.lane.b32.xlu0 %v1634, 104
        %v1891 = vpop.permute.xlu0 %1890
        %1892 = vrot.lane.b32.xlu0 %v1639, 104
        %v1893 = vpop.permute.xlu0 %1892
        %v1895 = vsel %vm1499, %v1891, 0
        %v1898 = vsel %vm1499, %v1893, 0
        %1900 = vmatpush.bf16.xpose.msra.mxu0 0
        %1901 = vmatpush.bf16.xpose.msra.mxu0 0
        %1902 = vmatpush.bf16.xpose.msra.mxu0 0
        %1903 = vmatpush.bf16.xpose.msra.mxu0 0
        %1904 = vmatpush.bf16.xpose.msra.mxu0 0
        %1905 = vmatpush.bf16.xpose.msra.mxu0 0
        %1906 = vmatpush.bf16.xpose.msra.mxu0 0
        %1907 = vmatpush.bf16.xpose.msra.mxu0 %v1898
        %1908 = vmatmul.bf16.gmra.mxu0 %v1895
        %v1909 = vpop.f32.mrf.mxu0
        %v1910 = vadd.f32 0.0, %v1909
        %v1911 = vpop.f32.mrf.mxu0
        %1912 = vdwg.mxu0
        %v1913 = vsel %vm1499, %v1887, -inf
        %1914 = vmax.xlane.f32.xlu0 %v1913
        %v1915 = vpop.xlane.xlu0 %1914
        %v1916 = vsel %vm1499, %v1910, -inf
        %1917 = vmax.xlane.f32.xlu0 %v1916
        %v1918 = vpop.xlane.xlu0 %1917
        %v1919 = vsub.f32 %v1887, %v1915
        %v1920 = vsub.f32 %v1910, %v1918
        %v1921 = vmul.f32 %v1919, 1.442695
        %v1922 = vpow.pop %v1921
        %v1923 = vmul.f32 %v1920, 1.442695
        %v1924 = vpow.pop %v1923
        %v1925 = vsel %vm1499, %v1922, 0.0
        %1926 = vadd.xlane.f32.xlu0 %v1925
        %v1927 = vpop.xlane.xlu0 %1926
        %v1928 = vsel %vm1499, %v1924, 0.0
        %1929 = vadd.xlane.f32.xlu0 %v1928
        %v1930 = vpop.xlane.xlu0 %1929
        %v1931 = vrcp.pop %v1927
        %v1932 = vrcp.pop %v1930
        %v1933 = vmul.f32 %v1922, %v1931
        %v1934 = vmul.f32 %v1924, %v1932
        %v1935 = vpack.c.bf16 %v1933, %v1933
        %v1936 = vpack.c.bf16 %v1934, %v1934
        %1937 = vrot.lane.b32.xlu0 %v1687, 104
        %v1938 = vpop.permute.xlu0 %1937
        %v1940 = vsel %vm1499, %v1935, 0
        %v1943 = vsel %vm1565, %v1938, 0
        %1945 = vmatpush.bf16.msra.mxu0 0
        %1946 = vmatpush.bf16.msra.mxu0 0
        %1947 = vmatpush.bf16.msra.mxu0 0
        %1948 = vmatpush.bf16.msra.mxu0 0
        %1949 = vmatpush.bf16.msra.mxu0 0
        %1950 = vmatpush.bf16.msra.mxu0 0
        %1951 = vmatpush.bf16.msra.mxu0 0
        %1952 = vmatpush.bf16.msra.mxu0 %v1943
        %1953 = vmatmul.bf16.gmra.mxu0 %v1940
        %v1954 = vpop.f32.mrf.mxu0
        %v1955 = vadd.f32 0.0, %v1954
        %v1956 = vpop.f32.mrf.mxu0
        %1957 = vdwg.mxu0
        %1958 = vrot.lane.b32.xlu0 %v1711, 104
        %v1959 = vpop.permute.xlu0 %1958
        %v1961 = vsel %vm1499, %v1936, 0
        %v1964 = vsel %vm1565, %v1959, 0
        %1966 = vmatpush.bf16.msra.mxu0 0
        %1967 = vmatpush.bf16.msra.mxu0 0
        %1968 = vmatpush.bf16.msra.mxu0 0
        %1969 = vmatpush.bf16.msra.mxu0 0
        %1970 = vmatpush.bf16.msra.mxu0 0
        %1971 = vmatpush.bf16.msra.mxu0 0
        %1972 = vmatpush.bf16.msra.mxu0 0
        %1973 = vmatpush.bf16.msra.mxu0 %v1964
        %1974 = vmatmul.bf16.gmra.mxu0 %v1961
        %v1975 = vpop.f32.mrf.mxu0
        %v1976 = vadd.f32 0.0, %v1975
        %v1977 = vpop.f32.mrf.mxu0
        %1978 = vdwg.mxu0
        %1981 = vrot.lane.b32.xlu0 %v1955, 24
        %v1982 = vpop.permute.xlu0 %1981
        %1983 = vrot.lane.b32.xlu0 %v1976, 24
        %v1984 = vpop.permute.xlu0 %1983
        %vm1987 = vcmask 261312
        %1988 = vst.msk [vmem:[#allocation3] sm:$0xff] %vm1987, %v1982
        %1989 = vst.msk [vmem:[#allocation3 + $0x8] sm:$0xff] %vm1987, %v1984
        %v1990 = vld [vmem:[#allocation3] sm:$0xff]
        %v1991 = vld [vmem:[#allocation3 + $0x8] sm:$0xff]
        %v1992 = vld [vmem:[%s1024] sm:$0xf]
        %v1993 = vld [vmem:[%s1024 + $0x4] sm:$0xf]
        %v1994 = vld [vmem:[%s1024 + $0x8] sm:$0xf]
        %v1995 = vld [vmem:[%s1024 + $0xc] sm:$0xf]
        %v1996 = vpack.c.bf16 %v1991, %v1990
        %v1997 = vld [vmem:[%s1033] sm:$0x1]
        %v1999 = vperm.slane %v1997, 0
        %v2005 = vunpack.c.l.b16 %v1992
        %v2006 = vunpack.c.l.b16 %v1993
        %v2007 = vunpack.c.l.b16 %v1994
        %v2008 = vunpack.c.l.b16 %v1995
        %v2009 = vpack.c.b16 %v2006, %v2005
        %v2010 = vpack.c.b16 %v2008, %v2007
        %v2014 = vsel %vm1405, %v1996, 0
        %2016 = vmatpush.bf16.msra.mxu0 0
        %2017 = vmatpush.bf16.msra.mxu0 0
        %2018 = vmatpush.bf16.msra.mxu0 0
        %2019 = vmatpush.bf16.msra.mxu0 0
        %2020 = vmatpush.bf16.msra.mxu0 0
        %2021 = vmatpush.bf16.msra.mxu0 0
        %2022 = vmatpush.bf16.msra.mxu0 %v2010
        %2023 = vmatpush.bf16.msra.mxu0 %v2009
        %2024 = vmatmul.bf16.gmra.mxu0 %v2014
        %v2025 = vpop.f32.mrf.mxu0
        %v2026 = vadd.f32 %v1999, %v2025
        %v2027 = vpop.f32.mrf.mxu0
        %v2028 = vadd.f32 %v1999, %v2027
        %2029 = vdwg.mxu0
        %v2030 = vadd.f32 %v1382, %v2026
        %v2031 = vadd.f32 %v1383, %v2028
        %v2032 = vld [vmem:[%s1042] sm:$0x1]
        %v2033 = vld [vmem:[%s1051] sm:$0x1]
        %v2034 = vsel %vm1405, %v2030, 0.0
        %2035 = vadd.xlane.f32.xlu0 %v2034
        %v2036 = vpop.xlane.xlu0 %2035
        %v2037 = vsel %vm1405, %v2031, 0.0
        %2038 = vadd.xlane.f32.xlu0 %v2037
        %v2039 = vpop.xlane.xlu0 %2038
        %v2040 = vrcp.pop 32.0
        %v2041 = vmul.f32 32.0, %v2040
        %v2042 = vsub.f32 1.0, %v2041
        %v2043 = vmul.f32 %v2040, %v2042
        %v2044 = vadd.f32 %v2040, %v2043
        %vm2045 = vweird.f32 %v2040
        %v2046 = vsel %vm2045, %v2040, %v2044
        %v2047 = vmul.f32 %v2036, %v2046
        %v2048 = vmul.f32 %v2039, %v2046
        %v2049 = vsub.f32 %v2030, %v2047
        %v2050 = vsub.f32 %v2031, %v2048
        %v2051 = vmul.f32 %v2049, %v2049
        %v2052 = vmul.f32 %v2050, %v2050
        %v2053 = vsel %vm1405, %v2051, 0.0
        %2054 = vadd.xlane.f32.xlu0 %v2053
        %v2055 = vpop.xlane.xlu0 %2054
        %v2056 = vsel %vm1405, %v2052, 0.0
        %2057 = vadd.xlane.f32.xlu0 %v2056
        %v2058 = vpop.xlane.xlu0 %2057
        %v2059 = vmul.f32 %v2055, %v2046
        %v2060 = vmul.f32 %v2058, %v2046
        %v2061 = vadd.f32 %v2059, 1e-05
        %v2062 = vadd.f32 %v2060, 1e-05
        %v2063 = vrsqrt.pop %v2061
        %v2064 = vmul.f32 %v2063, %v2061
        %v2065 = vmul.f32 %v2064, %v2063
        %v2066 = vmul.f32 0.5, %v2065
        %v2067 = vsub.f32 1.5, %v2066
        %v2068 = vmul.f32 %v2063, %v2067
        %vm2069 = vweird.f32 %v2061
        %vm2070 = vweird.f32 %v2063
        %vm2071 = vmor %vm2069, %vm2070
        %v2072 = vsel %vm2071, %v2063, %v2068
        %v2073 = vrsqrt.pop %v2062
        %v2074 = vmul.f32 %v2073, %v2062
        %v2075 = vmul.f32 %v2074, %v2073
        %v2076 = vmul.f32 0.5, %v2075
        %v2077 = vsub.f32 1.5, %v2076
        %v2078 = vmul.f32 %v2073, %v2077
        %vm2079 = vweird.f32 %v2062
        %vm2080 = vweird.f32 %v2073
        %vm2081 = vmor %vm2079, %vm2080
        %v2082 = vsel %vm2081, %v2073, %v2078
        %v2083 = vmul.f32 %v2049, %v2072
        %v2084 = vmul.f32 %v2050, %v2082
        %v2086 = vperm.slane %v2032, 0
        %v2088 = vmul.f32 %v2083, %v2086
        %v2089 = vmul.f32 %v2084, %v2086
        %v2091 = vperm.slane %v2033, 0
        %v2093 = vadd.f32 %v2088, %v2091
        %v2094 = vadd.f32 %v2089, %v2091
        %v2095 = vld [vmem:[%s1061] sm:$0xf]
        %v2096 = vld [vmem:[%s1061 + $0x4] sm:$0xf]
        %v2097 = vld [vmem:[%s1061 + $0x8] sm:$0xf]
        %v2098 = vld [vmem:[%s1061 + $0xc] sm:$0xf]
        %v2099 = vpack.c.bf16 %v2094, %v2093
        %v2100 = vld [vmem:[%s1070] sm:$0x1]
        %v2102 = vperm.slane %v2100, 0
        %v2108 = vunpack.c.l.b16 %v2095
        %v2109 = vunpack.c.l.b16 %v2096
        %v2110 = vunpack.c.l.b16 %v2097
        %v2111 = vunpack.c.l.b16 %v2098
        %v2112 = vpack.c.b16 %v2109, %v2108
        %v2113 = vpack.c.b16 %v2111, %v2110
        %v2117 = vsel %vm1405, %v2099, 0
        %2119 = vmatpush.bf16.msra.mxu0 0
        %2120 = vmatpush.bf16.msra.mxu0 0
        %2121 = vmatpush.bf16.msra.mxu0 0
        %2122 = vmatpush.bf16.msra.mxu0 0
        %2123 = vmatpush.bf16.msra.mxu0 0
        %2124 = vmatpush.bf16.msra.mxu0 0
        %2125 = vmatpush.bf16.msra.mxu0 %v2113
        %2126 = vmatpush.bf16.msra.mxu0 %v2112
        %2127 = vmatmul.bf16.gmra.mxu0 %v2117
        %v2128 = vpop.f32.mrf.mxu0
        %v2129 = vadd.f32 %v2102, %v2128
        %v2130 = vpop.f32.mrf.mxu0
        %v2131 = vadd.f32 %v2102, %v2130
        %2132 = vdwg.mxu0
        %v2133 = vmax.f32 %v2129, 0.0
        %v2134 = vmax.f32 %v2131, 0.0
        %v2135 = vld [vmem:[%s1251] sm:$0xf]
        %v2136 = vld [vmem:[%s1251 + $0x4] sm:$0xf]
        %v2137 = vld [vmem:[%s1251 + $0x8] sm:$0xf]
        %v2138 = vld [vmem:[%s1251 + $0xc] sm:$0xf]
        %v2139 = vld [vmem:[%s1251 + $0x10] sm:$0xf]
        %v2140 = vld [vmem:[%s1251 + $0x14] sm:$0xf]
        %v2141 = vld [vmem:[%s1251 + $0x18] sm:$0xf]
        %v2142 = vld [vmem:[%s1251 + $0x1c] sm:$0xf]
        %v2143 = vpack.c.bf16 %v2134, %v2133
        %v2144 = vld [vmem:[%s1079] sm:$0x1]
        %v2146 = vperm.slane %v2144, 0
        %v2156 = vunpack.c.l.b16 %v2135
        %v2157 = vunpack.c.l.b16 %v2136
        %v2158 = vunpack.c.l.b16 %v2137
        %v2159 = vunpack.c.l.b16 %v2138
        %v2160 = vunpack.c.l.b16 %v2139
        %v2161 = vunpack.c.l.b16 %v2140
        %v2162 = vunpack.c.l.b16 %v2141
        %v2163 = vunpack.c.l.b16 %v2142
        %v2164 = vpack.c.b16 %v2157, %v2156
        %v2165 = vpack.c.b16 %v2159, %v2158
        %v2166 = vpack.c.b16 %v2161, %v2160
        %v2167 = vpack.c.b16 %v2163, %v2162
        %vm2172 = vcmask 523264
        %v2174 = vsel %vm2172, %v2143, 0
        %2176 = vmatpush.bf16.msra.mxu0 0
        %2177 = vmatpush.bf16.msra.mxu0 0
        %2178 = vmatpush.bf16.msra.mxu0 0
        %2179 = vmatpush.bf16.msra.mxu0 0
        %2180 = vmatpush.bf16.msra.mxu0 %v2167
        %2181 = vmatpush.bf16.msra.mxu0 %v2166
        %2182 = vmatpush.bf16.msra.mxu0 %v2165
        %2183 = vmatpush.bf16.msra.mxu0 %v2164
        %2184 = vmatmul.bf16.gmra.mxu0 %v2174
        %v2185 = vpop.f32.mrf.mxu0
        %v2186 = vadd.f32 %v2146, %v2185
        %v2187 = vpop.f32.mrf.mxu0
        %v2188 = vadd.f32 %v2146, %v2187
        %2189 = vdwg.mxu0
        %v2190 = vadd.f32 %v2093, %v2186
        %v2191 = vadd.f32 %v2094, %v2188
        %v2192 = vld [vmem:[%s1088] sm:$0x1]
        %v2193 = vld [vmem:[%s1097] sm:$0x1]
        %v2194 = vsel %vm1405, %v2190, 0.0
        %2195 = vadd.xlane.f32.xlu0 %v2194
        %v2196 = vpop.xlane.xlu0 %2195
        %v2197 = vsel %vm1405, %v2191, 0.0
        %2198 = vadd.xlane.f32.xlu0 %v2197
        %v2199 = vpop.xlane.xlu0 %2198
        %v2200 = vmul.f32 %v2196, %v2046
        %v2201 = vmul.f32 %v2199, %v2046
        %v2202 = vsub.f32 %v2190, %v2200
        %v2203 = vsub.f32 %v2191, %v2201
        %v2204 = vmul.f32 %v2202, %v2202
        %v2205 = vmul.f32 %v2203, %v2203
        %v2206 = vsel %vm1405, %v2204, 0.0
        %2207 = vadd.xlane.f32.xlu0 %v2206
        %v2208 = vpop.xlane.xlu0 %2207
        %v2209 = vsel %vm1405, %v2205, 0.0
        %2210 = vadd.xlane.f32.xlu0 %v2209
        %v2211 = vpop.xlane.xlu0 %2210
        %v2212 = vmul.f32 %v2208, %v2046
        %v2213 = vmul.f32 %v2211, %v2046
        %v2214 = vadd.f32 %v2212, 1e-05
        %v2215 = vadd.f32 %v2213, 1e-05
        %v2216 = vrsqrt.pop %v2214
        %v2217 = vmul.f32 %v2216, %v2214
        %v2218 = vmul.f32 %v2217, %v2216
        %v2219 = vmul.f32 0.5, %v2218
        %v2220 = vsub.f32 1.5, %v2219
        %v2221 = vmul.f32 %v2216, %v2220
        %vm2222 = vweird.f32 %v2214
        %vm2223 = vweird.f32 %v2216
        %vm2224 = vmor %vm2222, %vm2223
        %v2225 = vsel %vm2224, %v2216, %v2221
        %v2226 = vrsqrt.pop %v2215
        %v2227 = vmul.f32 %v2226, %v2215
        %v2228 = vmul.f32 %v2227, %v2226
        %v2229 = vmul.f32 0.5, %v2228
        %v2230 = vsub.f32 1.5, %v2229
        %v2231 = vmul.f32 %v2226, %v2230
        %vm2232 = vweird.f32 %v2215
        %vm2233 = vweird.f32 %v2226
        %vm2234 = vmor %vm2232, %vm2233
        %v2235 = vsel %vm2234, %v2226, %v2231
        %v2236 = vmul.f32 %v2202, %v2225
        %v2237 = vmul.f32 %v2203, %v2235
        %v2239 = vperm.slane %v2192, 0
        %v2241 = vmul.f32 %v2236, %v2239
        %v2242 = vmul.f32 %v2237, %v2239
        %v2244 = vperm.slane %v2193, 0
        %v2246 = vadd.f32 %v2241, %v2244
        %v2247 = vadd.f32 %v2242, %v2244
        %2248 = vst.msk [vmem:[#allocation2] sm:$0xff] %vm1405, %v2246
        %2249 = vst.msk [vmem:[#allocation2 + $0x8] sm:$0xff] %vm1405, %v2247
        %p2250 = scmp.eq.s32.totalorder %s44, 1
        // Predicated region
        $region177: #{tpu_custom_call.1} parent=111 // pred_check
          %p2251 = pneg %p2250
        $region178: #{tpu_custom_call.1} parent=111 // pred_check_branch
          %2253 = sbr.rel (%p2251) target = $region180
        $region179: #{tpu_custom_call.1} parent=111 // pred_region
          %v2254 = vld [vmem:[#allocation2] sm:$0xff]
          %v2255 = vld [vmem:[#allocation2 + $0x8] sm:$0xff]
          %v2256 = vld [vmem:[%s19] sm:$0x1]
          %v2257 = vld [vmem:[%s20] sm:$0x1]
          %v2258 = vsel %vm1405, %v2254, 0.0
          %2259 = vadd.xlane.f32.xlu0 %v2258
          %v2260 = vpop.xlane.xlu0 %2259
          %v2261 = vsel %vm1405, %v2255, 0.0
          %2262 = vadd.xlane.f32.xlu0 %v2261
          %v2263 = vpop.xlane.xlu0 %2262
          %v2264 = vmul.f32 %v2260, %v2046
          %v2265 = vmul.f32 %v2263, %v2046
          %v2266 = vsub.f32 %v2254, %v2264
          %v2267 = vsub.f32 %v2255, %v2265
          %v2268 = vmul.f32 %v2266, %v2266
          %v2269 = vmul.f32 %v2267, %v2267
          %v2270 = vsel %vm1405, %v2268, 0.0
          %2271 = vadd.xlane.f32.xlu0 %v2270
          %v2272 = vpop.xlane.xlu0 %2271
          %v2273 = vsel %vm1405, %v2269, 0.0
          %2274 = vadd.xlane.f32.xlu0 %v2273
          %v2275 = vpop.xlane.xlu0 %2274
          %v2276 = vmul.f32 %v2272, %v2046
          %v2277 = vmul.f32 %v2275, %v2046
          %v2278 = vadd.f32 %v2276, 1e-05
          %v2279 = vadd.f32 %v2277, 1e-05
          %v2280 = vrsqrt.pop %v2278
          %v2281 = vmul.f32 %v2280, %v2278
          %v2282 = vmul.f32 %v2281, %v2280
          %v2283 = vmul.f32 0.5, %v2282
          %v2284 = vsub.f32 1.5, %v2283
          %v2285 = vmul.f32 %v2280, %v2284
          %vm2286 = vweird.f32 %v2278
          %vm2287 = vweird.f32 %v2280
          %vm2288 = vmor %vm2286, %vm2287
          %v2289 = vsel %vm2288, %v2280, %v2285
          %v2290 = vrsqrt.pop %v2279
          %v2291 = vmul.f32 %v2290, %v2279
          %v2292 = vmul.f32 %v2291, %v2290
          %v2293 = vmul.f32 0.5, %v2292
          %v2294 = vsub.f32 1.5, %v2293
          %v2295 = vmul.f32 %v2290, %v2294
          %vm2296 = vweird.f32 %v2279
          %vm2297 = vweird.f32 %v2290
          %vm2298 = vmor %vm2296, %vm2297
          %v2299 = vsel %vm2298, %v2290, %v2295
          %v2300 = vmul.f32 %v2266, %v2289
          %v2301 = vmul.f32 %v2267, %v2299
          %v2303 = vperm.slane %v2256, 0
          %v2305 = vmul.f32 %v2300, %v2303
          %v2306 = vmul.f32 %v2301, %v2303
          %v2308 = vperm.slane %v2257, 0
          %v2310 = vadd.f32 %v2305, %v2308
          %v2311 = vadd.f32 %v2306, %v2308
          %v2312 = vld [vmem:[%s21] sm:$0xf]
          %v2313 = vld [vmem:[%s21 + $0x4] sm:$0xf]
          %v2314 = vld [vmem:[%s21 + $0x8] sm:$0xf]
          %v2315 = vld [vmem:[%s21 + $0xc] sm:$0xf]
          %v2316 = vpack.c.bf16 %v2311, %v2310
          %v2317 = vld [vmem:[%s22] sm:$0x1]
          %v2319 = vperm.slane %v2317, 0
          %v2325 = vunpack.c.l.b16 %v2312
          %v2326 = vunpack.c.l.b16 %v2313
          %v2327 = vunpack.c.l.b16 %v2314
          %v2328 = vunpack.c.l.b16 %v2315
          %v2329 = vpack.c.b16 %v2326, %v2325
          %v2330 = vpack.c.b16 %v2328, %v2327
          %v2334 = vsel %vm1405, %v2316, 0
          %2336 = vmatpush.bf16.msra.mxu0 0
          %2337 = vmatpush.bf16.msra.mxu0 0
          %2338 = vmatpush.bf16.msra.mxu0 0
          %2339 = vmatpush.bf16.msra.mxu0 0
          %2340 = vmatpush.bf16.msra.mxu0 0
          %2341 = vmatpush.bf16.msra.mxu0 0
          %2342 = vmatpush.bf16.msra.mxu0 %v2330
          %2343 = vmatpush.bf16.msra.mxu0 %v2329
          %2344 = vmatmul.bf16.gmra.mxu0 %v2334
          %v2345 = vpop.f32.mrf.mxu0
          %v2346 = vadd.f32 %v2319, %v2345
          %v2347 = vpop.f32.mrf.mxu0
          %v2348 = vadd.f32 %v2319, %v2347
          %2349 = vdwg.mxu0
          %v2350 = vld [vmem:[#allocation5] sm:$0xff]
          %v2351 = vld [vmem:[#allocation5 + $0x8] sm:$0xff]
          %2353 = vset.pattern.permute.xlu0 0
          %2354 = vperm.xlu0 %2353, %v2350
          %v2355 = vpop.permute.xlu0 %2354
          %2358 = vset.pattern.permute.xlu0 0
          %2359 = vperm.xlu0 %2358, %v2351
          %v2360 = vpop.permute.xlu0 %2359
          %v2362 = vmul.f32 %v2346, %v2355
          %v2363 = vmul.f32 %v2348, %v2360
          %v2364 = vld [vmem:[#allocation4] sm:$0xff]
          %v2365 = vld [vmem:[#allocation4 + $0x8] sm:$0xff]
          %2367 = vset.pattern.permute.xlu0 0
          %2368 = vperm.xlu0 %2367, %v2364
          %v2369 = vpop.permute.xlu0 %2368
          %2372 = vset.pattern.permute.xlu0 0
          %2373 = vperm.xlu0 %2372, %v2365
          %v2374 = vpop.permute.xlu0 %2373
          %v2376 = vadd.f32 %v2362, %v2369
          %v2377 = vadd.f32 %v2363, %v2374
          %2378 = vst.msk [vmem:[%s1230] sm:$0xff] %vm1499, %v2376
          %2379 = vst.msk [vmem:[%s1230 + $0x8] sm:$0xff] %vm1499, %v2377
        $region180: #{tpu_custom_call.1} parent=111 // pred_fallthru
          _
        %s2380 = sand.u32 %s627, 1
        %s2381 = scalar_lea.sflag [#allocation8], %s2380
        %s2382 = sand.u32 %s627, 1
        %s2383 = smul.addr %s2382, 16
        %s2384 = scalar_lea.vmem [#allocation24], %s2383
        // Predicated region
        $region181: #{tpu_custom_call.1} parent=111 // pred_check
          %p2385 = pneg %p637
        $region182: #{tpu_custom_call.1} parent=111 // pred_check_branch
          %2387 = sbr.rel (%p2385) target = $region184
        $region183: #{tpu_custom_call.1} parent=111 // pred_region
          %s2388 = smul.u32 2, %s43
          %2390 = vsyncadd %s2381, 0
          %s2391 = smul.addr %s2388, 8
          %s2392 = scalar_lea.hbm %s23, %s2391
          %s2393 = sshll.u32 %s2384, 4
          %s2394 = int_to_ptr.vmem [resolvable:$true] %s2393
          %s2395 = sshll.u32 %s2392, 4
          %s2396 = int_to_ptr.hbm [resolvable:$true] %s2395
          %2401 = dma.vmem_to_hbm [thread:$0]  %s2394, 256, %s2396, %s2381, 128, 128, 8
        $region184: #{tpu_custom_call.1} parent=111 // pred_fallthru
          _
      $region112: #{tpu_custom_call.1} parent=5 // pred_fallthru
        _
      %p2402 = scmp.le.s32.totalorder 2, %s34
      // Predicated region
      $region185: #{tpu_custom_call.1} parent=5 // pred_check
        %p2403 = pneg %p2402
      $region186: #{tpu_custom_call.1} parent=5 // pred_check_branch
        %2405 = sbr.rel (%p2403) target = $region188
      $region187: #{tpu_custom_call.1} parent=5 // pred_region
        %s2406 = ssub.s32 %s34, 2
        // Predicated region
        $region189: #{tpu_custom_call.1} parent=187 // pred_check
          %p2407 = pneg %p643
        $region190: #{tpu_custom_call.1} parent=187 // pred_check_branch
          %2409 = sbr.rel (%p2407) target = $region192
        $region191: #{tpu_custom_call.1} parent=187 // pred_region
          %s2410 = sand.u32 %s628, 1
          %s2411 = scalar_lea.sflag [#allocation8], %s2410
          %s2412 = sand.u32 %s628, 1
          %s2413 = smul.addr %s2412, 16
          %s2414 = scalar_lea.vmem [#allocation24], %s2413
          %2416 = dma.done %s2411, 256
        $region192: #{tpu_custom_call.1} parent=187 // pred_fallthru
          _
      $region188: #{tpu_custom_call.1} parent=5 // pred_fallthru
        _
    $region6: #{tpu_custom_call.1} parent=1 // loop_footer
      %s38 = sadd.s32 1, %s34
    $region7: #{tpu_custom_call.1} parent=1 // loop_footer_branch
      %33 = sbr.rel target = $region3
    $region8: #{tpu_custom_call.1} parent=1 // loop_exit
      _
    %2417 = vsyncpa [#allocation7], 1
    %s2418 = scalar_lea.sflag [#allocation7], 1
    %2419 = vsyncpa %s2418, 1
    %2420 = vsyncpa [#allocation10], 1
    %2421 = vsyncpa [#allocation8], 1
    %s2422 = scalar_lea.sflag [#allocation8], 1
    %2423 = vsyncpa %s2422, 1

</llo_original>
